<compile_context>
chip_gen: v7x
topology: tpu7x:2x2x1
jax: 0.10.0
libtpu: 0.0.40
codegen_flags: <defaults>
</compile_context>

<pallas_src>
import jax
import jax.numpy as jnp
from jax.experimental import pallas as pl
from jax.experimental.pallas import tpu as pltpu


# ------------------------- in-kernel helpers -------------------------

def _conv3x3_bias_relu(pad_ref, w_ref, b_ref):
    """3x3 SAME conv + bias + ReLU on a zero-padded VMEM-resident activation.

    pad_ref : (H+2, W+2, Cin) VMEM scratch with a zero halo of width 1.
    w_ref   : (3, Cin, 3*Cout); w_ref[kw][ci, kh*Cout + co] == torch_w[co, ci, kh, kw]
    b_ref   : (1, Cout)
    returns : (H, W, Cout) float32 = relu(conv(x) + b)
    """
    Hp, Wp, Cin = pad_ref.shape
    H, W = Hp - 2, Wp - 2
    Cout = b_ref.shape[1]
    acc = jnp.zeros((H, W, Cout), jnp.float32)
    for kw in range(3):
        # Column band shifted by kw. W is a multiple of 8, so the flatten /
        # unflatten below are sublane-aligned re-tilings (cheap).
        band = pad_ref[:, pl.ds(kw, W), :].reshape(Hp * W, Cin)
        # One wide matmul per kw: the 3 kh taps are packed along N = 3*Cout.
        part = jnp.dot(band, w_ref[kw], preferred_element_type=jnp.float32)
        part = part.reshape(Hp, W, 3 * Cout)
        for kh in range(3):
            acc = acc + part[kh:kh + H, :, kh * Cout:(kh + 1) * Cout]
    return jnp.maximum(acc + b_ref[0], 0.0)


# ------------------------- fused kernel -------------------------

def _fused_nst_kernel(x_ref, scale_ref, shift_ref,
                      w0_ref, b0_ref, w2_ref, b2_ref, w5_ref, b5_ref,
                      f1_ref, f3_ref, f6_ref,
                      pad_in, pad_mid, act_buf, pad_pool):
    _, H, W, _ = x_ref.shape
    Ho, Wo = H // 2, W // 2
    C1 = b0_ref.shape[1]
    C2 = b2_ref.shape[1]
    C3 = b5_ref.shape[1]

    # --- preprocess prologue: (x - mean) / std == x * scale + shift ---
    x = x_ref[0] * scale_ref[0] + shift_ref[0]                       # (H, W, 3)

    # --- layer 0 (conv) + layer 1 (relu); pad in VMEM, no HBM jnp.pad ---
    pad_in[...] = jnp.zeros_like(pad_in)
    pad_in[pl.ds(1, H), pl.ds(1, W), :] = x
    h0 = _conv3x3_bias_relu(pad_in, w0_ref, b0_ref)                  # (H, W, C1)
    # feature tap @ layer 1: lane-dense (C, H*W) slab (== torch NCHW reshape)
    f1_ref[0] = jnp.transpose(h0.reshape(H * W, C1), (1, 0)).astype(f1_ref.dtype)

    # --- layer 2 (conv) + layer 3 (relu) ---
    pad_mid[...] = jnp.zeros_like(pad_mid)
    pad_mid[pl.ds(1, H), pl.ds(1, W), :] = h0
    h1 = _conv3x3_bias_relu(pad_mid, w2_ref, b2_ref)                 # (H, W, C2)
    f3_ref[0] = jnp.transpose(h1.reshape(H * W, C2), (1, 0)).astype(f3_ref.dtype)

    # --- layer 4: AvgPool2d(2, 2) (the MaxPool -> AvgPool replacement) ---
    act_buf[...] = h1
    pooled = (act_buf[pl.ds(0, Ho, 2), pl.ds(0, Wo, 2), :]
              + act_buf[pl.ds(1, Ho, 2), pl.ds(0, Wo, 2), :]
              + act_buf[pl.ds(0, Ho, 2), pl.ds(1, Wo, 2), :]
              + act_buf[pl.ds(1, Ho, 2), pl.ds(1, Wo, 2), :]) * 0.25  # (Ho, Wo, C2)

    # --- layer 5 (conv) + layer 6 (relu) ---
    pad_pool[...] = jnp.zeros_like(pad_pool)
    pad_pool[pl.ds(1, Ho), pl.ds(1, Wo), :] = pooled
    h2 = _conv3x3_bias_relu(pad_pool, w5_ref, b5_ref)                # (Ho, Wo, C3)
    f6_ref[0] = jnp.transpose(h2.reshape(Ho * Wo, C3), (1, 0)).astype(f6_ref.dtype)


# ------------------------- host-side wrappers -------------------------

def _pack_conv_weight(w):
    """PyTorch (Cout, Cin, 3, 3) -> tap-packed (3_kw, Cin, 3_kh * Cout)."""
    cout, cin = w.shape[0], w.shape[1]
    t = jnp.transpose(w, (3, 1, 2, 0))            # (kw, Cin, kh, Cout)
    return jnp.asarray(t.reshape(3, cin, 3 * cout), jnp.float32)


@jax.jit
def _fused_forward(x_nhwc, scale, shift, w0p, b0r, w2p, b2r, w5p, b5r):
    B, H, W, Cin = x_nhwc.shape
    C1, C2, C3 = b0r.shape[1], b2r.shape[1], b5r.shape[1]
    Ho, Wo = H // 2, W // 2

    grid_spec = pltpu.PrefetchScalarGridSpec(
        num_scalar_prefetch=0,
        grid=(B,),
        in_specs=[
            pl.BlockSpec((1, H, W, Cin), lambda b: (b, 0, 0, 0)),
            pl.BlockSpec((1, Cin), lambda b: (0, 0)),
            pl.BlockSpec((1, Cin), lambda b: (0, 0)),
            pl.BlockSpec(w0p.shape, lambda b: (0, 0, 0)),
            pl.BlockSpec(b0r.shape, lambda b: (0, 0)),
            pl.BlockSpec(w2p.shape, lambda b: (0, 0, 0)),
            pl.BlockSpec(b2r.shape, lambda b: (0, 0)),
            pl.BlockSpec(w5p.shape, lambda b: (0, 0, 0)),
            pl.BlockSpec(b5r.shape, lambda b: (0, 0)),
        ],
        out_specs=[
            pl.BlockSpec((1, C1, H * W), lambda b: (b, 0, 0)),
            pl.BlockSpec((1, C2, H * W), lambda b: (b, 0, 0)),
            pl.BlockSpec((1, C3, Ho * Wo), lambda b: (b, 0, 0)),
        ],
        scratch_shapes=[
            pltpu.VMEM((H + 2, W + 2, Cin), jnp.float32),   # padded preprocessed input
            pltpu.VMEM((H + 2, W + 2, C1), jnp.float32),    # padded layer-1 activation
            pltpu.VMEM((H, W, C2), jnp.float32),            # layer-3 activation (pool src)
            pltpu.VMEM((Ho + 2, Wo + 2, C2), jnp.float32),  # padded pooled activation
        ],
    )
    return pl.pallas_call(
        _fused_nst_kernel,
        out_shape=(
            jax.ShapeDtypeStruct((B, C1, H * W), jnp.float32),
            jax.ShapeDtypeStruct((B, C2, H * W), jnp.float32),
            jax.ShapeDtypeStruct((B, C3, Ho * Wo), jnp.float32),
        ),
        grid_spec=grid_spec,
        compiler_params=pltpu.CompilerParams(
            dimension_semantics=("parallel",)),    # B splits across v7x's 2 TCs
    )(x_nhwc, scale, shift, w0p, b0r, w2p, b2r, w5p, b5r)


class PallasNSTModel:
    """Pallas equivalent of the PyTorch feature-extraction Model for the
    synthetic conv-relu-conv-relu-avgpool-conv-relu stack (MaxPool already
    replaced by AvgPool, as Model.__init__ does)."""

    _EXPECTED = ("conv", "relu", "conv", "relu", "avgpool", "conv", "relu")
    _TAPS = (1, 3, 6)   # post-ReLU activations the fused kernel exposes

    def __init__(self, layers, mean, std, content_layers, style_layers):
        kinds = tuple(layer[0] for layer in layers)
        assert kinds == self._EXPECTED, kinds
        for i in set(content_layers) | set(style_layers):
            assert i in self._TAPS, f"unsupported feature tap layer {i}"

        (w0, b0) = layers[0][1:]
        (w2, b2) = layers[2][1:]
        (w5, b5) = layers[5][1:]
        self._w0p, self._w2p, self._w5p = (_pack_conv_weight(w0),
                                           _pack_conv_weight(w2),
                                           _pack_conv_weight(w5))
        self._b0 = jnp.asarray(b0, jnp.float32).reshape(1, -1)
        self._b2 = jnp.asarray(b2, jnp.float32).reshape(1, -1)
        self._b5 = jnp.asarray(b5, jnp.float32).reshape(1, -1)
        c = mean.shape[0]
        self._scale = (1.0 / std).reshape(1, c).astype(jnp.float32)
        self._shift = (-mean / std).reshape(1, c).astype(jnp.float32)
        self.content_layers = sorted(set(content_layers))
        self.style_layers = sorted(set(style_layers))

    def __call__(self, x_nchw):
        x = jnp.transpose(x_nchw, (0, 2, 3, 1))     # NCHW -> NHWC at the boundary
        f1, f3, f6 = _fused_forward(x, self._scale, self._shift,
                                    self._w0p, self._b0,
                                    self._w2p, self._b2,
                                    self._w5p, self._b5)
        feats = {1: f1, 3: f3, 6: f6}
        content_features = [feats[i] for i in self.content_layers]
        style_features = [feats[i] for i in self.style_layers]
        return content_features, style_features


# ------------------------- pure-JAX reference -------------------------

def ref_forward(x_nchw, layers, mean, std, content_layers, style_layers):
    x = jnp.transpose(x_nchw, (0, 2, 3, 1))
    x = (x - mean.reshape(1, 1, 1, -1)) / std.reshape(1, 1, 1, -1)
    content, style = [], []
    for i, layer in enumerate(layers):
        if layer[0] == "conv":
            w, b = layer[1], layer[2]
            wh = jnp.transpose(w, (2, 3, 1, 0))  # HWIO
            x = jax.lax.conv_general_dilated(
                x, wh, (1, 1), "SAME",
                dimension_numbers=("NHWC", "HWIO", "NHWC")) + b.reshape(1, 1, 1, -1)
        elif layer[0] == "relu":
            x = jnp.maximum(x, 0.0)
        else:
            x = 0.25 * (x[:, 0::2, 0::2] + x[:, 1::2, 0::2]
                        + x[:, 0::2, 1::2] + x[:, 1::2, 1::2])
        if i in content_layers or i in style_layers:
            B, H, W, C = x.shape
            F = jnp.transpose(x, (0, 3, 1, 2)).reshape(B, C, H * W)
            if i in content_layers:
                content.append(F)
            if i in style_layers:
                style.append(F)
    return content, style


# ------------------------- main -------------------------

if __name__ == "__main__":
    key = jax.random.PRNGKey(0)
    B, Cin, S = 2, 3, 16
    kx, k0, k2, k5 = jax.random.split(key, 4)
    x = jax.random.uniform(kx, (B, Cin, S, S), jnp.float32)   # NCHW like PyTorch

    def conv_params(k, cin, cout):
        kw, kb = jax.random.split(k)
        w = 0.1 * jax.random.normal(kw, (cout, cin, 3, 3), jnp.float32)
        b = 0.1 * jax.random.normal(kb, (cout,), jnp.float32)
        return w, b

    w0, b0 = conv_params(k0, 3, 8)
    w2, b2 = conv_params(k2, 8, 8)
    w5, b5 = conv_params(k5, 8, 16)
    layers = [
        ("conv", w0, b0),   # 0
        ("relu",),          # 1
        ("conv", w2, b2),   # 2
        ("relu",),          # 3
        ("avgpool",),       # 4  (MaxPool replaced by AvgPool, as in __init__)
        ("conv", w5, b5),   # 5
        ("relu",),          # 6
    ]
    mean = jnp.array([0.485, 0.456, 0.406], jnp.float32)
    std = jnp.array([0.229, 0.224, 0.225], jnp.float32)
    content_layers = [3]
    style_layers = [1, 3, 6]

    model = PallasNSTModel(layers, mean, std, content_layers, style_layers)
    content, style = model(x)
    jax.block_until_ready(content)
    jax.block_until_ready(style)

    # correctness check against a pure-JAX reference
    c_ref, s_ref = ref_forward(x, layers, mean, std,
                               set(content_layers), set(style_layers))
    for got, want in zip(content + style, c_ref + s_ref):
        assert got.shape == want.shape, (got.shape, want.shape)
        err = float(jnp.max(jnp.abs(got - want)))
        assert err < 1e-3, f"max abs err {err}"

    print("KERNEL_OK")
</pallas_src>

<mosaic_0001>
module attributes {stable_mosaic.version = 11 : i64} {
  func.func @_fused_nst_kernel(%arg0: i32, %arg1: memref<1x16x16x3xf32, #tpu.memory_space<vmem>>, %arg2: memref<1x3xf32, #tpu.memory_space<vmem>>, %arg3: memref<1x3xf32, #tpu.memory_space<vmem>>, %arg4: memref<3x3x24xf32, #tpu.memory_space<vmem>>, %arg5: memref<1x8xf32, #tpu.memory_space<vmem>>, %arg6: memref<3x8x24xf32, #tpu.memory_space<vmem>>, %arg7: memref<1x8xf32, #tpu.memory_space<vmem>>, %arg8: memref<3x8x48xf32, #tpu.memory_space<vmem>>, %arg9: memref<1x16xf32, #tpu.memory_space<vmem>>, %arg10: memref<1x8x256xf32, #tpu.memory_space<vmem>>, %arg11: memref<1x8x256xf32, #tpu.memory_space<vmem>>, %arg12: memref<1x16x64xf32, #tpu.memory_space<vmem>>, %arg13: memref<18x18x3xf32, #tpu.memory_space<vmem>>, %arg14: memref<18x18x8xf32, #tpu.memory_space<vmem>>, %arg15: memref<16x16x8xf32, #tpu.memory_space<vmem>>, %arg16: memref<10x10x8xf32, #tpu.memory_space<vmem>>) attributes {dimension_semantics = [#tpu.dimension_semantics<parallel>], iteration_bounds = array<i64: 2>, scalar_prefetch = 0 : i64, scratch_operands = 4 : i64, tpu.core_type = #tpu.core_type<tc>, window_params = [{transform_indices = @transform_0, window_bounds = array<i64: 1, 16, 16, 3>}, {pipeline_mode = #tpu.pipeline_mode<synchronous>, transform_indices = @transform_1, window_bounds = array<i64: 1, 3>}, {pipeline_mode = #tpu.pipeline_mode<synchronous>, transform_indices = @transform_2, window_bounds = array<i64: 1, 3>}, {pipeline_mode = #tpu.pipeline_mode<synchronous>, transform_indices = @transform_3, window_bounds = array<i64: 3, 3, 24>}, {pipeline_mode = #tpu.pipeline_mode<synchronous>, transform_indices = @transform_4, window_bounds = array<i64: 1, 8>}, {pipeline_mode = #tpu.pipeline_mode<synchronous>, transform_indices = @transform_5, window_bounds = array<i64: 3, 8, 24>}, {pipeline_mode = #tpu.pipeline_mode<synchronous>, transform_indices = @transform_6, window_bounds = array<i64: 1, 8>}, {pipeline_mode = #tpu.pipeline_mode<synchronous>, transform_indices = @transform_7, window_bounds = array<i64: 3, 8, 48>}, {pipeline_mode = #tpu.pipeline_mode<synchronous>, transform_indices = @transform_8, window_bounds = array<i64: 1, 16>}, {transform_indices = @transform_9, window_bounds = array<i64: 1, 8, 256>}, {transform_indices = @transform_10, window_bounds = array<i64: 1, 8, 256>}, {transform_indices = @transform_11, window_bounds = array<i64: 1, 16, 64>}]} {
    %c0 = arith.constant 0 : index
    %c0_0 = arith.constant 0 : index
    %c0_1 = arith.constant 0 : index
    %c0_2 = arith.constant 0 : index
    %0 = vector.load %arg1[%c0, %c0_0, %c0_1, %c0_2] : memref<1x16x16x3xf32, #tpu.memory_space<vmem>>, vector<1x16x16x3xf32>
    %1 = vector.shape_cast %0 : vector<1x16x16x3xf32> to vector<16x16x3xf32>
    %c0_3 = arith.constant 0 : index
    %c0_4 = arith.constant 0 : index
    %2 = vector.load %arg2[%c0_3, %c0_4] : memref<1x3xf32, #tpu.memory_space<vmem>>, vector<1x3xf32>
    %3 = vector.shape_cast %2 : vector<1x3xf32> to vector<3xf32>
    %4 = vector.shape_cast %3 : vector<3xf32> to vector<1x1x3xf32>
    %5 = vector.broadcast %4 : vector<1x1x3xf32> to vector<16x16x3xf32>
    %6 = arith.mulf %1, %5 : vector<16x16x3xf32>
    %c0_5 = arith.constant 0 : index
    %c0_6 = arith.constant 0 : index
    %7 = vector.load %arg3[%c0_5, %c0_6] : memref<1x3xf32, #tpu.memory_space<vmem>>, vector<1x3xf32>
    %8 = vector.shape_cast %7 : vector<1x3xf32> to vector<3xf32>
    %9 = vector.shape_cast %8 : vector<3xf32> to vector<1x1x3xf32>
    %10 = vector.broadcast %9 : vector<1x1x3xf32> to vector<16x16x3xf32>
    %11 = arith.addf %6, %10 : vector<16x16x3xf32>
    %cst = arith.constant 0.000000e+00 : f32
    %12 = vector.broadcast %cst : f32 to vector<18x18x3xf32>
    %c0_7 = arith.constant 0 : index
    %c0_8 = arith.constant 0 : index
    %c0_9 = arith.constant 0 : index
    %13 = vector.load %arg13[%c0_7, %c0_8, %c0_9] : memref<18x18x3xf32, #tpu.memory_space<vmem>>, vector<18x18x3xf32>
    tpu.vector_store %arg13[%c0_7, %c0_8, %c0_9], %12 {strides = array<i32>} : memref<18x18x3xf32, #tpu.memory_space<vmem>>, vector<18x18x3xf32>,
    %c1 = arith.constant 1 : index
    %c1_10 = arith.constant 1 : index
    %c0_11 = arith.constant 0 : index
    %14 = vector.load %arg13[%c1, %c1_10, %c0_11] : memref<18x18x3xf32, #tpu.memory_space<vmem>>, vector<16x16x3xf32>
    tpu.vector_store %arg13[%c1, %c1_10, %c0_11], %11 {strides = array<i32>} : memref<18x18x3xf32, #tpu.memory_space<vmem>>, vector<16x16x3xf32>,
    %cst_12 = arith.constant 0.000000e+00 : f32
    %15 = vector.broadcast %cst_12 : f32 to vector<16x16x8xf32>
    %c0_13 = arith.constant 0 : index
    %c0_14 = arith.constant 0 : index
    %c0_15 = arith.constant 0 : index
    %16 = vector.load %arg13[%c0_13, %c0_14, %c0_15] : memref<18x18x3xf32, #tpu.memory_space<vmem>>, vector<18x16x3xf32>
    %17 = vector.shape_cast %16 : vector<18x16x3xf32> to vector<288x3xf32>
    %c0_16 = arith.constant 0 : index
    %c0_17 = arith.constant 0 : index
    %c0_18 = arith.constant 0 : index
    %18 = vector.load %arg4[%c0_16, %c0_17, %c0_18] : memref<3x3x24xf32, #tpu.memory_space<vmem>>, vector<1x3x24xf32>
    %19 = vector.shape_cast %18 : vector<1x3x24xf32> to vector<3x24xf32>
    %cst_19 = arith.constant dense<0.000000e+00> : vector<288x24xf32>
    %20 = tpu.matmul %17, %19, %cst_19 {dimension_numbers = #tpu.dot_dimension_numbers<[1], [0], [0], [1], [0, 0, 1, 1], [], []>} : vector<288x3xf32>, vector<3x24xf32>, vector<288x24xf32> -> vector<288x24xf32>
    %21 = vector.shape_cast %20 : vector<288x24xf32> to vector<18x16x24xf32>
    %22 = vector.extract_strided_slice %21 {offsets = [0, 0, 0], sizes = [16, 16, 8], strides = [1, 1, 1]} : vector<18x16x24xf32> to vector<16x16x8xf32>
    %23 = arith.addf %15, %22 : vector<16x16x8xf32>
    %24 = vector.extract_strided_slice %21 {offsets = [1, 0, 8], sizes = [16, 16, 8], strides = [1, 1, 1]} : vector<18x16x24xf32> to vector<16x16x8xf32>
    %25 = arith.addf %23, %24 : vector<16x16x8xf32>
    %26 = vector.extract_strided_slice %21 {offsets = [2, 0, 16], sizes = [16, 16, 8], strides = [1, 1, 1]} : vector<18x16x24xf32> to vector<16x16x8xf32>
    %27 = arith.addf %25, %26 : vector<16x16x8xf32>
    %c0_20 = arith.constant 0 : index
    %c1_21 = arith.constant 1 : index
    %c0_22 = arith.constant 0 : index
    %28 = vector.load %arg13[%c0_20, %c1_21, %c0_22] : memref<18x18x3xf32, #tpu.memory_space<vmem>>, vector<18x16x3xf32>
    %29 = vector.shape_cast %28 : vector<18x16x3xf32> to vector<288x3xf32>
    %c1_23 = arith.constant 1 : index
    %c0_24 = arith.constant 0 : index
    %c0_25 = arith.constant 0 : index
    %30 = vector.load %arg4[%c1_23, %c0_24, %c0_25] : memref<3x3x24xf32, #tpu.memory_space<vmem>>, vector<1x3x24xf32>
    %31 = vector.shape_cast %30 : vector<1x3x24xf32> to vector<3x24xf32>
    %cst_26 = arith.constant dense<0.000000e+00> : vector<288x24xf32>
    %32 = tpu.matmul %29, %31, %cst_26 {dimension_numbers = #tpu.dot_dimension_numbers<[1], [0], [0], [1], [0, 0, 1, 1], [], []>} : vector<288x3xf32>, vector<3x24xf32>, vector<288x24xf32> -> vector<288x24xf32>
    %33 = vector.shape_cast %32 : vector<288x24xf32> to vector<18x16x24xf32>
    %34 = vector.extract_strided_slice %33 {offsets = [0, 0, 0], sizes = [16, 16, 8], strides = [1, 1, 1]} : vector<18x16x24xf32> to vector<16x16x8xf32>
    %35 = arith.addf %27, %34 : vector<16x16x8xf32>
    %36 = vector.extract_strided_slice %33 {offsets = [1, 0, 8], sizes = [16, 16, 8], strides = [1, 1, 1]} : vector<18x16x24xf32> to vector<16x16x8xf32>
    %37 = arith.addf %35, %36 : vector<16x16x8xf32>
    %38 = vector.extract_strided_slice %33 {offsets = [2, 0, 16], sizes = [16, 16, 8], strides = [1, 1, 1]} : vector<18x16x24xf32> to vector<16x16x8xf32>
    %39 = arith.addf %37, %38 : vector<16x16x8xf32>
    %c0_27 = arith.constant 0 : index
    %c2 = arith.constant 2 : index
    %c0_28 = arith.constant 0 : index
    %40 = vector.load %arg13[%c0_27, %c2, %c0_28] : memref<18x18x3xf32, #tpu.memory_space<vmem>>, vector<18x16x3xf32>
    %41 = vector.shape_cast %40 : vector<18x16x3xf32> to vector<288x3xf32>
    %c2_29 = arith.constant 2 : index
    %c0_30 = arith.constant 0 : index
    %c0_31 = arith.constant 0 : index
    %42 = vector.load %arg4[%c2_29, %c0_30, %c0_31] : memref<3x3x24xf32, #tpu.memory_space<vmem>>, vector<1x3x24xf32>
    %43 = vector.shape_cast %42 : vector<1x3x24xf32> to vector<3x24xf32>
    %cst_32 = arith.constant dense<0.000000e+00> : vector<288x24xf32>
    %44 = tpu.matmul %41, %43, %cst_32 {dimension_numbers = #tpu.dot_dimension_numbers<[1], [0], [0], [1], [0, 0, 1, 1], [], []>} : vector<288x3xf32>, vector<3x24xf32>, vector<288x24xf32> -> vector<288x24xf32>
    %45 = vector.shape_cast %44 : vector<288x24xf32> to vector<18x16x24xf32>
    %46 = vector.extract_strided_slice %45 {offsets = [0, 0, 0], sizes = [16, 16, 8], strides = [1, 1, 1]} : vector<18x16x24xf32> to vector<16x16x8xf32>
    %47 = arith.addf %39, %46 : vector<16x16x8xf32>
    %48 = vector.extract_strided_slice %45 {offsets = [1, 0, 8], sizes = [16, 16, 8], strides = [1, 1, 1]} : vector<18x16x24xf32> to vector<16x16x8xf32>
    %49 = arith.addf %47, %48 : vector<16x16x8xf32>
    %50 = vector.extract_strided_slice %45 {offsets = [2, 0, 16], sizes = [16, 16, 8], strides = [1, 1, 1]} : vector<18x16x24xf32> to vector<16x16x8xf32>
    %51 = arith.addf %49, %50 : vector<16x16x8xf32>
    %c0_33 = arith.constant 0 : index
    %c0_34 = arith.constant 0 : index
    %52 = vector.load %arg5[%c0_33, %c0_34] : memref<1x8xf32, #tpu.memory_space<vmem>>, vector<1x8xf32>
    %53 = vector.shape_cast %52 : vector<1x8xf32> to vector<8xf32>
    %54 = vector.shape_cast %53 : vector<8xf32> to vector<1x1x8xf32>
    %55 = vector.broadcast %54 : vector<1x1x8xf32> to vector<16x16x8xf32>
    %56 = arith.addf %51, %55 : vector<16x16x8xf32>
    %cst_35 = arith.constant 0.000000e+00 : f32
    %57 = vector.broadcast %cst_35 : f32 to vector<16x16x8xf32>
    %58 = arith.maximumf %56, %57 : vector<16x16x8xf32>
    %59 = vector.shape_cast %58 : vector<16x16x8xf32> to vector<256x8xf32>
    %60 = tpu.transpose %59, [1, 0] : vector<256x8xf32> -> vector<8x256xf32>
    %c0_36 = arith.constant 0 : index
    %c0_37 = arith.constant 0 : index
    %c0_38 = arith.constant 0 : index
    %61 = vector.load %arg10[%c0_36, %c0_37, %c0_38] : memref<1x8x256xf32, #tpu.memory_space<vmem>>, vector<1x8x256xf32>
    %62 = vector.shape_cast %61 : vector<1x8x256xf32> to vector<8x256xf32>
    %63 = vector.shape_cast %60 : vector<8x256xf32> to vector<1x8x256xf32>
    tpu.vector_store %arg10[%c0_36, %c0_37, %c0_38], %63 {strides = array<i32>} : memref<1x8x256xf32, #tpu.memory_space<vmem>>, vector<1x8x256xf32>,
    %cst_39 = arith.constant 0.000000e+00 : f32
    %64 = vector.broadcast %cst_39 : f32 to vector<18x18x8xf32>
    %c0_40 = arith.constant 0 : index
    %c0_41 = arith.constant 0 : index
    %c0_42 = arith.constant 0 : index
    %65 = vector.load %arg14[%c0_40, %c0_41, %c0_42] : memref<18x18x8xf32, #tpu.memory_space<vmem>>, vector<18x18x8xf32>
    tpu.vector_store %arg14[%c0_40, %c0_41, %c0_42], %64 {strides = array<i32>} : memref<18x18x8xf32, #tpu.memory_space<vmem>>, vector<18x18x8xf32>,
    %c1_43 = arith.constant 1 : index
    %c1_44 = arith.constant 1 : index
    %c0_45 = arith.constant 0 : index
    %66 = vector.load %arg14[%c1_43, %c1_44, %c0_45] : memref<18x18x8xf32, #tpu.memory_space<vmem>>, vector<16x16x8xf32>
    tpu.vector_store %arg14[%c1_43, %c1_44, %c0_45], %58 {strides = array<i32>} : memref<18x18x8xf32, #tpu.memory_space<vmem>>, vector<16x16x8xf32>,
    %cst_46 = arith.constant 0.000000e+00 : f32
    %67 = vector.broadcast %cst_46 : f32 to vector<16x16x8xf32>
    %c0_47 = arith.constant 0 : index
    %c0_48 = arith.constant 0 : index
    %c0_49 = arith.constant 0 : index
    %68 = vector.load %arg14[%c0_47, %c0_48, %c0_49] : memref<18x18x8xf32, #tpu.memory_space<vmem>>, vector<18x16x8xf32>
    %69 = vector.shape_cast %68 : vector<18x16x8xf32> to vector<288x8xf32>
    %c0_50 = arith.constant 0 : index
    %c0_51 = arith.constant 0 : index
    %c0_52 = arith.constant 0 : index
    %70 = vector.load %arg6[%c0_50, %c0_51, %c0_52] : memref<3x8x24xf32, #tpu.memory_space<vmem>>, vector<1x8x24xf32>
    %71 = vector.shape_cast %70 : vector<1x8x24xf32> to vector<8x24xf32>
    %cst_53 = arith.constant dense<0.000000e+00> : vector<288x24xf32>
    %72 = tpu.matmul %69, %71, %cst_53 {dimension_numbers = #tpu.dot_dimension_numbers<[1], [0], [0], [1], [0, 0, 1, 1], [], []>} : vector<288x8xf32>, vector<8x24xf32>, vector<288x24xf32> -> vector<288x24xf32>
    %73 = vector.shape_cast %72 : vector<288x24xf32> to vector<18x16x24xf32>
    %74 = vector.extract_strided_slice %73 {offsets = [0, 0, 0], sizes = [16, 16, 8], strides = [1, 1, 1]} : vector<18x16x24xf32> to vector<16x16x8xf32>
    %75 = arith.addf %67, %74 : vector<16x16x8xf32>
    %76 = vector.extract_strided_slice %73 {offsets = [1, 0, 8], sizes = [16, 16, 8], strides = [1, 1, 1]} : vector<18x16x24xf32> to vector<16x16x8xf32>
    %77 = arith.addf %75, %76 : vector<16x16x8xf32>
    %78 = vector.extract_strided_slice %73 {offsets = [2, 0, 16], sizes = [16, 16, 8], strides = [1, 1, 1]} : vector<18x16x24xf32> to vector<16x16x8xf32>
    %79 = arith.addf %77, %78 : vector<16x16x8xf32>
    %c0_54 = arith.constant 0 : index
    %c1_55 = arith.constant 1 : index
    %c0_56 = arith.constant 0 : index
    %80 = vector.load %arg14[%c0_54, %c1_55, %c0_56] : memref<18x18x8xf32, #tpu.memory_space<vmem>>, vector<18x16x8xf32>
    %81 = vector.shape_cast %80 : vector<18x16x8xf32> to vector<288x8xf32>
    %c1_57 = arith.constant 1 : index
    %c0_58 = arith.constant 0 : index
    %c0_59 = arith.constant 0 : index
    %82 = vector.load %arg6[%c1_57, %c0_58, %c0_59] : memref<3x8x24xf32, #tpu.memory_space<vmem>>, vector<1x8x24xf32>
    %83 = vector.shape_cast %82 : vector<1x8x24xf32> to vector<8x24xf32>
    %cst_60 = arith.constant dense<0.000000e+00> : vector<288x24xf32>
    %84 = tpu.matmul %81, %83, %cst_60 {dimension_numbers = #tpu.dot_dimension_numbers<[1], [0], [0], [1], [0, 0, 1, 1], [], []>} : vector<288x8xf32>, vector<8x24xf32>, vector<288x24xf32> -> vector<288x24xf32>
    %85 = vector.shape_cast %84 : vector<288x24xf32> to vector<18x16x24xf32>
    %86 = vector.extract_strided_slice %85 {offsets = [0, 0, 0], sizes = [16, 16, 8], strides = [1, 1, 1]} : vector<18x16x24xf32> to vector<16x16x8xf32>
    %87 = arith.addf %79, %86 : vector<16x16x8xf32>
    %88 = vector.extract_strided_slice %85 {offsets = [1, 0, 8], sizes = [16, 16, 8], strides = [1, 1, 1]} : vector<18x16x24xf32> to vector<16x16x8xf32>
    %89 = arith.addf %87, %88 : vector<16x16x8xf32>
    %90 = vector.extract_strided_slice %85 {offsets = [2, 0, 16], sizes = [16, 16, 8], strides = [1, 1, 1]} : vector<18x16x24xf32> to vector<16x16x8xf32>
    %91 = arith.addf %89, %90 : vector<16x16x8xf32>
    %c0_61 = arith.constant 0 : index
    %c2_62 = arith.constant 2 : index
    %c0_63 = arith.constant 0 : index
    %92 = vector.load %arg14[%c0_61, %c2_62, %c0_63] : memref<18x18x8xf32, #tpu.memory_space<vmem>>, vector<18x16x8xf32>
    %93 = vector.shape_cast %92 : vector<18x16x8xf32> to vector<288x8xf32>
    %c2_64 = arith.constant 2 : index
    %c0_65 = arith.constant 0 : index
    %c0_66 = arith.constant 0 : index
    %94 = vector.load %arg6[%c2_64, %c0_65, %c0_66] : memref<3x8x24xf32, #tpu.memory_space<vmem>>, vector<1x8x24xf32>
    %95 = vector.shape_cast %94 : vector<1x8x24xf32> to vector<8x24xf32>
    %cst_67 = arith.constant dense<0.000000e+00> : vector<288x24xf32>
    %96 = tpu.matmul %93, %95, %cst_67 {dimension_numbers = #tpu.dot_dimension_numbers<[1], [0], [0], [1], [0, 0, 1, 1], [], []>} : vector<288x8xf32>, vector<8x24xf32>, vector<288x24xf32> -> vector<288x24xf32>
    %97 = vector.shape_cast %96 : vector<288x24xf32> to vector<18x16x24xf32>
    %98 = vector.extract_strided_slice %97 {offsets = [0, 0, 0], sizes = [16, 16, 8], strides = [1, 1, 1]} : vector<18x16x24xf32> to vector<16x16x8xf32>
    %99 = arith.addf %91, %98 : vector<16x16x8xf32>
    %100 = vector.extract_strided_slice %97 {offsets = [1, 0, 8], sizes = [16, 16, 8], strides = [1, 1, 1]} : vector<18x16x24xf32> to vector<16x16x8xf32>
    %101 = arith.addf %99, %100 : vector<16x16x8xf32>
    %102 = vector.extract_strided_slice %97 {offsets = [2, 0, 16], sizes = [16, 16, 8], strides = [1, 1, 1]} : vector<18x16x24xf32> to vector<16x16x8xf32>
    %103 = arith.addf %101, %102 : vector<16x16x8xf32>
    %c0_68 = arith.constant 0 : index
    %c0_69 = arith.constant 0 : index
    %104 = vector.load %arg7[%c0_68, %c0_69] : memref<1x8xf32, #tpu.memory_space<vmem>>, vector<1x8xf32>
    %105 = vector.shape_cast %104 : vector<1x8xf32> to vector<8xf32>
    %106 = vector.shape_cast %105 : vector<8xf32> to vector<1x1x8xf32>
    %107 = vector.broadcast %106 : vector<1x1x8xf32> to vector<16x16x8xf32>
    %108 = arith.addf %103, %107 : vector<16x16x8xf32>
    %cst_70 = arith.constant 0.000000e+00 : f32
    %109 = vector.broadcast %cst_70 : f32 to vector<16x16x8xf32>
    %110 = arith.maximumf %108, %109 : vector<16x16x8xf32>
    %111 = vector.shape_cast %110 : vector<16x16x8xf32> to vector<256x8xf32>
    %112 = tpu.transpose %111, [1, 0] : vector<256x8xf32> -> vector<8x256xf32>
    %c0_71 = arith.constant 0 : index
    %c0_72 = arith.constant 0 : index
    %c0_73 = arith.constant 0 : index
    %113 = vector.load %arg11[%c0_71, %c0_72, %c0_73] : memref<1x8x256xf32, #tpu.memory_space<vmem>>, vector<1x8x256xf32>
    %114 = vector.shape_cast %113 : vector<1x8x256xf32> to vector<8x256xf32>
    %115 = vector.shape_cast %112 : vector<8x256xf32> to vector<1x8x256xf32>
    tpu.vector_store %arg11[%c0_71, %c0_72, %c0_73], %115 {strides = array<i32>} : memref<1x8x256xf32, #tpu.memory_space<vmem>>, vector<1x8x256xf32>,
    %c0_74 = arith.constant 0 : index
    %c0_75 = arith.constant 0 : index
    %c0_76 = arith.constant 0 : index
    %116 = vector.load %arg15[%c0_74, %c0_75, %c0_76] : memref<16x16x8xf32, #tpu.memory_space<vmem>>, vector<16x16x8xf32>
    tpu.vector_store %arg15[%c0_74, %c0_75, %c0_76], %110 {strides = array<i32>} : memref<16x16x8xf32, #tpu.memory_space<vmem>>, vector<16x16x8xf32>,
    %c0_77 = arith.constant 0 : index
    %c0_78 = arith.constant 0 : index
    %c0_79 = arith.constant 0 : index
    %117 = tpu.strided_load %arg15[%c0_77, %c0_78, %c0_79] {strides = array<i32: 2, 2, 1>} : memref<16x16x8xf32, #tpu.memory_space<vmem>>, vector<8x8x8xf32>
    %c1_80 = arith.constant 1 : index
    %c0_81 = arith.constant 0 : index
    %c0_82 = arith.constant 0 : index
    %118 = tpu.strided_load %arg15[%c1_80, %c0_81, %c0_82] {strides = array<i32: 2, 2, 1>} : memref<16x16x8xf32, #tpu.memory_space<vmem>>, vector<8x8x8xf32>
    %119 = arith.addf %117, %118 : vector<8x8x8xf32>
    %c0_83 = arith.constant 0 : index
    %c1_84 = arith.constant 1 : index
    %c0_85 = arith.constant 0 : index
    %120 = tpu.strided_load %arg15[%c0_83, %c1_84, %c0_85] {strides = array<i32: 2, 2, 1>} : memref<16x16x8xf32, #tpu.memory_space<vmem>>, vector<8x8x8xf32>
    %121 = arith.addf %119, %120 : vector<8x8x8xf32>
    %c1_86 = arith.constant 1 : index
    %c1_87 = arith.constant 1 : index
    %c0_88 = arith.constant 0 : index
    %122 = tpu.strided_load %arg15[%c1_86, %c1_87, %c0_88] {strides = array<i32: 2, 2, 1>} : memref<16x16x8xf32, #tpu.memory_space<vmem>>, vector<8x8x8xf32>
    %123 = arith.addf %121, %122 : vector<8x8x8xf32>
    %cst_89 = arith.constant 2.500000e-01 : f32
    %124 = vector.broadcast %cst_89 : f32 to vector<8x8x8xf32>
    %125 = arith.mulf %123, %124 : vector<8x8x8xf32>
    %cst_90 = arith.constant 0.000000e+00 : f32
    %126 = vector.broadcast %cst_90 : f32 to vector<10x10x8xf32>
    %c0_91 = arith.constant 0 : index
    %c0_92 = arith.constant 0 : index
    %c0_93 = arith.constant 0 : index
    %127 = vector.load %arg16[%c0_91, %c0_92, %c0_93] : memref<10x10x8xf32, #tpu.memory_space<vmem>>, vector<10x10x8xf32>
    tpu.vector_store %arg16[%c0_91, %c0_92, %c0_93], %126 {strides = array<i32>} : memref<10x10x8xf32, #tpu.memory_space<vmem>>, vector<10x10x8xf32>,
    %c1_94 = arith.constant 1 : index
    %c1_95 = arith.constant 1 : index
    %c0_96 = arith.constant 0 : index
    %128 = vector.load %arg16[%c1_94, %c1_95, %c0_96] : memref<10x10x8xf32, #tpu.memory_space<vmem>>, vector<8x8x8xf32>
    tpu.vector_store %arg16[%c1_94, %c1_95, %c0_96], %125 {strides = array<i32>} : memref<10x10x8xf32, #tpu.memory_space<vmem>>, vector<8x8x8xf32>,
    %cst_97 = arith.constant 0.000000e+00 : f32
    %129 = vector.broadcast %cst_97 : f32 to vector<8x8x16xf32>
    %c0_98 = arith.constant 0 : index
    %c0_99 = arith.constant 0 : index
    %c0_100 = arith.constant 0 : index
    %130 = vector.load %arg16[%c0_98, %c0_99, %c0_100] : memref<10x10x8xf32, #tpu.memory_space<vmem>>, vector<10x8x8xf32>
    %131 = vector.shape_cast %130 : vector<10x8x8xf32> to vector<80x8xf32>
    %c0_101 = arith.constant 0 : index
    %c0_102 = arith.constant 0 : index
    %c0_103 = arith.constant 0 : index
    %132 = vector.load %arg8[%c0_101, %c0_102, %c0_103] : memref<3x8x48xf32, #tpu.memory_space<vmem>>, vector<1x8x48xf32>
    %133 = vector.shape_cast %132 : vector<1x8x48xf32> to vector<8x48xf32>
    %cst_104 = arith.constant dense<0.000000e+00> : vector<80x48xf32>
    %134 = tpu.matmul %131, %133, %cst_104 {dimension_numbers = #tpu.dot_dimension_numbers<[1], [0], [0], [1], [0, 0, 1, 1], [], []>} : vector<80x8xf32>, vector<8x48xf32>, vector<80x48xf32> -> vector<80x48xf32>
    %135 = vector.shape_cast %134 : vector<80x48xf32> to vector<10x8x48xf32>
    %136 = vector.extract_strided_slice %135 {offsets = [0, 0, 0], sizes = [8, 8, 16], strides = [1, 1, 1]} : vector<10x8x48xf32> to vector<8x8x16xf32>
    %137 = arith.addf %129, %136 : vector<8x8x16xf32>
    %138 = vector.extract_strided_slice %135 {offsets = [1, 0, 16], sizes = [8, 8, 16], strides = [1, 1, 1]} : vector<10x8x48xf32> to vector<8x8x16xf32>
    %139 = arith.addf %137, %138 : vector<8x8x16xf32>
    %140 = vector.extract_strided_slice %135 {offsets = [2, 0, 32], sizes = [8, 8, 16], strides = [1, 1, 1]} : vector<10x8x48xf32> to vector<8x8x16xf32>
    %141 = arith.addf %139, %140 : vector<8x8x16xf32>
    %c0_105 = arith.constant 0 : index
    %c1_106 = arith.constant 1 : index
    %c0_107 = arith.constant 0 : index
    %142 = vector.load %arg16[%c0_105, %c1_106, %c0_107] : memref<10x10x8xf32, #tpu.memory_space<vmem>>, vector<10x8x8xf32>
    %143 = vector.shape_cast %142 : vector<10x8x8xf32> to vector<80x8xf32>
    %c1_108 = arith.constant 1 : index
    %c0_109 = arith.constant 0 : index
    %c0_110 = arith.constant 0 : index
    %144 = vector.load %arg8[%c1_108, %c0_109, %c0_110] : memref<3x8x48xf32, #tpu.memory_space<vmem>>, vector<1x8x48xf32>
    %145 = vector.shape_cast %144 : vector<1x8x48xf32> to vector<8x48xf32>
    %cst_111 = arith.constant dense<0.000000e+00> : vector<80x48xf32>
    %146 = tpu.matmul %143, %145, %cst_111 {dimension_numbers = #tpu.dot_dimension_numbers<[1], [0], [0], [1], [0, 0, 1, 1], [], []>} : vector<80x8xf32>, vector<8x48xf32>, vector<80x48xf32> -> vector<80x48xf32>
    %147 = vector.shape_cast %146 : vector<80x48xf32> to vector<10x8x48xf32>
    %148 = vector.extract_strided_slice %147 {offsets = [0, 0, 0], sizes = [8, 8, 16], strides = [1, 1, 1]} : vector<10x8x48xf32> to vector<8x8x16xf32>
    %149 = arith.addf %141, %148 : vector<8x8x16xf32>
    %150 = vector.extract_strided_slice %147 {offsets = [1, 0, 16], sizes = [8, 8, 16], strides = [1, 1, 1]} : vector<10x8x48xf32> to vector<8x8x16xf32>
    %151 = arith.addf %149, %150 : vector<8x8x16xf32>
    %152 = vector.extract_strided_slice %147 {offsets = [2, 0, 32], sizes = [8, 8, 16], strides = [1, 1, 1]} : vector<10x8x48xf32> to vector<8x8x16xf32>
    %153 = arith.addf %151, %152 : vector<8x8x16xf32>
    %c0_112 = arith.constant 0 : index
    %c2_113 = arith.constant 2 : index
    %c0_114 = arith.constant 0 : index
    %154 = vector.load %arg16[%c0_112, %c2_113, %c0_114] : memref<10x10x8xf32, #tpu.memory_space<vmem>>, vector<10x8x8xf32>
    %155 = vector.shape_cast %154 : vector<10x8x8xf32> to vector<80x8xf32>
    %c2_115 = arith.constant 2 : index
    %c0_116 = arith.constant 0 : index
    %c0_117 = arith.constant 0 : index
    %156 = vector.load %arg8[%c2_115, %c0_116, %c0_117] : memref<3x8x48xf32, #tpu.memory_space<vmem>>, vector<1x8x48xf32>
    %157 = vector.shape_cast %156 : vector<1x8x48xf32> to vector<8x48xf32>
    %cst_118 = arith.constant dense<0.000000e+00> : vector<80x48xf32>
    %158 = tpu.matmul %155, %157, %cst_118 {dimension_numbers = #tpu.dot_dimension_numbers<[1], [0], [0], [1], [0, 0, 1, 1], [], []>} : vector<80x8xf32>, vector<8x48xf32>, vector<80x48xf32> -> vector<80x48xf32>
    %159 = vector.shape_cast %158 : vector<80x48xf32> to vector<10x8x48xf32>
    %160 = vector.extract_strided_slice %159 {offsets = [0, 0, 0], sizes = [8, 8, 16], strides = [1, 1, 1]} : vector<10x8x48xf32> to vector<8x8x16xf32>
    %161 = arith.addf %153, %160 : vector<8x8x16xf32>
    %162 = vector.extract_strided_slice %159 {offsets = [1, 0, 16], sizes = [8, 8, 16], strides = [1, 1, 1]} : vector<10x8x48xf32> to vector<8x8x16xf32>
    %163 = arith.addf %161, %162 : vector<8x8x16xf32>
    %164 = vector.extract_strided_slice %159 {offsets = [2, 0, 32], sizes = [8, 8, 16], strides = [1, 1, 1]} : vector<10x8x48xf32> to vector<8x8x16xf32>
    %165 = arith.addf %163, %164 : vector<8x8x16xf32>
    %c0_119 = arith.constant 0 : index
    %c0_120 = arith.constant 0 : index
    %166 = vector.load %arg9[%c0_119, %c0_120] : memref<1x16xf32, #tpu.memory_space<vmem>>, vector<1x16xf32>
    %167 = vector.shape_cast %166 : vector<1x16xf32> to vector<16xf32>
    %168 = vector.shape_cast %167 : vector<16xf32> to vector<1x1x16xf32>
    %169 = vector.broadcast %168 : vector<1x1x16xf32> to vector<8x8x16xf32>
    %170 = arith.addf %165, %169 : vector<8x8x16xf32>
    %cst_121 = arith.constant 0.000000e+00 : f32
    %171 = vector.broadcast %cst_121 : f32 to vector<8x8x16xf32>
    %172 = arith.maximumf %170, %171 : vector<8x8x16xf32>
    %173 = vector.shape_cast %172 : vector<8x8x16xf32> to vector<64x16xf32>
    %174 = tpu.transpose %173, [1, 0] : vector<64x16xf32> -> vector<16x64xf32>
    %c0_122 = arith.constant 0 : index
    %c0_123 = arith.constant 0 : index
    %c0_124 = arith.constant 0 : index
    %175 = vector.load %arg12[%c0_122, %c0_123, %c0_124] : memref<1x16x64xf32, #tpu.memory_space<vmem>>, vector<1x16x64xf32>
    %176 = vector.shape_cast %175 : vector<1x16x64xf32> to vector<16x64xf32>
    %177 = vector.shape_cast %174 : vector<16x64xf32> to vector<1x16x64xf32>
    tpu.vector_store %arg12[%c0_122, %c0_123, %c0_124], %177 {strides = array<i32>} : memref<1x16x64xf32, #tpu.memory_space<vmem>>, vector<1x16x64xf32>,
    return
  }
  func.func @transform_0(%arg0: i32) -> (i32, i32, i32, i32) {
    %c0_i32 = arith.constant 0 : i32
    %c0_i32_0 = arith.constant 0 : i32
    %c0_i32_1 = arith.constant 0 : i32
    %c0_i32_2 = arith.constant 0 : i32
    return %arg0, %c0_i32, %c0_i32_0, %c0_i32_1 : i32, i32, i32, i32
  }
  func.func @transform_1(%arg0: i32) -> (i32, i32) {
    %c0_i32 = arith.constant 0 : i32
    %c0_i32_0 = arith.constant 0 : i32
    %c0_i32_1 = arith.constant 0 : i32
    return %c0_i32, %c0_i32_0 : i32, i32
  }
  func.func @transform_2(%arg0: i32) -> (i32, i32) {
    %c0_i32 = arith.constant 0 : i32
    %c0_i32_0 = arith.constant 0 : i32
    %c0_i32_1 = arith.constant 0 : i32
    return %c0_i32, %c0_i32_0 : i32, i32
  }
  func.func @transform_3(%arg0: i32) -> (i32, i32, i32) {
    %c0_i32 = arith.constant 0 : i32
    %c0_i32_0 = arith.constant 0 : i32
    %c0_i32_1 = arith.constant 0 : i32
    %c0_i32_2 = arith.constant 0 : i32
    return %c0_i32, %c0_i32_0, %c0_i32_1 : i32, i32, i32
  }
  func.func @transform_4(%arg0: i32) -> (i32, i32) {
    %c0_i32 = arith.constant 0 : i32
    %c0_i32_0 = arith.constant 0 : i32
    %c0_i32_1 = arith.constant 0 : i32
    return %c0_i32, %c0_i32_0 : i32, i32
  }
  func.func @transform_5(%arg0: i32) -> (i32, i32, i32) {
    %c0_i32 = arith.constant 0 : i32
    %c0_i32_0 = arith.constant 0 : i32
    %c0_i32_1 = arith.constant 0 : i32
    %c0_i32_2 = arith.constant 0 : i32
    return %c0_i32, %c0_i32_0, %c0_i32_1 : i32, i32, i32
  }
  func.func @transform_6(%arg0: i32) -> (i32, i32) {
    %c0_i32 = arith.constant 0 : i32
    %c0_i32_0 = arith.constant 0 : i32
    %c0_i32_1 = arith.constant 0 : i32
    return %c0_i32, %c0_i32_0 : i32, i32
  }
  func.func @transform_7(%arg0: i32) -> (i32, i32, i32) {
    %c0_i32 = arith.constant 0 : i32
    %c0_i32_0 = arith.constant 0 : i32
    %c0_i32_1 = arith.constant 0 : i32
    %c0_i32_2 = arith.constant 0 : i32
    return %c0_i32, %c0_i32_0, %c0_i32_1 : i32, i32, i32
  }
  func.func @transform_8(%arg0: i32) -> (i32, i32) {
    %c0_i32 = arith.constant 0 : i32
    %c0_i32_0 = arith.constant 0 : i32
    %c0_i32_1 = arith.constant 0 : i32
    return %c0_i32, %c0_i32_0 : i32, i32
  }
  func.func @transform_9(%arg0: i32) -> (i32, i32, i32) {
    %c0_i32 = arith.constant 0 : i32
    %c0_i32_0 = arith.constant 0 : i32
    %c0_i32_1 = arith.constant 0 : i32
    return %arg0, %c0_i32, %c0_i32_0 : i32, i32, i32
  }
  func.func @transform_10(%arg0: i32) -> (i32, i32, i32) {
    %c0_i32 = arith.constant 0 : i32
    %c0_i32_0 = arith.constant 0 : i32
    %c0_i32_1 = arith.constant 0 : i32
    return %arg0, %c0_i32, %c0_i32_0 : i32, i32, i32
  }
  func.func @transform_11(%arg0: i32) -> (i32, i32, i32) {
    %c0_i32 = arith.constant 0 : i32
    %c0_i32_0 = arith.constant 0 : i32
    %c0_i32_1 = arith.constant 0 : i32
    return %arg0, %c0_i32, %c0_i32_0 : i32, i32, i32
  }
}

</mosaic_0001>

<llo_original>
// kernel: _fused_forward.1
$region0: #{_fused_forward.1}
  #allocation0 [shape = 'u32[]', space=smem, size = 0x4, offset = 0x4, fixed_abs, tag = 'smem constant byte address 0x4 - core index']
  #allocation1 [shape = 'u32[144,128]{1,0:T(1,128)}', space=vmem, size = 0x12000, scoped, tag = 'internal scratch']
  #allocation2 [shape = 'f32[18,18,3]{2,1,0:T(8,128)}', space=vmem, size = 0x36000, scoped, tag = 'scratch operand']
  #allocation3 [shape = 'f32[18,18,8]{2,1,0:T(8,128)}', space=vmem, size = 0x36000, scoped, tag = 'scratch operand']
  #allocation4 [shape = 'f32[16,16,8]{2,1,0:T(8,128)}', space=vmem, size = 0x20000, scoped, tag = 'scratch operand']
  #allocation5 [shape = 'f32[10,10,8]{2,1,0:T(8,128)}', space=vmem, size = 0x14000, scoped, tag = 'scratch operand']
  %s0 = inlined_call_operand.vmem [shape: f32[2,16,16,3], index: 0, kind: input, shape index: {}]
  %s1 = inlined_call_operand.vmem [shape: f32[1,3], index: 1, kind: input, shape index: {}]
  %s2 = inlined_call_operand.vmem [shape: f32[1,3], index: 2, kind: input, shape index: {}]
  %s3 = inlined_call_operand.vmem [shape: f32[3,3,24], index: 3, kind: input, shape index: {}]
  %s4 = inlined_call_operand.vmem [shape: f32[1,8], index: 4, kind: input, shape index: {}]
  %s5 = inlined_call_operand.vmem [shape: f32[3,8,24], index: 5, kind: input, shape index: {}]
  %s6 = inlined_call_operand.vmem [shape: f32[1,8], index: 6, kind: input, shape index: {}]
  %s7 = inlined_call_operand.vmem [shape: f32[3,8,48], index: 7, kind: input, shape index: {}]
  %s8 = inlined_call_operand.vmem [shape: f32[1,16], index: 8, kind: input, shape index: {}]
  %s9 = inlined_call_operand.hbm [shape: f32[2,8,256], index: 9, kind: output, shape index: {0}]
  %s10 = inlined_call_operand.hbm [shape: f32[2,8,256], index: 10, kind: output, shape index: {1}]
  %s11 = inlined_call_operand.hbm [shape: f32[2,16,64], index: 11, kind: output, shape index: {2}]
  %12 = xla_tuple %s9, %s10, %s11
  %s13 = sld [smem:[#allocation0]]
  $region85: #{_fused_forward.1} parent=0
    _
  %s15 = ssub.s32 1, %s13
  %s16 = scalar_select 0, %s15, %s13
  $region1: #{_fused_forward.1} parent=0
    #allocation6 [shape = 'u8[16384]{0}', space=vmem, size = 0x4000, scoped, tag = 'output window, operand 0']
    #allocation7 [shape = 's32[2]{0}', space=sflag, size = 0x8, scoped, tag = 'scoped memory for _fused_forward.1']
    #allocation8 [shape = 'u8[16384]{0}', space=vmem, size = 0x4000, scoped, tag = 'output window, operand 1']
    #allocation9 [shape = 's32[2]{0}', space=sflag, size = 0x8, scoped, tag = 'scoped memory for _fused_forward.1']
    #allocation10 [shape = 'u8[16384]{0}', space=vmem, size = 0x4000, scoped, tag = 'output window, operand 2']
    %17 = vsyncpa [#allocation7], 0
    %s18 = scalar_lea.sflag [#allocation7], 1
    %19 = vsyncpa %s18, 0
    %20 = vsyncpa [#allocation9], 0
    %s21 = scalar_lea.sflag [#allocation9], 1
    %22 = vsyncpa %s21, 0
    loop: start=0, step=1, limit=4
    $region2: #{_fused_forward.1} parent=1 // loop_pre_header
      _
    $region3: #{_fused_forward.1} parent=1 // loop_header
      %s24 = sphi 0, %s28
      %p25 = scmp.ge.s32.totalorder %s24, 4
      %s34 = sphi 0, %s36
      %s37 = sphi 0, %s34
      %s38 = sphi 0, %s37
      %s54 = sphi 0, %s38
      %s58 = sphi 0, %s58
      %s60 = sphi 0, %s58
      %s61 = sphi 0, %s60
      %s75 = sphi 0, %s61
      %s79 = sphi 0, %s79
      %s81 = sphi 0, %s79
      %s82 = sphi 0, %s81
      %s96 = sphi 0, %s82
      %s100 = sphi 0, %s100
      %s102 = sphi 0, %s100
      %s103 = sphi 0, %s102
      %s117 = sphi 0, %s103
      %s121 = sphi 0, %s121
      %s123 = sphi 0, %s121
      %s124 = sphi 0, %s123
      %s138 = sphi 0, %s124
      %s142 = sphi 0, %s142
      %s144 = sphi 0, %s142
      %s145 = sphi 0, %s144
      %s159 = sphi 0, %s145
      %s163 = sphi 0, %s163
      %s165 = sphi 0, %s163
      %s166 = sphi 0, %s165
      %s180 = sphi 0, %s166
      %s184 = sphi 0, %s184
      %s186 = sphi 0, %s184
      %s187 = sphi 0, %s186
      %s201 = sphi 0, %s187
      %s205 = sphi 0, %s205
      %s207 = sphi 0, %s205
      %s208 = sphi 0, %s207
      %s222 = sphi 0, %s208
      %s228 = sphi 0, %s230
      %s231 = sphi 0, %s228
      %s232 = sphi 0, %s231
      %s248 = sphi 0, %s232
      %s254 = sphi 0, %s256
      %s257 = sphi 0, %s254
      %s258 = sphi 0, %s257
      %s274 = sphi 0, %s258
      %s280 = sphi 0, %s282
      %s283 = sphi 0, %s280
      %s284 = sphi 0, %s283
      %s300 = sphi 0, %s284
    $region4: #{_fused_forward.1} parent=1 // loop_header_branch
      %27 = sbr.rel (%p25) target = $region8
    $region5: #{_fused_forward.1} parent=1 // loop_body
      %s29 = ssub.s32 %s24, 1
      %s30 = ssub.s32 %s24, 2
      %s31 = sadd.s32 %s24, 1
      %s32 = ssub.s32 %s24, %s31
      %p33 = scmp.eq.s32.totalorder %s32, 0
      %s35 = sadd.s32 %s34, 1
      %s36 = scalar_select %p33, %s34, %s35
      %p39 = pneg %p33
      %p40 = scmp.eq.s32.totalorder %s24, 1
      %p41 = por %p39, %p40
      %p42 = scmp.ne.s32.totalorder %s34, %s37
      %p43 = scmp.eq.s32.totalorder %s24, 0
      %p44 = por %p42, %p43
      %p45 = scmp.ne.s32.totalorder %s34, %s37
      %p46 = scmp.eq.s32.totalorder %s29, 1
      %p47 = por %p45, %p46
      %p48 = scmp.ne.s32.totalorder %s37, %s38
      %p49 = scmp.eq.s32.totalorder %s29, 0
      %p50 = por %p48, %p49
      %p51 = scmp.ne.s32.totalorder %s37, %s38
      %p52 = scmp.eq.s32.totalorder %s30, 1
      %p53 = por %p51, %p52
      %p55 = scmp.ne.s32.totalorder %s38, %s54
      %p56 = scmp.eq.s32.totalorder %s30, 0
      %p57 = por %p55, %p56
      %s59 = sadd.s32 %s58, 1
      %p62 = scmp.eq.s32.totalorder %s24, 1
      %p63 = scmp.ne.s32.totalorder %s58, %s60
      %p64 = scmp.eq.s32.totalorder %s24, 0
      %p65 = por %p63, %p64
      %p66 = scmp.ne.s32.totalorder %s58, %s60
      %p67 = scmp.eq.s32.totalorder %s29, 1
      %p68 = por %p66, %p67
      %p69 = scmp.ne.s32.totalorder %s60, %s61
      %p70 = scmp.eq.s32.totalorder %s29, 0
      %p71 = por %p69, %p70
      %p72 = scmp.ne.s32.totalorder %s60, %s61
      %p73 = scmp.eq.s32.totalorder %s30, 1
      %p74 = por %p72, %p73
      %p76 = scmp.ne.s32.totalorder %s61, %s75
      %p77 = scmp.eq.s32.totalorder %s30, 0
      %p78 = por %p76, %p77
      %s80 = sadd.s32 %s79, 1
      %p83 = scmp.eq.s32.totalorder %s24, 1
      %p84 = scmp.ne.s32.totalorder %s79, %s81
      %p85 = scmp.eq.s32.totalorder %s24, 0
      %p86 = por %p84, %p85
      %p87 = scmp.ne.s32.totalorder %s79, %s81
      %p88 = scmp.eq.s32.totalorder %s29, 1
      %p89 = por %p87, %p88
      %p90 = scmp.ne.s32.totalorder %s81, %s82
      %p91 = scmp.eq.s32.totalorder %s29, 0
      %p92 = por %p90, %p91
      %p93 = scmp.ne.s32.totalorder %s81, %s82
      %p94 = scmp.eq.s32.totalorder %s30, 1
      %p95 = por %p93, %p94
      %p97 = scmp.ne.s32.totalorder %s82, %s96
      %p98 = scmp.eq.s32.totalorder %s30, 0
      %p99 = por %p97, %p98
      %s101 = sadd.s32 %s100, 1
      %p104 = scmp.eq.s32.totalorder %s24, 1
      %p105 = scmp.ne.s32.totalorder %s100, %s102
      %p106 = scmp.eq.s32.totalorder %s24, 0
      %p107 = por %p105, %p106
      %p108 = scmp.ne.s32.totalorder %s100, %s102
      %p109 = scmp.eq.s32.totalorder %s29, 1
      %p110 = por %p108, %p109
      %p111 = scmp.ne.s32.totalorder %s102, %s103
      %p112 = scmp.eq.s32.totalorder %s29, 0
      %p113 = por %p111, %p112
      %p114 = scmp.ne.s32.totalorder %s102, %s103
      %p115 = scmp.eq.s32.totalorder %s30, 1
      %p116 = por %p114, %p115
      %p118 = scmp.ne.s32.totalorder %s103, %s117
      %p119 = scmp.eq.s32.totalorder %s30, 0
      %p120 = por %p118, %p119
      %s122 = sadd.s32 %s121, 1
      %p125 = scmp.eq.s32.totalorder %s24, 1
      %p126 = scmp.ne.s32.totalorder %s121, %s123
      %p127 = scmp.eq.s32.totalorder %s24, 0
      %p128 = por %p126, %p127
      %p129 = scmp.ne.s32.totalorder %s121, %s123
      %p130 = scmp.eq.s32.totalorder %s29, 1
      %p131 = por %p129, %p130
      %p132 = scmp.ne.s32.totalorder %s123, %s124
      %p133 = scmp.eq.s32.totalorder %s29, 0
      %p134 = por %p132, %p133
      %p135 = scmp.ne.s32.totalorder %s123, %s124
      %p136 = scmp.eq.s32.totalorder %s30, 1
      %p137 = por %p135, %p136
      %p139 = scmp.ne.s32.totalorder %s124, %s138
      %p140 = scmp.eq.s32.totalorder %s30, 0
      %p141 = por %p139, %p140
      %s143 = sadd.s32 %s142, 1
      %p146 = scmp.eq.s32.totalorder %s24, 1
      %p147 = scmp.ne.s32.totalorder %s142, %s144
      %p148 = scmp.eq.s32.totalorder %s24, 0
      %p149 = por %p147, %p148
      %p150 = scmp.ne.s32.totalorder %s142, %s144
      %p151 = scmp.eq.s32.totalorder %s29, 1
      %p152 = por %p150, %p151
      %p153 = scmp.ne.s32.totalorder %s144, %s145
      %p154 = scmp.eq.s32.totalorder %s29, 0
      %p155 = por %p153, %p154
      %p156 = scmp.ne.s32.totalorder %s144, %s145
      %p157 = scmp.eq.s32.totalorder %s30, 1
      %p158 = por %p156, %p157
      %p160 = scmp.ne.s32.totalorder %s145, %s159
      %p161 = scmp.eq.s32.totalorder %s30, 0
      %p162 = por %p160, %p161
      %s164 = sadd.s32 %s163, 1
      %p167 = scmp.eq.s32.totalorder %s24, 1
      %p168 = scmp.ne.s32.totalorder %s163, %s165
      %p169 = scmp.eq.s32.totalorder %s24, 0
      %p170 = por %p168, %p169
      %p171 = scmp.ne.s32.totalorder %s163, %s165
      %p172 = scmp.eq.s32.totalorder %s29, 1
      %p173 = por %p171, %p172
      %p174 = scmp.ne.s32.totalorder %s165, %s166
      %p175 = scmp.eq.s32.totalorder %s29, 0
      %p176 = por %p174, %p175
      %p177 = scmp.ne.s32.totalorder %s165, %s166
      %p178 = scmp.eq.s32.totalorder %s30, 1
      %p179 = por %p177, %p178
      %p181 = scmp.ne.s32.totalorder %s166, %s180
      %p182 = scmp.eq.s32.totalorder %s30, 0
      %p183 = por %p181, %p182
      %s185 = sadd.s32 %s184, 1
      %p188 = scmp.eq.s32.totalorder %s24, 1
      %p189 = scmp.ne.s32.totalorder %s184, %s186
      %p190 = scmp.eq.s32.totalorder %s24, 0
      %p191 = por %p189, %p190
      %p192 = scmp.ne.s32.totalorder %s184, %s186
      %p193 = scmp.eq.s32.totalorder %s29, 1
      %p194 = por %p192, %p193
      %p195 = scmp.ne.s32.totalorder %s186, %s187
      %p196 = scmp.eq.s32.totalorder %s29, 0
      %p197 = por %p195, %p196
      %p198 = scmp.ne.s32.totalorder %s186, %s187
      %p199 = scmp.eq.s32.totalorder %s30, 1
      %p200 = por %p198, %p199
      %p202 = scmp.ne.s32.totalorder %s187, %s201
      %p203 = scmp.eq.s32.totalorder %s30, 0
      %p204 = por %p202, %p203
      %s206 = sadd.s32 %s205, 1
      %p209 = scmp.eq.s32.totalorder %s24, 1
      %p210 = scmp.ne.s32.totalorder %s205, %s207
      %p211 = scmp.eq.s32.totalorder %s24, 0
      %p212 = por %p210, %p211
      %p213 = scmp.ne.s32.totalorder %s205, %s207
      %p214 = scmp.eq.s32.totalorder %s29, 1
      %p215 = por %p213, %p214
      %p216 = scmp.ne.s32.totalorder %s207, %s208
      %p217 = scmp.eq.s32.totalorder %s29, 0
      %p218 = por %p216, %p217
      %p219 = scmp.ne.s32.totalorder %s207, %s208
      %p220 = scmp.eq.s32.totalorder %s30, 1
      %p221 = por %p219, %p220
      %p223 = scmp.ne.s32.totalorder %s208, %s222
      %p224 = scmp.eq.s32.totalorder %s30, 0
      %p225 = por %p223, %p224
      %s226 = ssub.s32 %s24, %s31
      %p227 = scmp.eq.s32.totalorder %s226, 0
      %s229 = sadd.s32 %s228, 1
      %s230 = scalar_select %p227, %s228, %s229
      %p233 = pneg %p227
      %p234 = scmp.eq.s32.totalorder %s24, 1
      %p235 = por %p233, %p234
      %p236 = scmp.ne.s32.totalorder %s228, %s231
      %p237 = scmp.eq.s32.totalorder %s24, 0
      %p238 = por %p236, %p237
      %p239 = scmp.ne.s32.totalorder %s228, %s231
      %p240 = scmp.eq.s32.totalorder %s29, 1
      %p241 = por %p239, %p240
      %p242 = scmp.ne.s32.totalorder %s231, %s232
      %p243 = scmp.eq.s32.totalorder %s29, 0
      %p244 = por %p242, %p243
      %p245 = scmp.ne.s32.totalorder %s231, %s232
      %p246 = scmp.eq.s32.totalorder %s30, 1
      %p247 = por %p245, %p246
      %p249 = scmp.ne.s32.totalorder %s232, %s248
      %p250 = scmp.eq.s32.totalorder %s30, 0
      %p251 = por %p249, %p250
      %s252 = ssub.s32 %s24, %s31
      %p253 = scmp.eq.s32.totalorder %s252, 0
      %s255 = sadd.s32 %s254, 1
      %s256 = scalar_select %p253, %s254, %s255
      %p259 = pneg %p253
      %p260 = scmp.eq.s32.totalorder %s24, 1
      %p261 = por %p259, %p260
      %p262 = scmp.ne.s32.totalorder %s254, %s257
      %p263 = scmp.eq.s32.totalorder %s24, 0
      %p264 = por %p262, %p263
      %p265 = scmp.ne.s32.totalorder %s254, %s257
      %p266 = scmp.eq.s32.totalorder %s29, 1
      %p267 = por %p265, %p266
      %p268 = scmp.ne.s32.totalorder %s257, %s258
      %p269 = scmp.eq.s32.totalorder %s29, 0
      %p270 = por %p268, %p269
      %p271 = scmp.ne.s32.totalorder %s257, %s258
      %p272 = scmp.eq.s32.totalorder %s30, 1
      %p273 = por %p271, %p272
      %p275 = scmp.ne.s32.totalorder %s258, %s274
      %p276 = scmp.eq.s32.totalorder %s30, 0
      %p277 = por %p275, %p276
      %s278 = ssub.s32 %s24, %s31
      %p279 = scmp.eq.s32.totalorder %s278, 0
      %s281 = sadd.s32 %s280, 1
      %s282 = scalar_select %p279, %s280, %s281
      %p285 = pneg %p279
      %p286 = scmp.eq.s32.totalorder %s24, 1
      %p287 = por %p285, %p286
      %p288 = scmp.ne.s32.totalorder %s280, %s283
      %p289 = scmp.eq.s32.totalorder %s24, 0
      %p290 = por %p288, %p289
      %p291 = scmp.ne.s32.totalorder %s280, %s283
      %p292 = scmp.eq.s32.totalorder %s29, 1
      %p293 = por %p291, %p292
      %p294 = scmp.ne.s32.totalorder %s283, %s284
      %p295 = scmp.eq.s32.totalorder %s29, 0
      %p296 = por %p294, %p295
      %p297 = scmp.ne.s32.totalorder %s283, %s284
      %p298 = scmp.eq.s32.totalorder %s30, 1
      %p299 = por %p297, %p298
      %p301 = scmp.ne.s32.totalorder %s284, %s300
      %p302 = scmp.eq.s32.totalorder %s30, 0
      %p303 = por %p301, %p302
      %p304 = scmp.le.s32.totalorder 1, %s24
      %p305 = scmp.lt.s32.totalorder %s24, 3
      %p306 = pnand %p304, %p305
      %p307 = pneg %p306
      // Predicated region
      $region9: #{_fused_forward.1} parent=5 // pred_check
        _
      $region10: #{_fused_forward.1} parent=5 // pred_check_branch
        %309 = sbr.rel (%p306) target = $region12
      $region11: #{_fused_forward.1} parent=5 // pred_region
        %s310 = ssub.s32 %s24, 1
        // Predicated region
        $region13: #{_fused_forward.1} parent=11 // pred_check
          %p311 = pneg %p71
        $region14: #{_fused_forward.1} parent=11 // pred_check_branch
          %313 = sbr.rel (%p311) target = $region16
        $region15: #{_fused_forward.1} parent=11 // pred_region
          _
        $region16: #{_fused_forward.1} parent=11 // pred_fallthru
          _
        // Predicated region
        $region17: #{_fused_forward.1} parent=11 // pred_check
          %p314 = pneg %p92
        $region18: #{_fused_forward.1} parent=11 // pred_check_branch
          %316 = sbr.rel (%p314) target = $region20
        $region19: #{_fused_forward.1} parent=11 // pred_region
          _
        $region20: #{_fused_forward.1} parent=11 // pred_fallthru
          _
        // Predicated region
        $region21: #{_fused_forward.1} parent=11 // pred_check
          %p317 = pneg %p113
        $region22: #{_fused_forward.1} parent=11 // pred_check_branch
          %319 = sbr.rel (%p317) target = $region24
        $region23: #{_fused_forward.1} parent=11 // pred_region
          _
        $region24: #{_fused_forward.1} parent=11 // pred_fallthru
          _
        // Predicated region
        $region25: #{_fused_forward.1} parent=11 // pred_check
          %p320 = pneg %p134
        $region26: #{_fused_forward.1} parent=11 // pred_check_branch
          %322 = sbr.rel (%p320) target = $region28
        $region27: #{_fused_forward.1} parent=11 // pred_region
          _
        $region28: #{_fused_forward.1} parent=11 // pred_fallthru
          _
        // Predicated region
        $region29: #{_fused_forward.1} parent=11 // pred_check
          %p323 = pneg %p155
        $region30: #{_fused_forward.1} parent=11 // pred_check_branch
          %325 = sbr.rel (%p323) target = $region32
        $region31: #{_fused_forward.1} parent=11 // pred_region
          _
        $region32: #{_fused_forward.1} parent=11 // pred_fallthru
          _
        // Predicated region
        $region33: #{_fused_forward.1} parent=11 // pred_check
          %p326 = pneg %p176
        $region34: #{_fused_forward.1} parent=11 // pred_check_branch
          %328 = sbr.rel (%p326) target = $region36
        $region35: #{_fused_forward.1} parent=11 // pred_region
          _
        $region36: #{_fused_forward.1} parent=11 // pred_fallthru
          _
        // Predicated region
        $region37: #{_fused_forward.1} parent=11 // pred_check
          %p329 = pneg %p197
        $region38: #{_fused_forward.1} parent=11 // pred_check_branch
          %331 = sbr.rel (%p329) target = $region40
        $region39: #{_fused_forward.1} parent=11 // pred_region
          _
        $region40: #{_fused_forward.1} parent=11 // pred_fallthru
          _
        // Predicated region
        $region41: #{_fused_forward.1} parent=11 // pred_check
          %p332 = pneg %p218
        $region42: #{_fused_forward.1} parent=11 // pred_check_branch
          %334 = sbr.rel (%p332) target = $region44
        $region43: #{_fused_forward.1} parent=11 // pred_region
          _
        $region44: #{_fused_forward.1} parent=11 // pred_fallthru
          _
      $region12: #{_fused_forward.1} parent=5 // pred_fallthru
        _
      %p335 = scmp.lt.s32.totalorder %s24, 2
      // Predicated region
      $region45: #{_fused_forward.1} parent=5 // pred_check
        %p336 = pneg %p335
      $region46: #{_fused_forward.1} parent=5 // pred_check_branch
        %338 = sbr.rel (%p336) target = $region48
      $region47: #{_fused_forward.1} parent=5 // pred_region
        // Predicated region
        $region49: #{_fused_forward.1} parent=47 // pred_check
          %p339 = pneg %p44
        $region50: #{_fused_forward.1} parent=47 // pred_check_branch
          %341 = sbr.rel (%p339) target = $region52
        $region51: #{_fused_forward.1} parent=47 // pred_region
          %p342 = scmp.lt.s32.totalorder %s24, 1
          %s343 = scalar_select %p342, %s24, 1
          %s344 = smul.addr %s343, 32
          %s345 = smul.addr %s344, 8
          %s346 = scalar_lea.vmem %s0, %s345
        $region52: #{_fused_forward.1} parent=47 // pred_fallthru
          _
      $region48: #{_fused_forward.1} parent=5 // pred_fallthru
        _
      %p347 = scmp.le.s32.totalorder 1, %s24
      %p348 = scmp.lt.s32.totalorder %s24, 3
      %p349 = pnand %p347, %p348
      %p350 = pneg %p349
      // Predicated region
      $region53: #{_fused_forward.1} parent=5 // pred_check
        _
      $region54: #{_fused_forward.1} parent=5 // pred_check_branch
        %352 = sbr.rel (%p349) target = $region56
      $region55: #{_fused_forward.1} parent=5 // pred_region
        %s353 = ssub.s32 %s24, 1
        %p354 = scmp.lt.s32.totalorder %s29, 1
        %s355 = scalar_select %p354, %s29, 1
        %s356 = smul.addr %s355, 32
        %s357 = smul.addr %s356, 8
        %s358 = scalar_lea.vmem %s0, %s357
        %p359 = pneg %p50
        %p360 = pneg %p47
        %p361 = pneg %p71
        %p362 = pneg %p68
        %p363 = pneg %p92
        %p364 = pneg %p89
        %p365 = pneg %p113
        %p366 = pneg %p110
        %p367 = pneg %p134
        %p368 = pneg %p131
        %p369 = pneg %p155
        %p370 = pneg %p152
        %p371 = pneg %p176
        %p372 = pneg %p173
        %p373 = pneg %p197
        %p374 = pneg %p194
        %p375 = pneg %p218
        %p376 = pneg %p215
        %p377 = pneg %p244
        %p378 = pneg %p241
        %s379 = sand.u32 %s231, 1
        %s380 = scalar_lea.sflag [#allocation7], %s379
        %s381 = sand.u32 %s231, 1
        %s382 = smul.addr %s381, 16
        %s383 = scalar_lea.vmem [#allocation6], %s382
        %p384 = pneg %p270
        %p385 = pneg %p267
        %s386 = sand.u32 %s29, 1
        %s387 = scalar_lea.sflag [#allocation9], %s386
        %s388 = sand.u32 %s257, 1
        %s389 = smul.addr %s388, 16
        %s390 = scalar_lea.vmem [#allocation8], %s389
        %p391 = pneg %p296
        %p392 = pneg %p293
        %s393 = sand.u32 %s29, 1
        %s394 = scalar_lea.sflag [#allocation9], %s393
        %s395 = sand.u32 %s283, 1
        %s396 = smul.addr %s395, 16
        %s397 = scalar_lea.vmem [#allocation10], %s396
        %p398 = scmp.lt.s32.totalorder %s29, 1
        %s399 = scalar_select %p398, %s29, 1
        %s400 = smul.addr %s399, 32
        %s401 = smul.addr %s400, 8
        %s402 = scalar_lea.vmem %s0, %s401
        %v403 = vld [vmem:[%s402] sm:$0xff]
        %v404 = vld [vmem:[%s402 + $0x8] sm:$0xff]
        %v405 = vld [vmem:[%s402 + $0x10] sm:$0xff]
        %v406 = vld [vmem:[%s402 + $0x18] sm:$0xff]
        %v407 = vld [vmem:[%s402 + $0x20] sm:$0xff]
        %v408 = vld [vmem:[%s402 + $0x28] sm:$0xff]
        %v409 = vld [vmem:[%s402 + $0x30] sm:$0xff]
        %v410 = vld [vmem:[%s402 + $0x38] sm:$0xff]
        %v411 = vld [vmem:[%s402 + $0x40] sm:$0xff]
        %v412 = vld [vmem:[%s402 + $0x48] sm:$0xff]
        %v413 = vld [vmem:[%s402 + $0x50] sm:$0xff]
        %v414 = vld [vmem:[%s402 + $0x58] sm:$0xff]
        %v415 = vld [vmem:[%s402 + $0x60] sm:$0xff]
        %v416 = vld [vmem:[%s402 + $0x68] sm:$0xff]
        %v417 = vld [vmem:[%s402 + $0x70] sm:$0xff]
        %v418 = vld [vmem:[%s402 + $0x78] sm:$0xff]
        %v419 = vld [vmem:[%s402 + $0x80] sm:$0xff]
        %v420 = vld [vmem:[%s402 + $0x88] sm:$0xff]
        %v421 = vld [vmem:[%s402 + $0x90] sm:$0xff]
        %v422 = vld [vmem:[%s402 + $0x98] sm:$0xff]
        %v423 = vld [vmem:[%s402 + $0xa0] sm:$0xff]
        %v424 = vld [vmem:[%s402 + $0xa8] sm:$0xff]
        %v425 = vld [vmem:[%s402 + $0xb0] sm:$0xff]
        %v426 = vld [vmem:[%s402 + $0xb8] sm:$0xff]
        %v427 = vld [vmem:[%s402 + $0xc0] sm:$0xff]
        %v428 = vld [vmem:[%s402 + $0xc8] sm:$0xff]
        %v429 = vld [vmem:[%s402 + $0xd0] sm:$0xff]
        %v430 = vld [vmem:[%s402 + $0xd8] sm:$0xff]
        %v431 = vld [vmem:[%s402 + $0xe0] sm:$0xff]
        %v432 = vld [vmem:[%s402 + $0xe8] sm:$0xff]
        %v433 = vld [vmem:[%s402 + $0xf0] sm:$0xff]
        %v434 = vld [vmem:[%s402 + $0xf8] sm:$0xff]
        %v435 = vld [vmem:[%s1] sm:$0x1]
        %v437 = vlaneseq
        %v438 = vshrl.u32 %v437, 7
        %v439 = vsub.s32 0, %v438
        %v440 = vrot.slane %v435, %v439
        %v442 = vmul.f32 %v403, %v440
        %v443 = vmul.f32 %v404, %v440
        %v444 = vmul.f32 %v405, %v440
        %v445 = vmul.f32 %v406, %v440
        %v446 = vmul.f32 %v407, %v440
        %v447 = vmul.f32 %v408, %v440
        %v448 = vmul.f32 %v409, %v440
        %v449 = vmul.f32 %v410, %v440
        %v450 = vmul.f32 %v411, %v440
        %v451 = vmul.f32 %v412, %v440
        %v452 = vmul.f32 %v413, %v440
        %v453 = vmul.f32 %v414, %v440
        %v454 = vmul.f32 %v415, %v440
        %v455 = vmul.f32 %v416, %v440
        %v456 = vmul.f32 %v417, %v440
        %v457 = vmul.f32 %v418, %v440
        %v458 = vmul.f32 %v419, %v440
        %v459 = vmul.f32 %v420, %v440
        %v460 = vmul.f32 %v421, %v440
        %v461 = vmul.f32 %v422, %v440
        %v462 = vmul.f32 %v423, %v440
        %v463 = vmul.f32 %v424, %v440
        %v464 = vmul.f32 %v425, %v440
        %v465 = vmul.f32 %v426, %v440
        %v466 = vmul.f32 %v427, %v440
        %v467 = vmul.f32 %v428, %v440
        %v468 = vmul.f32 %v429, %v440
        %v469 = vmul.f32 %v430, %v440
        %v470 = vmul.f32 %v431, %v440
        %v471 = vmul.f32 %v432, %v440
        %v472 = vmul.f32 %v433, %v440
        %v473 = vmul.f32 %v434, %v440
        %v474 = vld [vmem:[%s2] sm:$0x1]
        %v476 = vlaneseq
        %v477 = vshrl.u32 %v476, 7
        %v478 = vsub.s32 0, %v477
        %v479 = vrot.slane %v474, %v478
        %v481 = vadd.f32 %v442, %v479
        %v482 = vadd.f32 %v443, %v479
        %v483 = vadd.f32 %v444, %v479
        %v484 = vadd.f32 %v445, %v479
        %v485 = vadd.f32 %v446, %v479
        %v486 = vadd.f32 %v447, %v479
        %v487 = vadd.f32 %v448, %v479
        %v488 = vadd.f32 %v449, %v479
        %v489 = vadd.f32 %v450, %v479
        %v490 = vadd.f32 %v451, %v479
        %v491 = vadd.f32 %v452, %v479
        %v492 = vadd.f32 %v453, %v479
        %v493 = vadd.f32 %v454, %v479
        %v494 = vadd.f32 %v455, %v479
        %v495 = vadd.f32 %v456, %v479
        %v496 = vadd.f32 %v457, %v479
        %v497 = vadd.f32 %v458, %v479
        %v498 = vadd.f32 %v459, %v479
        %v499 = vadd.f32 %v460, %v479
        %v500 = vadd.f32 %v461, %v479
        %v501 = vadd.f32 %v462, %v479
        %v502 = vadd.f32 %v463, %v479
        %v503 = vadd.f32 %v464, %v479
        %v504 = vadd.f32 %v465, %v479
        %v505 = vadd.f32 %v466, %v479
        %v506 = vadd.f32 %v467, %v479
        %v507 = vadd.f32 %v468, %v479
        %v508 = vadd.f32 %v469, %v479
        %v509 = vadd.f32 %v470, %v479
        %v510 = vadd.f32 %v471, %v479
        %v511 = vadd.f32 %v472, %v479
        %v512 = vadd.f32 %v473, %v479
        %vm513 = vcmask 23552
        %514 = vst.msk [vmem:[#allocation2] sm:$0xff] %vm513, 0.0
        %515 = vst.msk [vmem:[#allocation2 + $0x8] sm:$0xff] %vm513, 0.0
        %vm516 = vcmask 17408
        %517 = vst.msk [vmem:[#allocation2 + $0x10] sm:$0x3] %vm516, 0.0
        %518 = vst.msk [vmem:[#allocation2 + $0x18] sm:$0xff] %vm513, 0.0
        %519 = vst.msk [vmem:[#allocation2 + $0x20] sm:$0xff] %vm513, 0.0
        %520 = vst.msk [vmem:[#allocation2 + $0x28] sm:$0x3] %vm516, 0.0
        %521 = vst.msk [vmem:[#allocation2 + $0x30] sm:$0xff] %vm513, 0.0
        %522 = vst.msk [vmem:[#allocation2 + $0x38] sm:$0xff] %vm513, 0.0
        %523 = vst.msk [vmem:[#allocation2 + $0x40] sm:$0x3] %vm516, 0.0
        %524 = vst.msk [vmem:[#allocation2 + $0x48] sm:$0xff] %vm513, 0.0
        %525 = vst.msk [vmem:[#allocation2 + $0x50] sm:$0xff] %vm513, 0.0
        %526 = vst.msk [vmem:[#allocation2 + $0x58] sm:$0x3] %vm516, 0.0
        %527 = vst.msk [vmem:[#allocation2 + $0x60] sm:$0xff] %vm513, 0.0
        %528 = vst.msk [vmem:[#allocation2 + $0x68] sm:$0xff] %vm513, 0.0
        %529 = vst.msk [vmem:[#allocation2 + $0x70] sm:$0x3] %vm516, 0.0
        %530 = vst.msk [vmem:[#allocation2 + $0x78] sm:$0xff] %vm513, 0.0
        %531 = vst.msk [vmem:[#allocation2 + $0x80] sm:$0xff] %vm513, 0.0
        %532 = vst.msk [vmem:[#allocation2 + $0x88] sm:$0x3] %vm516, 0.0
        %533 = vst.msk [vmem:[#allocation2 + $0x90] sm:$0xff] %vm513, 0.0
        %534 = vst.msk [vmem:[#allocation2 + $0x98] sm:$0xff] %vm513, 0.0
        %535 = vst.msk [vmem:[#allocation2 + $0xa0] sm:$0x3] %vm516, 0.0
        %536 = vst.msk [vmem:[#allocation2 + $0xa8] sm:$0xff] %vm513, 0.0
        %537 = vst.msk [vmem:[#allocation2 + $0xb0] sm:$0xff] %vm513, 0.0
        %538 = vst.msk [vmem:[#allocation2 + $0xb8] sm:$0x3] %vm516, 0.0
        %539 = vst.msk [vmem:[#allocation2 + $0xc0] sm:$0xff] %vm513, 0.0
        %540 = vst.msk [vmem:[#allocation2 + $0xc8] sm:$0xff] %vm513, 0.0
        %541 = vst.msk [vmem:[#allocation2 + $0xd0] sm:$0x3] %vm516, 0.0
        %542 = vst.msk [vmem:[#allocation2 + $0xd8] sm:$0xff] %vm513, 0.0
        %543 = vst.msk [vmem:[#allocation2 + $0xe0] sm:$0xff] %vm513, 0.0
        %544 = vst.msk [vmem:[#allocation2 + $0xe8] sm:$0x3] %vm516, 0.0
        %545 = vst.msk [vmem:[#allocation2 + $0xf0] sm:$0xff] %vm513, 0.0
        %546 = vst.msk [vmem:[#allocation2 + $0xf8] sm:$0xff] %vm513, 0.0
        %547 = vst.msk [vmem:[#allocation2 + $0x100] sm:$0x3] %vm516, 0.0
        %548 = vst.msk [vmem:[#allocation2 + $0x108] sm:$0xff] %vm513, 0.0
        %549 = vst.msk [vmem:[#allocation2 + $0x110] sm:$0xff] %vm513, 0.0
        %550 = vst.msk [vmem:[#allocation2 + $0x118] sm:$0x3] %vm516, 0.0
        %551 = vst.msk [vmem:[#allocation2 + $0x120] sm:$0xff] %vm513, 0.0
        %552 = vst.msk [vmem:[#allocation2 + $0x128] sm:$0xff] %vm513, 0.0
        %553 = vst.msk [vmem:[#allocation2 + $0x130] sm:$0x3] %vm516, 0.0
        %554 = vst.msk [vmem:[#allocation2 + $0x138] sm:$0xff] %vm513, 0.0
        %555 = vst.msk [vmem:[#allocation2 + $0x140] sm:$0xff] %vm513, 0.0
        %556 = vst.msk [vmem:[#allocation2 + $0x148] sm:$0x3] %vm516, 0.0
        %557 = vst.msk [vmem:[#allocation2 + $0x150] sm:$0xff] %vm513, 0.0
        %558 = vst.msk [vmem:[#allocation2 + $0x158] sm:$0xff] %vm513, 0.0
        %559 = vst.msk [vmem:[#allocation2 + $0x160] sm:$0x3] %vm516, 0.0
        %560 = vst.msk [vmem:[#allocation2 + $0x168] sm:$0xff] %vm513, 0.0
        %561 = vst.msk [vmem:[#allocation2 + $0x170] sm:$0xff] %vm513, 0.0
        %562 = vst.msk [vmem:[#allocation2 + $0x178] sm:$0x3] %vm516, 0.0
        %563 = vst.msk [vmem:[#allocation2 + $0x180] sm:$0xff] %vm513, 0.0
        %564 = vst.msk [vmem:[#allocation2 + $0x188] sm:$0xff] %vm513, 0.0
        %565 = vst.msk [vmem:[#allocation2 + $0x190] sm:$0x3] %vm516, 0.0
        %566 = vst.msk [vmem:[#allocation2 + $0x198] sm:$0xff] %vm513, 0.0
        %567 = vst.msk [vmem:[#allocation2 + $0x1a0] sm:$0xff] %vm513, 0.0
        %568 = vst.msk [vmem:[#allocation2 + $0x1a8] sm:$0x3] %vm516, 0.0
        %s569 = scalar_lea.vmem [#allocation2], 24
        %570 = vst.msk [vmem:[%s569 + $0x1] sm:$0xff] %vm513, %v481
        %571 = vst.msk [vmem:[%s569 + $0x9] sm:$0xff] %vm513, %v482
        %572 = vst.msk [vmem:[%s569 + $0x19] sm:$0xff] %vm513, %v483
        %573 = vst.msk [vmem:[%s569 + $0x21] sm:$0xff] %vm513, %v484
        %574 = vst.msk [vmem:[%s569 + $0x31] sm:$0xff] %vm513, %v485
        %575 = vst.msk [vmem:[%s569 + $0x39] sm:$0xff] %vm513, %v486
        %576 = vst.msk [vmem:[%s569 + $0x49] sm:$0xff] %vm513, %v487
        %577 = vst.msk [vmem:[%s569 + $0x51] sm:$0xff] %vm513, %v488
        %578 = vst.msk [vmem:[%s569 + $0x61] sm:$0xff] %vm513, %v489
        %579 = vst.msk [vmem:[%s569 + $0x69] sm:$0xff] %vm513, %v490
        %580 = vst.msk [vmem:[%s569 + $0x79] sm:$0xff] %vm513, %v491
        %581 = vst.msk [vmem:[%s569 + $0x81] sm:$0xff] %vm513, %v492
        %582 = vst.msk [vmem:[%s569 + $0x91] sm:$0xff] %vm513, %v493
        %583 = vst.msk [vmem:[%s569 + $0x99] sm:$0xff] %vm513, %v494
        %584 = vst.msk [vmem:[%s569 + $0xa9] sm:$0xff] %vm513, %v495
        %585 = vst.msk [vmem:[%s569 + $0xb1] sm:$0xff] %vm513, %v496
        %586 = vst.msk [vmem:[%s569 + $0xc1] sm:$0xff] %vm513, %v497
        %587 = vst.msk [vmem:[%s569 + $0xc9] sm:$0xff] %vm513, %v498
        %588 = vst.msk [vmem:[%s569 + $0xd9] sm:$0xff] %vm513, %v499
        %589 = vst.msk [vmem:[%s569 + $0xe1] sm:$0xff] %vm513, %v500
        %590 = vst.msk [vmem:[%s569 + $0xf1] sm:$0xff] %vm513, %v501
        %591 = vst.msk [vmem:[%s569 + $0xf9] sm:$0xff] %vm513, %v502
        %592 = vst.msk [vmem:[%s569 + $0x109] sm:$0xff] %vm513, %v503
        %593 = vst.msk [vmem:[%s569 + $0x111] sm:$0xff] %vm513, %v504
        %594 = vst.msk [vmem:[%s569 + $0x121] sm:$0xff] %vm513, %v505
        %595 = vst.msk [vmem:[%s569 + $0x129] sm:$0xff] %vm513, %v506
        %596 = vst.msk [vmem:[%s569 + $0x139] sm:$0xff] %vm513, %v507
        %597 = vst.msk [vmem:[%s569 + $0x141] sm:$0xff] %vm513, %v508
        %598 = vst.msk [vmem:[%s569 + $0x151] sm:$0xff] %vm513, %v509
        %599 = vst.msk [vmem:[%s569 + $0x159] sm:$0xff] %vm513, %v510
        %600 = vst.msk [vmem:[%s569 + $0x169] sm:$0xff] %vm513, %v511
        %601 = vst.msk [vmem:[%s569 + $0x171] sm:$0xff] %vm513, %v512
        %v602 = vld [vmem:[#allocation2] sm:$0xff]
        %v603 = vld [vmem:[#allocation2 + $0x8] sm:$0xff]
        %v604 = vld [vmem:[#allocation2 + $0x18] sm:$0xff]
        %v605 = vld [vmem:[#allocation2 + $0x20] sm:$0xff]
        %v606 = vld [vmem:[#allocation2 + $0x30] sm:$0xff]
        %v607 = vld [vmem:[#allocation2 + $0x38] sm:$0xff]
        %v608 = vld [vmem:[#allocation2 + $0x48] sm:$0xff]
        %v609 = vld [vmem:[#allocation2 + $0x50] sm:$0xff]
        %v610 = vld [vmem:[#allocation2 + $0x60] sm:$0xff]
        %v611 = vld [vmem:[#allocation2 + $0x68] sm:$0xff]
        %v612 = vld [vmem:[#allocation2 + $0x78] sm:$0xff]
        %v613 = vld [vmem:[#allocation2 + $0x80] sm:$0xff]
        %v614 = vld [vmem:[#allocation2 + $0x90] sm:$0xff]
        %v615 = vld [vmem:[#allocation2 + $0x98] sm:$0xff]
        %v616 = vld [vmem:[#allocation2 + $0xa8] sm:$0xff]
        %v617 = vld [vmem:[#allocation2 + $0xb0] sm:$0xff]
        %v618 = vld [vmem:[#allocation2 + $0xc0] sm:$0xff]
        %v619 = vld [vmem:[#allocation2 + $0xc8] sm:$0xff]
        %v620 = vld [vmem:[#allocation2 + $0xd8] sm:$0xff]
        %v621 = vld [vmem:[#allocation2 + $0xe0] sm:$0xff]
        %v622 = vld [vmem:[#allocation2 + $0xf0] sm:$0xff]
        %v623 = vld [vmem:[#allocation2 + $0xf8] sm:$0xff]
        %v624 = vld [vmem:[#allocation2 + $0x108] sm:$0xff]
        %v625 = vld [vmem:[#allocation2 + $0x110] sm:$0xff]
        %v626 = vld [vmem:[#allocation2 + $0x120] sm:$0xff]
        %v627 = vld [vmem:[#allocation2 + $0x128] sm:$0xff]
        %v628 = vld [vmem:[#allocation2 + $0x138] sm:$0xff]
        %v629 = vld [vmem:[#allocation2 + $0x140] sm:$0xff]
        %v630 = vld [vmem:[#allocation2 + $0x150] sm:$0xff]
        %v631 = vld [vmem:[#allocation2 + $0x158] sm:$0xff]
        %v632 = vld [vmem:[#allocation2 + $0x168] sm:$0xff]
        %v633 = vld [vmem:[#allocation2 + $0x170] sm:$0xff]
        %v634 = vld [vmem:[#allocation2 + $0x180] sm:$0xff]
        %v635 = vld [vmem:[#allocation2 + $0x188] sm:$0xff]
        %v636 = vld [vmem:[#allocation2 + $0x198] sm:$0xff]
        %v637 = vld [vmem:[#allocation2 + $0x1a0] sm:$0xff]
        %v638 = vld [vmem:[%s3] sm:$0x7]
        %v640 = vsel %vm513, %v602, 0
        %v643 = vsel %vm513, %v603, 0
        %v646 = vsel %vm513, %v604, 0
        %v649 = vsel %vm513, %v605, 0
        %v652 = vsel %vm513, %v606, 0
        %v655 = vsel %vm513, %v607, 0
        %v658 = vsel %vm513, %v608, 0
        %v661 = vsel %vm513, %v609, 0
        %v664 = vsel %vm513, %v610, 0
        %v667 = vsel %vm513, %v611, 0
        %v670 = vsel %vm513, %v612, 0
        %v673 = vsel %vm513, %v613, 0
        %v676 = vsel %vm513, %v614, 0
        %v679 = vsel %vm513, %v615, 0
        %v682 = vsel %vm513, %v616, 0
        %v685 = vsel %vm513, %v617, 0
        %v688 = vsel %vm513, %v618, 0
        %v691 = vsel %vm513, %v619, 0
        %v694 = vsel %vm513, %v620, 0
        %v697 = vsel %vm513, %v621, 0
        %v700 = vsel %vm513, %v622, 0
        %v703 = vsel %vm513, %v623, 0
        %v706 = vsel %vm513, %v624, 0
        %v709 = vsel %vm513, %v625, 0
        %v712 = vsel %vm513, %v626, 0
        %v715 = vsel %vm513, %v627, 0
        %v718 = vsel %vm513, %v628, 0
        %v721 = vsel %vm513, %v629, 0
        %v724 = vsel %vm513, %v630, 0
        %v727 = vsel %vm513, %v631, 0
        %v730 = vsel %vm513, %v632, 0
        %v733 = vsel %vm513, %v633, 0
        %v736 = vsel %vm513, %v634, 0
        %v739 = vsel %vm513, %v635, 0
        %v742 = vsel %vm513, %v636, 0
        %v745 = vsel %vm513, %v637, 0
        %vm747 = vcmask 1042432
        %v749 = vsel %vm747, %v638, 0
        %751 = vmatprep.subr.mxu0 0.0
        %752 = vmatpush1.msra.mxu0 %v749
        %753 = vmatprep.subr.mxu0 0.0
        %754 = vmatpush1.msra.mxu0 0.0
        %755 = vmatprep.subr.mxu0 0.0
        %756 = vmatpush1.msra.mxu0 0.0
        %757 = vmatprep.subr.mxu0 0.0
        %758 = vmatpush1.msra.mxu0 0.0
        %759 = vmatprep.subr.mxu0 0.0
        %760 = vmatpush1.msra.mxu0 0.0
        %761 = vmatprep.subr.mxu0 0.0
        %762 = vmatpush1.msra.mxu0 0.0
        %763 = vmatprep.subr.mxu0 0.0
        %764 = vmatpush1.msra.mxu0 0.0
        %765 = vmatprep.subr.mxu0 0.0
        %766 = vmatpush1.msra.mxu0 0.0
        %767 = vmatprep.subr.mxu0 0.0
        %768 = vmatpush1.msra.mxu0 0.0
        %769 = vmatprep.subr.mxu0 0.0
        %770 = vmatpush1.msra.mxu0 0.0
        %771 = vmatprep.subr.mxu0 0.0
        %772 = vmatpush1.msra.mxu0 0.0
        %773 = vmatprep.subr.mxu0 0.0
        %774 = vmatpush1.msra.mxu0 0.0
        %775 = vmatprep.subr.mxu0 0.0
        %776 = vmatpush1.msra.mxu0 0.0
        %777 = vmatprep.subr.mxu0 0.0
        %778 = vmatpush1.msra.mxu0 0.0
        %779 = vmatprep.subr.mxu0 0.0
        %780 = vmatpush1.msra.mxu0 0.0
        %781 = vmatprep.subr.mxu0 0.0
        %782 = vmatpush1.msra.mxu0 0.0
        %783 = vmatprep.subr.mxu0 0.0
        %784 = vmatpush1.msra.mxu0 0.0
        %785 = vmatprep.subr.mxu0 0.0
        %786 = vmatpush1.msra.mxu0 0.0
        %787 = vmatprep.subr.mxu0 0.0
        %788 = vmatpush1.msra.mxu0 0.0
        %789 = vmatprep.subr.mxu0 0.0
        %790 = vmatpush1.msra.mxu0 0.0
        %791 = vmatprep.subr.mxu0 0.0
        %792 = vmatpush1.msra.mxu0 0.0
        %793 = vmatprep.subr.mxu0 0.0
        %794 = vmatpush1.msra.mxu0 0.0
        %795 = vmatprep.subr.mxu0 0.0
        %796 = vmatpush1.msra.mxu0 0.0
        %797 = vmatprep.subr.mxu0 0.0
        %798 = vmatpush1.msra.mxu0 0.0
        %799 = vmatprep.subr.mxu0 0.0
        %800 = vmatpush1.msra.mxu0 0.0
        %801 = vmatprep.subr.mxu0 0.0
        %802 = vmatpush1.msra.mxu0 0.0
        %803 = vmatprep.subr.mxu0 0.0
        %804 = vmatpush1.msra.mxu0 0.0
        %805 = vmatprep.subr.mxu0 0.0
        %806 = vmatpush1.msra.mxu0 0.0
        %807 = vmatprep.subr.mxu0 0.0
        %808 = vmatpush1.msra.mxu0 0.0
        %809 = vmatprep.subr.mxu0 0.0
        %810 = vmatpush1.msra.mxu0 0.0
        %811 = vmatprep.subr.mxu0 0.0
        %812 = vmatpush1.msra.mxu0 0.0
        %813 = vmatprep.subr.mxu0 0.0
        %814 = vmatpush1.msra.mxu0 0.0
        %815 = vmatprep.mubr.f32.mxu0 0.0
        %816 = vmatmul.mubr.f32.gmra.mrb[0].mxu0 %v640
        %v817 = vpop.f32.mrb[0].mxu0
        %v818 = vadd.f32 0.0, %v817
        %v819 = vpop.f32.mrb[0].mxu0
        %820 = vmatprep.mubr.f32.mxu0 0.0
        %821 = vmatmul.mubr.f32.gmra.mrb[0].mxu0 %v643
        %v822 = vpop.f32.mrb[0].mxu0
        %v823 = vadd.f32 0.0, %v822
        %v824 = vpop.f32.mrb[0].mxu0
        %825 = vmatprep.mubr.f32.mxu0 0.0
        %826 = vmatmul.mubr.f32.gmra.mrb[0].mxu0 %v646
        %v827 = vpop.f32.mrb[0].mxu0
        %v828 = vadd.f32 0.0, %v827
        %v829 = vpop.f32.mrb[0].mxu0
        %830 = vmatprep.mubr.f32.mxu0 0.0
        %831 = vmatmul.mubr.f32.gmra.mrb[0].mxu0 %v649
        %v832 = vpop.f32.mrb[0].mxu0
        %v833 = vadd.f32 0.0, %v832
        %v834 = vpop.f32.mrb[0].mxu0
        %835 = vmatprep.mubr.f32.mxu0 0.0
        %836 = vmatmul.mubr.f32.gmra.mrb[0].mxu0 %v652
        %v837 = vpop.f32.mrb[0].mxu0
        %v838 = vadd.f32 0.0, %v837
        %v839 = vpop.f32.mrb[0].mxu0
        %840 = vmatprep.mubr.f32.mxu0 0.0
        %841 = vmatmul.mubr.f32.gmra.mrb[0].mxu0 %v655
        %v842 = vpop.f32.mrb[0].mxu0
        %v843 = vadd.f32 0.0, %v842
        %v844 = vpop.f32.mrb[0].mxu0
        %845 = vmatprep.mubr.f32.mxu0 0.0
        %846 = vmatmul.mubr.f32.gmra.mrb[0].mxu0 %v658
        %v847 = vpop.f32.mrb[0].mxu0
        %v848 = vadd.f32 0.0, %v847
        %v849 = vpop.f32.mrb[0].mxu0
        %850 = vmatprep.mubr.f32.mxu0 0.0
        %851 = vmatmul.mubr.f32.gmra.mrb[0].mxu0 %v661
        %v852 = vpop.f32.mrb[0].mxu0
        %v853 = vadd.f32 0.0, %v852
        %v854 = vpop.f32.mrb[0].mxu0
        %855 = vmatprep.mubr.f32.mxu0 0.0
        %856 = vmatmul.mubr.f32.gmra.mrb[0].mxu0 %v664
        %v857 = vpop.f32.mrb[0].mxu0
        %v858 = vadd.f32 0.0, %v857
        %v859 = vpop.f32.mrb[0].mxu0
        %860 = vmatprep.mubr.f32.mxu0 0.0
        %861 = vmatmul.mubr.f32.gmra.mrb[0].mxu0 %v667
        %v862 = vpop.f32.mrb[0].mxu0
        %v863 = vadd.f32 0.0, %v862
        %v864 = vpop.f32.mrb[0].mxu0
        %865 = vmatprep.mubr.f32.mxu0 0.0
        %866 = vmatmul.mubr.f32.gmra.mrb[0].mxu0 %v670
        %v867 = vpop.f32.mrb[0].mxu0
        %v868 = vadd.f32 0.0, %v867
        %v869 = vpop.f32.mrb[0].mxu0
        %870 = vmatprep.mubr.f32.mxu0 0.0
        %871 = vmatmul.mubr.f32.gmra.mrb[0].mxu0 %v673
        %v872 = vpop.f32.mrb[0].mxu0
        %v873 = vadd.f32 0.0, %v872
        %v874 = vpop.f32.mrb[0].mxu0
        %875 = vmatprep.mubr.f32.mxu0 0.0
        %876 = vmatmul.mubr.f32.gmra.mrb[0].mxu0 %v676
        %v877 = vpop.f32.mrb[0].mxu0
        %v878 = vadd.f32 0.0, %v877
        %v879 = vpop.f32.mrb[0].mxu0
        %880 = vmatprep.mubr.f32.mxu0 0.0
        %881 = vmatmul.mubr.f32.gmra.mrb[0].mxu0 %v679
        %v882 = vpop.f32.mrb[0].mxu0
        %v883 = vadd.f32 0.0, %v882
        %v884 = vpop.f32.mrb[0].mxu0
        %885 = vmatprep.mubr.f32.mxu0 0.0
        %886 = vmatmul.mubr.f32.gmra.mrb[0].mxu0 %v682
        %v887 = vpop.f32.mrb[0].mxu0
        %v888 = vadd.f32 0.0, %v887
        %v889 = vpop.f32.mrb[0].mxu0
        %890 = vmatprep.mubr.f32.mxu0 0.0
        %891 = vmatmul.mubr.f32.gmra.mrb[0].mxu0 %v685
        %v892 = vpop.f32.mrb[0].mxu0
        %v893 = vadd.f32 0.0, %v892
        %v894 = vpop.f32.mrb[0].mxu0
        %895 = vmatprep.mubr.f32.mxu0 0.0
        %896 = vmatmul.mubr.f32.gmra.mrb[0].mxu0 %v688
        %v897 = vpop.f32.mrb[0].mxu0
        %v898 = vadd.f32 0.0, %v897
        %v899 = vpop.f32.mrb[0].mxu0
        %900 = vmatprep.mubr.f32.mxu0 0.0
        %901 = vmatmul.mubr.f32.gmra.mrb[0].mxu0 %v691
        %v902 = vpop.f32.mrb[0].mxu0
        %v903 = vadd.f32 0.0, %v902
        %v904 = vpop.f32.mrb[0].mxu0
        %905 = vmatprep.mubr.f32.mxu0 0.0
        %906 = vmatmul.mubr.f32.gmra.mrb[0].mxu0 %v694
        %v907 = vpop.f32.mrb[0].mxu0
        %v908 = vadd.f32 0.0, %v907
        %v909 = vpop.f32.mrb[0].mxu0
        %910 = vmatprep.mubr.f32.mxu0 0.0
        %911 = vmatmul.mubr.f32.gmra.mrb[0].mxu0 %v697
        %v912 = vpop.f32.mrb[0].mxu0
        %v913 = vadd.f32 0.0, %v912
        %v914 = vpop.f32.mrb[0].mxu0
        %915 = vmatprep.mubr.f32.mxu0 0.0
        %916 = vmatmul.mubr.f32.gmra.mrb[0].mxu0 %v700
        %v917 = vpop.f32.mrb[0].mxu0
        %v918 = vadd.f32 0.0, %v917
        %v919 = vpop.f32.mrb[0].mxu0
        %920 = vmatprep.mubr.f32.mxu0 0.0
        %921 = vmatmul.mubr.f32.gmra.mrb[0].mxu0 %v703
        %v922 = vpop.f32.mrb[0].mxu0
        %v923 = vadd.f32 0.0, %v922
        %v924 = vpop.f32.mrb[0].mxu0
        %925 = vmatprep.mubr.f32.mxu0 0.0
        %926 = vmatmul.mubr.f32.gmra.mrb[0].mxu0 %v706
        %v927 = vpop.f32.mrb[0].mxu0
        %v928 = vadd.f32 0.0, %v927
        %v929 = vpop.f32.mrb[0].mxu0
        %930 = vmatprep.mubr.f32.mxu0 0.0
        %931 = vmatmul.mubr.f32.gmra.mrb[0].mxu0 %v709
        %v932 = vpop.f32.mrb[0].mxu0
        %v933 = vadd.f32 0.0, %v932
        %v934 = vpop.f32.mrb[0].mxu0
        %935 = vmatprep.mubr.f32.mxu0 0.0
        %936 = vmatmul.mubr.f32.gmra.mrb[0].mxu0 %v712
        %v937 = vpop.f32.mrb[0].mxu0
        %v938 = vadd.f32 0.0, %v937
        %v939 = vpop.f32.mrb[0].mxu0
        %940 = vmatprep.mubr.f32.mxu0 0.0
        %941 = vmatmul.mubr.f32.gmra.mrb[0].mxu0 %v715
        %v942 = vpop.f32.mrb[0].mxu0
        %v943 = vadd.f32 0.0, %v942
        %v944 = vpop.f32.mrb[0].mxu0
        %945 = vmatprep.mubr.f32.mxu0 0.0
        %946 = vmatmul.mubr.f32.gmra.mrb[0].mxu0 %v718
        %v947 = vpop.f32.mrb[0].mxu0
        %v948 = vadd.f32 0.0, %v947
        %v949 = vpop.f32.mrb[0].mxu0
        %950 = vmatprep.mubr.f32.mxu0 0.0
        %951 = vmatmul.mubr.f32.gmra.mrb[0].mxu0 %v721
        %v952 = vpop.f32.mrb[0].mxu0
        %v953 = vadd.f32 0.0, %v952
        %v954 = vpop.f32.mrb[0].mxu0
        %955 = vmatprep.mubr.f32.mxu0 0.0
        %956 = vmatmul.mubr.f32.gmra.mrb[0].mxu0 %v724
        %v957 = vpop.f32.mrb[0].mxu0
        %v958 = vadd.f32 0.0, %v957
        %v959 = vpop.f32.mrb[0].mxu0
        %960 = vmatprep.mubr.f32.mxu0 0.0
        %961 = vmatmul.mubr.f32.gmra.mrb[0].mxu0 %v727
        %v962 = vpop.f32.mrb[0].mxu0
        %v963 = vadd.f32 0.0, %v962
        %v964 = vpop.f32.mrb[0].mxu0
        %965 = vmatprep.mubr.f32.mxu0 0.0
        %966 = vmatmul.mubr.f32.gmra.mrb[0].mxu0 %v730
        %v967 = vpop.f32.mrb[0].mxu0
        %v968 = vadd.f32 0.0, %v967
        %v969 = vpop.f32.mrb[0].mxu0
        %970 = vmatprep.mubr.f32.mxu0 0.0
        %971 = vmatmul.mubr.f32.gmra.mrb[0].mxu0 %v733
        %v972 = vpop.f32.mrb[0].mxu0
        %v973 = vadd.f32 0.0, %v972
        %v974 = vpop.f32.mrb[0].mxu0
        %975 = vmatprep.mubr.f32.mxu0 0.0
        %976 = vmatmul.mubr.f32.gmra.mrb[0].mxu0 %v736
        %v977 = vpop.f32.mrb[0].mxu0
        %v978 = vadd.f32 0.0, %v977
        %v979 = vpop.f32.mrb[0].mxu0
        %980 = vmatprep.mubr.f32.mxu0 0.0
        %981 = vmatmul.mubr.f32.gmra.mrb[0].mxu0 %v739
        %v982 = vpop.f32.mrb[0].mxu0
        %v983 = vadd.f32 0.0, %v982
        %v984 = vpop.f32.mrb[0].mxu0
        %985 = vmatprep.mubr.f32.mxu0 0.0
        %986 = vmatmul.mubr.f32.gmra.mrb[0].mxu0 %v742
        %v987 = vpop.f32.mrb[0].mxu0
        %v988 = vadd.f32 0.0, %v987
        %v989 = vpop.f32.mrb[0].mxu0
        %990 = vmatprep.mubr.f32.mxu0 0.0
        %991 = vmatmul.mubr.f32.gmra.mrb[0].mxu0 %v745
        %v992 = vpop.f32.mrb[0].mxu0
        %v993 = vadd.f32 0.0, %v992
        %v994 = vpop.f32.mrb[0].mxu0
        %995 = vdwg.mxu0
        %v996 = vadd.f32 %v818, 0.0
        %v997 = vadd.f32 %v823, 0.0
        %v998 = vadd.f32 %v828, 0.0
        %v999 = vadd.f32 %v833, 0.0
        %v1000 = vadd.f32 %v838, 0.0
        %v1001 = vadd.f32 %v843, 0.0
        %v1002 = vadd.f32 %v848, 0.0
        %v1003 = vadd.f32 %v853, 0.0
        %v1004 = vadd.f32 %v858, 0.0
        %v1005 = vadd.f32 %v863, 0.0
        %v1006 = vadd.f32 %v868, 0.0
        %v1007 = vadd.f32 %v873, 0.0
        %v1008 = vadd.f32 %v878, 0.0
        %v1009 = vadd.f32 %v883, 0.0
        %v1010 = vadd.f32 %v888, 0.0
        %v1011 = vadd.f32 %v893, 0.0
        %v1012 = vadd.f32 %v898, 0.0
        %v1013 = vadd.f32 %v903, 0.0
        %v1014 = vadd.f32 %v908, 0.0
        %v1015 = vadd.f32 %v913, 0.0
        %v1016 = vadd.f32 %v918, 0.0
        %v1017 = vadd.f32 %v923, 0.0
        %v1018 = vadd.f32 %v928, 0.0
        %v1019 = vadd.f32 %v933, 0.0
        %v1020 = vadd.f32 %v938, 0.0
        %v1021 = vadd.f32 %v943, 0.0
        %v1022 = vadd.f32 %v948, 0.0
        %v1023 = vadd.f32 %v953, 0.0
        %v1024 = vadd.f32 %v958, 0.0
        %v1025 = vadd.f32 %v963, 0.0
        %v1026 = vadd.f32 %v968, 0.0
        %v1027 = vadd.f32 %v973, 0.0
        %1060 = vrot.lane.b32.xlu0 %v828, 120
        %v1061 = vpop.permute.xlu0 %1060
        %1062 = vrot.lane.b32.xlu0 %v833, 120
        %v1063 = vpop.permute.xlu0 %1062
        %1064 = vrot.lane.b32.xlu0 %v838, 120
        %v1065 = vpop.permute.xlu0 %1064
        %1066 = vrot.lane.b32.xlu0 %v843, 120
        %v1067 = vpop.permute.xlu0 %1066
        %1068 = vrot.lane.b32.xlu0 %v848, 120
        %v1069 = vpop.permute.xlu0 %1068
        %1070 = vrot.lane.b32.xlu0 %v853, 120
        %v1071 = vpop.permute.xlu0 %1070
        %1072 = vrot.lane.b32.xlu0 %v858, 120
        %v1073 = vpop.permute.xlu0 %1072
        %1074 = vrot.lane.b32.xlu0 %v863, 120
        %v1075 = vpop.permute.xlu0 %1074
        %1076 = vrot.lane.b32.xlu0 %v868, 120
        %v1077 = vpop.permute.xlu0 %1076
        %1078 = vrot.lane.b32.xlu0 %v873, 120
        %v1079 = vpop.permute.xlu0 %1078
        %1080 = vrot.lane.b32.xlu0 %v878, 120
        %v1081 = vpop.permute.xlu0 %1080
        %1082 = vrot.lane.b32.xlu0 %v883, 120
        %v1083 = vpop.permute.xlu0 %1082
        %1084 = vrot.lane.b32.xlu0 %v888, 120
        %v1085 = vpop.permute.xlu0 %1084
        %1086 = vrot.lane.b32.xlu0 %v893, 120
        %v1087 = vpop.permute.xlu0 %1086
        %1088 = vrot.lane.b32.xlu0 %v898, 120
        %v1089 = vpop.permute.xlu0 %1088
        %1090 = vrot.lane.b32.xlu0 %v903, 120
        %v1091 = vpop.permute.xlu0 %1090
        %1092 = vrot.lane.b32.xlu0 %v908, 120
        %v1093 = vpop.permute.xlu0 %1092
        %1094 = vrot.lane.b32.xlu0 %v913, 120
        %v1095 = vpop.permute.xlu0 %1094
        %1096 = vrot.lane.b32.xlu0 %v918, 120
        %v1097 = vpop.permute.xlu0 %1096
        %1098 = vrot.lane.b32.xlu0 %v923, 120
        %v1099 = vpop.permute.xlu0 %1098
        %1100 = vrot.lane.b32.xlu0 %v928, 120
        %v1101 = vpop.permute.xlu0 %1100
        %1102 = vrot.lane.b32.xlu0 %v933, 120
        %v1103 = vpop.permute.xlu0 %1102
        %1104 = vrot.lane.b32.xlu0 %v938, 120
        %v1105 = vpop.permute.xlu0 %1104
        %1106 = vrot.lane.b32.xlu0 %v943, 120
        %v1107 = vpop.permute.xlu0 %1106
        %1108 = vrot.lane.b32.xlu0 %v948, 120
        %v1109 = vpop.permute.xlu0 %1108
        %1110 = vrot.lane.b32.xlu0 %v953, 120
        %v1111 = vpop.permute.xlu0 %1110
        %1112 = vrot.lane.b32.xlu0 %v958, 120
        %v1113 = vpop.permute.xlu0 %1112
        %1114 = vrot.lane.b32.xlu0 %v963, 120
        %v1115 = vpop.permute.xlu0 %1114
        %1116 = vrot.lane.b32.xlu0 %v968, 120
        %v1117 = vpop.permute.xlu0 %1116
        %1118 = vrot.lane.b32.xlu0 %v973, 120
        %v1119 = vpop.permute.xlu0 %1118
        %1120 = vrot.lane.b32.xlu0 %v978, 120
        %v1121 = vpop.permute.xlu0 %1120
        %1122 = vrot.lane.b32.xlu0 %v983, 120
        %v1123 = vpop.permute.xlu0 %1122
        %v1156 = vadd.f32 %v996, %v1061
        %v1157 = vadd.f32 %v997, %v1063
        %v1158 = vadd.f32 %v998, %v1065
        %v1159 = vadd.f32 %v999, %v1067
        %v1160 = vadd.f32 %v1000, %v1069
        %v1161 = vadd.f32 %v1001, %v1071
        %v1162 = vadd.f32 %v1002, %v1073
        %v1163 = vadd.f32 %v1003, %v1075
        %v1164 = vadd.f32 %v1004, %v1077
        %v1165 = vadd.f32 %v1005, %v1079
        %v1166 = vadd.f32 %v1006, %v1081
        %v1167 = vadd.f32 %v1007, %v1083
        %v1168 = vadd.f32 %v1008, %v1085
        %v1169 = vadd.f32 %v1009, %v1087
        %v1170 = vadd.f32 %v1010, %v1089
        %v1171 = vadd.f32 %v1011, %v1091
        %v1172 = vadd.f32 %v1012, %v1093
        %v1173 = vadd.f32 %v1013, %v1095
        %v1174 = vadd.f32 %v1014, %v1097
        %v1175 = vadd.f32 %v1015, %v1099
        %v1176 = vadd.f32 %v1016, %v1101
        %v1177 = vadd.f32 %v1017, %v1103
        %v1178 = vadd.f32 %v1018, %v1105
        %v1179 = vadd.f32 %v1019, %v1107
        %v1180 = vadd.f32 %v1020, %v1109
        %v1181 = vadd.f32 %v1021, %v1111
        %v1182 = vadd.f32 %v1022, %v1113
        %v1183 = vadd.f32 %v1023, %v1115
        %v1184 = vadd.f32 %v1024, %v1117
        %v1185 = vadd.f32 %v1025, %v1119
        %v1186 = vadd.f32 %v1026, %v1121
        %v1187 = vadd.f32 %v1027, %v1123
        %1190 = vrot.lane.b32.xlu0 %v838, 112
        %v1191 = vpop.permute.xlu0 %1190
        %1192 = vrot.lane.b32.xlu0 %v843, 112
        %v1193 = vpop.permute.xlu0 %1192
        %1194 = vrot.lane.b32.xlu0 %v848, 112
        %v1195 = vpop.permute.xlu0 %1194
        %1196 = vrot.lane.b32.xlu0 %v853, 112
        %v1197 = vpop.permute.xlu0 %1196
        %1198 = vrot.lane.b32.xlu0 %v858, 112
        %v1199 = vpop.permute.xlu0 %1198
        %1200 = vrot.lane.b32.xlu0 %v863, 112
        %v1201 = vpop.permute.xlu0 %1200
        %1202 = vrot.lane.b32.xlu0 %v868, 112
        %v1203 = vpop.permute.xlu0 %1202
        %1204 = vrot.lane.b32.xlu0 %v873, 112
        %v1205 = vpop.permute.xlu0 %1204
        %1206 = vrot.lane.b32.xlu0 %v878, 112
        %v1207 = vpop.permute.xlu0 %1206
        %1208 = vrot.lane.b32.xlu0 %v883, 112
        %v1209 = vpop.permute.xlu0 %1208
        %1210 = vrot.lane.b32.xlu0 %v888, 112
        %v1211 = vpop.permute.xlu0 %1210
        %1212 = vrot.lane.b32.xlu0 %v893, 112
        %v1213 = vpop.permute.xlu0 %1212
        %1214 = vrot.lane.b32.xlu0 %v898, 112
        %v1215 = vpop.permute.xlu0 %1214
        %1216 = vrot.lane.b32.xlu0 %v903, 112
        %v1217 = vpop.permute.xlu0 %1216
        %1218 = vrot.lane.b32.xlu0 %v908, 112
        %v1219 = vpop.permute.xlu0 %1218
        %1220 = vrot.lane.b32.xlu0 %v913, 112
        %v1221 = vpop.permute.xlu0 %1220
        %1222 = vrot.lane.b32.xlu0 %v918, 112
        %v1223 = vpop.permute.xlu0 %1222
        %1224 = vrot.lane.b32.xlu0 %v923, 112
        %v1225 = vpop.permute.xlu0 %1224
        %1226 = vrot.lane.b32.xlu0 %v928, 112
        %v1227 = vpop.permute.xlu0 %1226
        %1228 = vrot.lane.b32.xlu0 %v933, 112
        %v1229 = vpop.permute.xlu0 %1228
        %1230 = vrot.lane.b32.xlu0 %v938, 112
        %v1231 = vpop.permute.xlu0 %1230
        %1232 = vrot.lane.b32.xlu0 %v943, 112
        %v1233 = vpop.permute.xlu0 %1232
        %1234 = vrot.lane.b32.xlu0 %v948, 112
        %v1235 = vpop.permute.xlu0 %1234
        %1236 = vrot.lane.b32.xlu0 %v953, 112
        %v1237 = vpop.permute.xlu0 %1236
        %1238 = vrot.lane.b32.xlu0 %v958, 112
        %v1239 = vpop.permute.xlu0 %1238
        %1240 = vrot.lane.b32.xlu0 %v963, 112
        %v1241 = vpop.permute.xlu0 %1240
        %1242 = vrot.lane.b32.xlu0 %v968, 112
        %v1243 = vpop.permute.xlu0 %1242
        %1244 = vrot.lane.b32.xlu0 %v973, 112
        %v1245 = vpop.permute.xlu0 %1244
        %1246 = vrot.lane.b32.xlu0 %v978, 112
        %v1247 = vpop.permute.xlu0 %1246
        %1248 = vrot.lane.b32.xlu0 %v983, 112
        %v1249 = vpop.permute.xlu0 %1248
        %1250 = vrot.lane.b32.xlu0 %v988, 112
        %v1251 = vpop.permute.xlu0 %1250
        %1252 = vrot.lane.b32.xlu0 %v993, 112
        %v1253 = vpop.permute.xlu0 %1252
        %v1286 = vadd.f32 %v1156, %v1191
        %v1287 = vadd.f32 %v1157, %v1193
        %v1288 = vadd.f32 %v1158, %v1195
        %v1289 = vadd.f32 %v1159, %v1197
        %v1290 = vadd.f32 %v1160, %v1199
        %v1291 = vadd.f32 %v1161, %v1201
        %v1292 = vadd.f32 %v1162, %v1203
        %v1293 = vadd.f32 %v1163, %v1205
        %v1294 = vadd.f32 %v1164, %v1207
        %v1295 = vadd.f32 %v1165, %v1209
        %v1296 = vadd.f32 %v1166, %v1211
        %v1297 = vadd.f32 %v1167, %v1213
        %v1298 = vadd.f32 %v1168, %v1215
        %v1299 = vadd.f32 %v1169, %v1217
        %v1300 = vadd.f32 %v1170, %v1219
        %v1301 = vadd.f32 %v1171, %v1221
        %v1302 = vadd.f32 %v1172, %v1223
        %v1303 = vadd.f32 %v1173, %v1225
        %v1304 = vadd.f32 %v1174, %v1227
        %v1305 = vadd.f32 %v1175, %v1229
        %v1306 = vadd.f32 %v1176, %v1231
        %v1307 = vadd.f32 %v1177, %v1233
        %v1308 = vadd.f32 %v1178, %v1235
        %v1309 = vadd.f32 %v1179, %v1237
        %v1310 = vadd.f32 %v1180, %v1239
        %v1311 = vadd.f32 %v1181, %v1241
        %v1312 = vadd.f32 %v1182, %v1243
        %v1313 = vadd.f32 %v1183, %v1245
        %v1314 = vadd.f32 %v1184, %v1247
        %v1315 = vadd.f32 %v1185, %v1249
        %v1316 = vadd.f32 %v1186, %v1251
        %v1317 = vadd.f32 %v1187, %v1253
        %v1318 = vld [vmem:[#allocation2 + $0x1] sm:$0xff]
        %v1319 = vld [vmem:[#allocation2 + $0x9] sm:$0xff]
        %v1320 = vld [vmem:[#allocation2 + $0x19] sm:$0xff]
        %v1321 = vld [vmem:[#allocation2 + $0x21] sm:$0xff]
        %v1322 = vld [vmem:[#allocation2 + $0x31] sm:$0xff]
        %v1323 = vld [vmem:[#allocation2 + $0x39] sm:$0xff]
        %v1324 = vld [vmem:[#allocation2 + $0x49] sm:$0xff]
        %v1325 = vld [vmem:[#allocation2 + $0x51] sm:$0xff]
        %v1326 = vld [vmem:[#allocation2 + $0x61] sm:$0xff]
        %v1327 = vld [vmem:[#allocation2 + $0x69] sm:$0xff]
        %v1328 = vld [vmem:[#allocation2 + $0x79] sm:$0xff]
        %v1329 = vld [vmem:[#allocation2 + $0x81] sm:$0xff]
        %v1330 = vld [vmem:[#allocation2 + $0x91] sm:$0xff]
        %v1331 = vld [vmem:[#allocation2 + $0x99] sm:$0xff]
        %v1332 = vld [vmem:[#allocation2 + $0xa9] sm:$0xff]
        %v1333 = vld [vmem:[#allocation2 + $0xb1] sm:$0xff]
        %v1334 = vld [vmem:[#allocation2 + $0xc1] sm:$0xff]
        %v1335 = vld [vmem:[#allocation2 + $0xc9] sm:$0xff]
        %v1336 = vld [vmem:[#allocation2 + $0xd9] sm:$0xff]
        %v1337 = vld [vmem:[#allocation2 + $0xe1] sm:$0xff]
        %v1338 = vld [vmem:[#allocation2 + $0xf1] sm:$0xff]
        %v1339 = vld [vmem:[#allocation2 + $0xf9] sm:$0xff]
        %v1340 = vld [vmem:[#allocation2 + $0x109] sm:$0xff]
        %v1341 = vld [vmem:[#allocation2 + $0x111] sm:$0xff]
        %v1342 = vld [vmem:[#allocation2 + $0x121] sm:$0xff]
        %v1343 = vld [vmem:[#allocation2 + $0x129] sm:$0xff]
        %v1344 = vld [vmem:[#allocation2 + $0x139] sm:$0xff]
        %v1345 = vld [vmem:[#allocation2 + $0x141] sm:$0xff]
        %v1346 = vld [vmem:[#allocation2 + $0x151] sm:$0xff]
        %v1347 = vld [vmem:[#allocation2 + $0x159] sm:$0xff]
        %v1348 = vld [vmem:[#allocation2 + $0x169] sm:$0xff]
        %v1349 = vld [vmem:[#allocation2 + $0x171] sm:$0xff]
        %v1350 = vld [vmem:[#allocation2 + $0x181] sm:$0xff]
        %v1351 = vld [vmem:[#allocation2 + $0x189] sm:$0xff]
        %v1352 = vld [vmem:[#allocation2 + $0x199] sm:$0xff]
        %v1353 = vld [vmem:[#allocation2 + $0x1a1] sm:$0xff]
        %s1354 = scalar_lea.vmem %s3, 4
        %v1355 = vld [vmem:[%s1354] sm:$0x7]
        %v1357 = vsel %vm513, %v1318, 0
        %v1360 = vsel %vm513, %v1319, 0
        %v1363 = vsel %vm513, %v1320, 0
        %v1366 = vsel %vm513, %v1321, 0
        %v1369 = vsel %vm513, %v1322, 0
        %v1372 = vsel %vm513, %v1323, 0
        %v1375 = vsel %vm513, %v1324, 0
        %v1378 = vsel %vm513, %v1325, 0
        %v1381 = vsel %vm513, %v1326, 0
        %v1384 = vsel %vm513, %v1327, 0
        %v1387 = vsel %vm513, %v1328, 0
        %v1390 = vsel %vm513, %v1329, 0
        %v1393 = vsel %vm513, %v1330, 0
        %v1396 = vsel %vm513, %v1331, 0
        %v1399 = vsel %vm513, %v1332, 0
        %v1402 = vsel %vm513, %v1333, 0
        %v1405 = vsel %vm513, %v1334, 0
        %v1408 = vsel %vm513, %v1335, 0
        %v1411 = vsel %vm513, %v1336, 0
        %v1414 = vsel %vm513, %v1337, 0
        %v1417 = vsel %vm513, %v1338, 0
        %v1420 = vsel %vm513, %v1339, 0
        %v1423 = vsel %vm513, %v1340, 0
        %v1426 = vsel %vm513, %v1341, 0
        %v1429 = vsel %vm513, %v1342, 0
        %v1432 = vsel %vm513, %v1343, 0
        %v1435 = vsel %vm513, %v1344, 0
        %v1438 = vsel %vm513, %v1345, 0
        %v1441 = vsel %vm513, %v1346, 0
        %v1444 = vsel %vm513, %v1347, 0
        %v1447 = vsel %vm513, %v1348, 0
        %v1450 = vsel %vm513, %v1349, 0
        %v1453 = vsel %vm513, %v1350, 0
        %v1456 = vsel %vm513, %v1351, 0
        %v1459 = vsel %vm513, %v1352, 0
        %v1462 = vsel %vm513, %v1353, 0
        %v1465 = vsel %vm747, %v1355, 0
        %1467 = vmatprep.subr.mxu0 0.0
        %1468 = vmatpush1.msra.mxu0 %v1465
        %1469 = vmatprep.subr.mxu0 0.0
        %1470 = vmatpush1.msra.mxu0 0.0
        %1471 = vmatprep.subr.mxu0 0.0
        %1472 = vmatpush1.msra.mxu0 0.0
        %1473 = vmatprep.subr.mxu0 0.0
        %1474 = vmatpush1.msra.mxu0 0.0
        %1475 = vmatprep.subr.mxu0 0.0
        %1476 = vmatpush1.msra.mxu0 0.0
        %1477 = vmatprep.subr.mxu0 0.0
        %1478 = vmatpush1.msra.mxu0 0.0
        %1479 = vmatprep.subr.mxu0 0.0
        %1480 = vmatpush1.msra.mxu0 0.0
        %1481 = vmatprep.subr.mxu0 0.0
        %1482 = vmatpush1.msra.mxu0 0.0
        %1483 = vmatprep.subr.mxu0 0.0
        %1484 = vmatpush1.msra.mxu0 0.0
        %1485 = vmatprep.subr.mxu0 0.0
        %1486 = vmatpush1.msra.mxu0 0.0
        %1487 = vmatprep.subr.mxu0 0.0
        %1488 = vmatpush1.msra.mxu0 0.0
        %1489 = vmatprep.subr.mxu0 0.0
        %1490 = vmatpush1.msra.mxu0 0.0
        %1491 = vmatprep.subr.mxu0 0.0
        %1492 = vmatpush1.msra.mxu0 0.0
        %1493 = vmatprep.subr.mxu0 0.0
        %1494 = vmatpush1.msra.mxu0 0.0
        %1495 = vmatprep.subr.mxu0 0.0
        %1496 = vmatpush1.msra.mxu0 0.0
        %1497 = vmatprep.subr.mxu0 0.0
        %1498 = vmatpush1.msra.mxu0 0.0
        %1499 = vmatprep.subr.mxu0 0.0
        %1500 = vmatpush1.msra.mxu0 0.0
        %1501 = vmatprep.subr.mxu0 0.0
        %1502 = vmatpush1.msra.mxu0 0.0
        %1503 = vmatprep.subr.mxu0 0.0
        %1504 = vmatpush1.msra.mxu0 0.0
        %1505 = vmatprep.subr.mxu0 0.0
        %1506 = vmatpush1.msra.mxu0 0.0
        %1507 = vmatprep.subr.mxu0 0.0
        %1508 = vmatpush1.msra.mxu0 0.0
        %1509 = vmatprep.subr.mxu0 0.0
        %1510 = vmatpush1.msra.mxu0 0.0
        %1511 = vmatprep.subr.mxu0 0.0
        %1512 = vmatpush1.msra.mxu0 0.0
        %1513 = vmatprep.subr.mxu0 0.0
        %1514 = vmatpush1.msra.mxu0 0.0
        %1515 = vmatprep.subr.mxu0 0.0
        %1516 = vmatpush1.msra.mxu0 0.0
        %1517 = vmatprep.subr.mxu0 0.0
        %1518 = vmatpush1.msra.mxu0 0.0
        %1519 = vmatprep.subr.mxu0 0.0
        %1520 = vmatpush1.msra.mxu0 0.0
        %1521 = vmatprep.subr.mxu0 0.0
        %1522 = vmatpush1.msra.mxu0 0.0
        %1523 = vmatprep.subr.mxu0 0.0
        %1524 = vmatpush1.msra.mxu0 0.0
        %1525 = vmatprep.subr.mxu0 0.0
        %1526 = vmatpush1.msra.mxu0 0.0
        %1527 = vmatprep.subr.mxu0 0.0
        %1528 = vmatpush1.msra.mxu0 0.0
        %1529 = vmatprep.subr.mxu0 0.0
        %1530 = vmatpush1.msra.mxu0 0.0
        %1531 = vmatprep.mubr.f32.mxu0 0.0
        %1532 = vmatmul.mubr.f32.gmra.mrb[0].mxu0 %v1357
        %v1533 = vpop.f32.mrb[0].mxu0
        %v1534 = vadd.f32 0.0, %v1533
        %v1535 = vpop.f32.mrb[0].mxu0
        %1536 = vmatprep.mubr.f32.mxu0 0.0
        %1537 = vmatmul.mubr.f32.gmra.mrb[0].mxu0 %v1360
        %v1538 = vpop.f32.mrb[0].mxu0
        %v1539 = vadd.f32 0.0, %v1538
        %v1540 = vpop.f32.mrb[0].mxu0
        %1541 = vmatprep.mubr.f32.mxu0 0.0
        %1542 = vmatmul.mubr.f32.gmra.mrb[0].mxu0 %v1363
        %v1543 = vpop.f32.mrb[0].mxu0
        %v1544 = vadd.f32 0.0, %v1543
        %v1545 = vpop.f32.mrb[0].mxu0
        %1546 = vmatprep.mubr.f32.mxu0 0.0
        %1547 = vmatmul.mubr.f32.gmra.mrb[0].mxu0 %v1366
        %v1548 = vpop.f32.mrb[0].mxu0
        %v1549 = vadd.f32 0.0, %v1548
        %v1550 = vpop.f32.mrb[0].mxu0
        %1551 = vmatprep.mubr.f32.mxu0 0.0
        %1552 = vmatmul.mubr.f32.gmra.mrb[0].mxu0 %v1369
        %v1553 = vpop.f32.mrb[0].mxu0
        %v1554 = vadd.f32 0.0, %v1553
        %v1555 = vpop.f32.mrb[0].mxu0
        %1556 = vmatprep.mubr.f32.mxu0 0.0
        %1557 = vmatmul.mubr.f32.gmra.mrb[0].mxu0 %v1372
        %v1558 = vpop.f32.mrb[0].mxu0
        %v1559 = vadd.f32 0.0, %v1558
        %v1560 = vpop.f32.mrb[0].mxu0
        %1561 = vmatprep.mubr.f32.mxu0 0.0
        %1562 = vmatmul.mubr.f32.gmra.mrb[0].mxu0 %v1375
        %v1563 = vpop.f32.mrb[0].mxu0
        %v1564 = vadd.f32 0.0, %v1563
        %v1565 = vpop.f32.mrb[0].mxu0
        %1566 = vmatprep.mubr.f32.mxu0 0.0
        %1567 = vmatmul.mubr.f32.gmra.mrb[0].mxu0 %v1378
        %v1568 = vpop.f32.mrb[0].mxu0
        %v1569 = vadd.f32 0.0, %v1568
        %v1570 = vpop.f32.mrb[0].mxu0
        %1571 = vmatprep.mubr.f32.mxu0 0.0
        %1572 = vmatmul.mubr.f32.gmra.mrb[0].mxu0 %v1381
        %v1573 = vpop.f32.mrb[0].mxu0
        %v1574 = vadd.f32 0.0, %v1573
        %v1575 = vpop.f32.mrb[0].mxu0
        %1576 = vmatprep.mubr.f32.mxu0 0.0
        %1577 = vmatmul.mubr.f32.gmra.mrb[0].mxu0 %v1384
        %v1578 = vpop.f32.mrb[0].mxu0
        %v1579 = vadd.f32 0.0, %v1578
        %v1580 = vpop.f32.mrb[0].mxu0
        %1581 = vmatprep.mubr.f32.mxu0 0.0
        %1582 = vmatmul.mubr.f32.gmra.mrb[0].mxu0 %v1387
        %v1583 = vpop.f32.mrb[0].mxu0
        %v1584 = vadd.f32 0.0, %v1583
        %v1585 = vpop.f32.mrb[0].mxu0
        %1586 = vmatprep.mubr.f32.mxu0 0.0
        %1587 = vmatmul.mubr.f32.gmra.mrb[0].mxu0 %v1390
        %v1588 = vpop.f32.mrb[0].mxu0
        %v1589 = vadd.f32 0.0, %v1588
        %v1590 = vpop.f32.mrb[0].mxu0
        %1591 = vmatprep.mubr.f32.mxu0 0.0
        %1592 = vmatmul.mubr.f32.gmra.mrb[0].mxu0 %v1393
        %v1593 = vpop.f32.mrb[0].mxu0
        %v1594 = vadd.f32 0.0, %v1593
        %v1595 = vpop.f32.mrb[0].mxu0
        %1596 = vmatprep.mubr.f32.mxu0 0.0
        %1597 = vmatmul.mubr.f32.gmra.mrb[0].mxu0 %v1396
        %v1598 = vpop.f32.mrb[0].mxu0
        %v1599 = vadd.f32 0.0, %v1598
        %v1600 = vpop.f32.mrb[0].mxu0
        %1601 = vmatprep.mubr.f32.mxu0 0.0
        %1602 = vmatmul.mubr.f32.gmra.mrb[0].mxu0 %v1399
        %v1603 = vpop.f32.mrb[0].mxu0
        %v1604 = vadd.f32 0.0, %v1603
        %v1605 = vpop.f32.mrb[0].mxu0
        %1606 = vmatprep.mubr.f32.mxu0 0.0
        %1607 = vmatmul.mubr.f32.gmra.mrb[0].mxu0 %v1402
        %v1608 = vpop.f32.mrb[0].mxu0
        %v1609 = vadd.f32 0.0, %v1608
        %v1610 = vpop.f32.mrb[0].mxu0
        %1611 = vmatprep.mubr.f32.mxu0 0.0
        %1612 = vmatmul.mubr.f32.gmra.mrb[0].mxu0 %v1405
        %v1613 = vpop.f32.mrb[0].mxu0
        %v1614 = vadd.f32 0.0, %v1613
        %v1615 = vpop.f32.mrb[0].mxu0
        %1616 = vmatprep.mubr.f32.mxu0 0.0
        %1617 = vmatmul.mubr.f32.gmra.mrb[0].mxu0 %v1408
        %v1618 = vpop.f32.mrb[0].mxu0
        %v1619 = vadd.f32 0.0, %v1618
        %v1620 = vpop.f32.mrb[0].mxu0
        %1621 = vmatprep.mubr.f32.mxu0 0.0
        %1622 = vmatmul.mubr.f32.gmra.mrb[0].mxu0 %v1411
        %v1623 = vpop.f32.mrb[0].mxu0
        %v1624 = vadd.f32 0.0, %v1623
        %v1625 = vpop.f32.mrb[0].mxu0
        %1626 = vmatprep.mubr.f32.mxu0 0.0
        %1627 = vmatmul.mubr.f32.gmra.mrb[0].mxu0 %v1414
        %v1628 = vpop.f32.mrb[0].mxu0
        %v1629 = vadd.f32 0.0, %v1628
        %v1630 = vpop.f32.mrb[0].mxu0
        %1631 = vmatprep.mubr.f32.mxu0 0.0
        %1632 = vmatmul.mubr.f32.gmra.mrb[0].mxu0 %v1417
        %v1633 = vpop.f32.mrb[0].mxu0
        %v1634 = vadd.f32 0.0, %v1633
        %v1635 = vpop.f32.mrb[0].mxu0
        %1636 = vmatprep.mubr.f32.mxu0 0.0
        %1637 = vmatmul.mubr.f32.gmra.mrb[0].mxu0 %v1420
        %v1638 = vpop.f32.mrb[0].mxu0
        %v1639 = vadd.f32 0.0, %v1638
        %v1640 = vpop.f32.mrb[0].mxu0
        %1641 = vmatprep.mubr.f32.mxu0 0.0
        %1642 = vmatmul.mubr.f32.gmra.mrb[0].mxu0 %v1423
        %v1643 = vpop.f32.mrb[0].mxu0
        %v1644 = vadd.f32 0.0, %v1643
        %v1645 = vpop.f32.mrb[0].mxu0
        %1646 = vmatprep.mubr.f32.mxu0 0.0
        %1647 = vmatmul.mubr.f32.gmra.mrb[0].mxu0 %v1426
        %v1648 = vpop.f32.mrb[0].mxu0
        %v1649 = vadd.f32 0.0, %v1648
        %v1650 = vpop.f32.mrb[0].mxu0
        %1651 = vmatprep.mubr.f32.mxu0 0.0
        %1652 = vmatmul.mubr.f32.gmra.mrb[0].mxu0 %v1429
        %v1653 = vpop.f32.mrb[0].mxu0
        %v1654 = vadd.f32 0.0, %v1653
        %v1655 = vpop.f32.mrb[0].mxu0
        %1656 = vmatprep.mubr.f32.mxu0 0.0
        %1657 = vmatmul.mubr.f32.gmra.mrb[0].mxu0 %v1432
        %v1658 = vpop.f32.mrb[0].mxu0
        %v1659 = vadd.f32 0.0, %v1658
        %v1660 = vpop.f32.mrb[0].mxu0
        %1661 = vmatprep.mubr.f32.mxu0 0.0
        %1662 = vmatmul.mubr.f32.gmra.mrb[0].mxu0 %v1435
        %v1663 = vpop.f32.mrb[0].mxu0
        %v1664 = vadd.f32 0.0, %v1663
        %v1665 = vpop.f32.mrb[0].mxu0
        %1666 = vmatprep.mubr.f32.mxu0 0.0
        %1667 = vmatmul.mubr.f32.gmra.mrb[0].mxu0 %v1438
        %v1668 = vpop.f32.mrb[0].mxu0
        %v1669 = vadd.f32 0.0, %v1668
        %v1670 = vpop.f32.mrb[0].mxu0
        %1671 = vmatprep.mubr.f32.mxu0 0.0
        %1672 = vmatmul.mubr.f32.gmra.mrb[0].mxu0 %v1441
        %v1673 = vpop.f32.mrb[0].mxu0
        %v1674 = vadd.f32 0.0, %v1673
        %v1675 = vpop.f32.mrb[0].mxu0
        %1676 = vmatprep.mubr.f32.mxu0 0.0
        %1677 = vmatmul.mubr.f32.gmra.mrb[0].mxu0 %v1444
        %v1678 = vpop.f32.mrb[0].mxu0
        %v1679 = vadd.f32 0.0, %v1678
        %v1680 = vpop.f32.mrb[0].mxu0
        %1681 = vmatprep.mubr.f32.mxu0 0.0
        %1682 = vmatmul.mubr.f32.gmra.mrb[0].mxu0 %v1447
        %v1683 = vpop.f32.mrb[0].mxu0
        %v1684 = vadd.f32 0.0, %v1683
        %v1685 = vpop.f32.mrb[0].mxu0
        %1686 = vmatprep.mubr.f32.mxu0 0.0
        %1687 = vmatmul.mubr.f32.gmra.mrb[0].mxu0 %v1450
        %v1688 = vpop.f32.mrb[0].mxu0
        %v1689 = vadd.f32 0.0, %v1688
        %v1690 = vpop.f32.mrb[0].mxu0
        %1691 = vmatprep.mubr.f32.mxu0 0.0
        %1692 = vmatmul.mubr.f32.gmra.mrb[0].mxu0 %v1453
        %v1693 = vpop.f32.mrb[0].mxu0
        %v1694 = vadd.f32 0.0, %v1693
        %v1695 = vpop.f32.mrb[0].mxu0
        %1696 = vmatprep.mubr.f32.mxu0 0.0
        %1697 = vmatmul.mubr.f32.gmra.mrb[0].mxu0 %v1456
        %v1698 = vpop.f32.mrb[0].mxu0
        %v1699 = vadd.f32 0.0, %v1698
        %v1700 = vpop.f32.mrb[0].mxu0
        %1701 = vmatprep.mubr.f32.mxu0 0.0
        %1702 = vmatmul.mubr.f32.gmra.mrb[0].mxu0 %v1459
        %v1703 = vpop.f32.mrb[0].mxu0
        %v1704 = vadd.f32 0.0, %v1703
        %v1705 = vpop.f32.mrb[0].mxu0
        %1706 = vmatprep.mubr.f32.mxu0 0.0
        %1707 = vmatmul.mubr.f32.gmra.mrb[0].mxu0 %v1462
        %v1708 = vpop.f32.mrb[0].mxu0
        %v1709 = vadd.f32 0.0, %v1708
        %v1710 = vpop.f32.mrb[0].mxu0
        %1711 = vdwg.mxu0
        %v1712 = vadd.f32 %v1286, %v1534
        %v1713 = vadd.f32 %v1287, %v1539
        %v1714 = vadd.f32 %v1288, %v1544
        %v1715 = vadd.f32 %v1289, %v1549
        %v1716 = vadd.f32 %v1290, %v1554
        %v1717 = vadd.f32 %v1291, %v1559
        %v1718 = vadd.f32 %v1292, %v1564
        %v1719 = vadd.f32 %v1293, %v1569
        %v1720 = vadd.f32 %v1294, %v1574
        %v1721 = vadd.f32 %v1295, %v1579
        %v1722 = vadd.f32 %v1296, %v1584
        %v1723 = vadd.f32 %v1297, %v1589
        %v1724 = vadd.f32 %v1298, %v1594
        %v1725 = vadd.f32 %v1299, %v1599
        %v1726 = vadd.f32 %v1300, %v1604
        %v1727 = vadd.f32 %v1301, %v1609
        %v1728 = vadd.f32 %v1302, %v1614
        %v1729 = vadd.f32 %v1303, %v1619
        %v1730 = vadd.f32 %v1304, %v1624
        %v1731 = vadd.f32 %v1305, %v1629
        %v1732 = vadd.f32 %v1306, %v1634
        %v1733 = vadd.f32 %v1307, %v1639
        %v1734 = vadd.f32 %v1308, %v1644
        %v1735 = vadd.f32 %v1309, %v1649
        %v1736 = vadd.f32 %v1310, %v1654
        %v1737 = vadd.f32 %v1311, %v1659
        %v1738 = vadd.f32 %v1312, %v1664
        %v1739 = vadd.f32 %v1313, %v1669
        %v1740 = vadd.f32 %v1314, %v1674
        %v1741 = vadd.f32 %v1315, %v1679
        %v1742 = vadd.f32 %v1316, %v1684
        %v1743 = vadd.f32 %v1317, %v1689
        %1776 = vrot.lane.b32.xlu0 %v1544, 120
        %v1777 = vpop.permute.xlu0 %1776
        %1778 = vrot.lane.b32.xlu0 %v1549, 120
        %v1779 = vpop.permute.xlu0 %1778
        %1780 = vrot.lane.b32.xlu0 %v1554, 120
        %v1781 = vpop.permute.xlu0 %1780
        %1782 = vrot.lane.b32.xlu0 %v1559, 120
        %v1783 = vpop.permute.xlu0 %1782
        %1784 = vrot.lane.b32.xlu0 %v1564, 120
        %v1785 = vpop.permute.xlu0 %1784
        %1786 = vrot.lane.b32.xlu0 %v1569, 120
        %v1787 = vpop.permute.xlu0 %1786
        %1788 = vrot.lane.b32.xlu0 %v1574, 120
        %v1789 = vpop.permute.xlu0 %1788
        %1790 = vrot.lane.b32.xlu0 %v1579, 120
        %v1791 = vpop.permute.xlu0 %1790
        %1792 = vrot.lane.b32.xlu0 %v1584, 120
        %v1793 = vpop.permute.xlu0 %1792
        %1794 = vrot.lane.b32.xlu0 %v1589, 120
        %v1795 = vpop.permute.xlu0 %1794
        %1796 = vrot.lane.b32.xlu0 %v1594, 120
        %v1797 = vpop.permute.xlu0 %1796
        %1798 = vrot.lane.b32.xlu0 %v1599, 120
        %v1799 = vpop.permute.xlu0 %1798
        %1800 = vrot.lane.b32.xlu0 %v1604, 120
        %v1801 = vpop.permute.xlu0 %1800
        %1802 = vrot.lane.b32.xlu0 %v1609, 120
        %v1803 = vpop.permute.xlu0 %1802
        %1804 = vrot.lane.b32.xlu0 %v1614, 120
        %v1805 = vpop.permute.xlu0 %1804
        %1806 = vrot.lane.b32.xlu0 %v1619, 120
        %v1807 = vpop.permute.xlu0 %1806
        %1808 = vrot.lane.b32.xlu0 %v1624, 120
        %v1809 = vpop.permute.xlu0 %1808
        %1810 = vrot.lane.b32.xlu0 %v1629, 120
        %v1811 = vpop.permute.xlu0 %1810
        %1812 = vrot.lane.b32.xlu0 %v1634, 120
        %v1813 = vpop.permute.xlu0 %1812
        %1814 = vrot.lane.b32.xlu0 %v1639, 120
        %v1815 = vpop.permute.xlu0 %1814
        %1816 = vrot.lane.b32.xlu0 %v1644, 120
        %v1817 = vpop.permute.xlu0 %1816
        %1818 = vrot.lane.b32.xlu0 %v1649, 120
        %v1819 = vpop.permute.xlu0 %1818
        %1820 = vrot.lane.b32.xlu0 %v1654, 120
        %v1821 = vpop.permute.xlu0 %1820
        %1822 = vrot.lane.b32.xlu0 %v1659, 120
        %v1823 = vpop.permute.xlu0 %1822
        %1824 = vrot.lane.b32.xlu0 %v1664, 120
        %v1825 = vpop.permute.xlu0 %1824
        %1826 = vrot.lane.b32.xlu0 %v1669, 120
        %v1827 = vpop.permute.xlu0 %1826
        %1828 = vrot.lane.b32.xlu0 %v1674, 120
        %v1829 = vpop.permute.xlu0 %1828
        %1830 = vrot.lane.b32.xlu0 %v1679, 120
        %v1831 = vpop.permute.xlu0 %1830
        %1832 = vrot.lane.b32.xlu0 %v1684, 120
        %v1833 = vpop.permute.xlu0 %1832
        %1834 = vrot.lane.b32.xlu0 %v1689, 120
        %v1835 = vpop.permute.xlu0 %1834
        %1836 = vrot.lane.b32.xlu0 %v1694, 120
        %v1837 = vpop.permute.xlu0 %1836
        %1838 = vrot.lane.b32.xlu0 %v1699, 120
        %v1839 = vpop.permute.xlu0 %1838
        %v1872 = vadd.f32 %v1712, %v1777
        %v1873 = vadd.f32 %v1713, %v1779
        %v1874 = vadd.f32 %v1714, %v1781
        %v1875 = vadd.f32 %v1715, %v1783
        %v1876 = vadd.f32 %v1716, %v1785
        %v1877 = vadd.f32 %v1717, %v1787
        %v1878 = vadd.f32 %v1718, %v1789
        %v1879 = vadd.f32 %v1719, %v1791
        %v1880 = vadd.f32 %v1720, %v1793
        %v1881 = vadd.f32 %v1721, %v1795
        %v1882 = vadd.f32 %v1722, %v1797
        %v1883 = vadd.f32 %v1723, %v1799
        %v1884 = vadd.f32 %v1724, %v1801
        %v1885 = vadd.f32 %v1725, %v1803
        %v1886 = vadd.f32 %v1726, %v1805
        %v1887 = vadd.f32 %v1727, %v1807
        %v1888 = vadd.f32 %v1728, %v1809
        %v1889 = vadd.f32 %v1729, %v1811
        %v1890 = vadd.f32 %v1730, %v1813
        %v1891 = vadd.f32 %v1731, %v1815
        %v1892 = vadd.f32 %v1732, %v1817
        %v1893 = vadd.f32 %v1733, %v1819
        %v1894 = vadd.f32 %v1734, %v1821
        %v1895 = vadd.f32 %v1735, %v1823
        %v1896 = vadd.f32 %v1736, %v1825
        %v1897 = vadd.f32 %v1737, %v1827
        %v1898 = vadd.f32 %v1738, %v1829
        %v1899 = vadd.f32 %v1739, %v1831
        %v1900 = vadd.f32 %v1740, %v1833
        %v1901 = vadd.f32 %v1741, %v1835
        %v1902 = vadd.f32 %v1742, %v1837
        %v1903 = vadd.f32 %v1743, %v1839
        %1906 = vrot.lane.b32.xlu0 %v1554, 112
        %v1907 = vpop.permute.xlu0 %1906
        %1908 = vrot.lane.b32.xlu0 %v1559, 112
        %v1909 = vpop.permute.xlu0 %1908
        %1910 = vrot.lane.b32.xlu0 %v1564, 112
        %v1911 = vpop.permute.xlu0 %1910
        %1912 = vrot.lane.b32.xlu0 %v1569, 112
        %v1913 = vpop.permute.xlu0 %1912
        %1914 = vrot.lane.b32.xlu0 %v1574, 112
        %v1915 = vpop.permute.xlu0 %1914
        %1916 = vrot.lane.b32.xlu0 %v1579, 112
        %v1917 = vpop.permute.xlu0 %1916
        %1918 = vrot.lane.b32.xlu0 %v1584, 112
        %v1919 = vpop.permute.xlu0 %1918
        %1920 = vrot.lane.b32.xlu0 %v1589, 112
        %v1921 = vpop.permute.xlu0 %1920
        %1922 = vrot.lane.b32.xlu0 %v1594, 112
        %v1923 = vpop.permute.xlu0 %1922
        %1924 = vrot.lane.b32.xlu0 %v1599, 112
        %v1925 = vpop.permute.xlu0 %1924
        %1926 = vrot.lane.b32.xlu0 %v1604, 112
        %v1927 = vpop.permute.xlu0 %1926
        %1928 = vrot.lane.b32.xlu0 %v1609, 112
        %v1929 = vpop.permute.xlu0 %1928
        %1930 = vrot.lane.b32.xlu0 %v1614, 112
        %v1931 = vpop.permute.xlu0 %1930
        %1932 = vrot.lane.b32.xlu0 %v1619, 112
        %v1933 = vpop.permute.xlu0 %1932
        %1934 = vrot.lane.b32.xlu0 %v1624, 112
        %v1935 = vpop.permute.xlu0 %1934
        %1936 = vrot.lane.b32.xlu0 %v1629, 112
        %v1937 = vpop.permute.xlu0 %1936
        %1938 = vrot.lane.b32.xlu0 %v1634, 112
        %v1939 = vpop.permute.xlu0 %1938
        %1940 = vrot.lane.b32.xlu0 %v1639, 112
        %v1941 = vpop.permute.xlu0 %1940
        %1942 = vrot.lane.b32.xlu0 %v1644, 112
        %v1943 = vpop.permute.xlu0 %1942
        %1944 = vrot.lane.b32.xlu0 %v1649, 112
        %v1945 = vpop.permute.xlu0 %1944
        %1946 = vrot.lane.b32.xlu0 %v1654, 112
        %v1947 = vpop.permute.xlu0 %1946
        %1948 = vrot.lane.b32.xlu0 %v1659, 112
        %v1949 = vpop.permute.xlu0 %1948
        %1950 = vrot.lane.b32.xlu0 %v1664, 112
        %v1951 = vpop.permute.xlu0 %1950
        %1952 = vrot.lane.b32.xlu0 %v1669, 112
        %v1953 = vpop.permute.xlu0 %1952
        %1954 = vrot.lane.b32.xlu0 %v1674, 112
        %v1955 = vpop.permute.xlu0 %1954
        %1956 = vrot.lane.b32.xlu0 %v1679, 112
        %v1957 = vpop.permute.xlu0 %1956
        %1958 = vrot.lane.b32.xlu0 %v1684, 112
        %v1959 = vpop.permute.xlu0 %1958
        %1960 = vrot.lane.b32.xlu0 %v1689, 112
        %v1961 = vpop.permute.xlu0 %1960
        %1962 = vrot.lane.b32.xlu0 %v1694, 112
        %v1963 = vpop.permute.xlu0 %1962
        %1964 = vrot.lane.b32.xlu0 %v1699, 112
        %v1965 = vpop.permute.xlu0 %1964
        %1966 = vrot.lane.b32.xlu0 %v1704, 112
        %v1967 = vpop.permute.xlu0 %1966
        %1968 = vrot.lane.b32.xlu0 %v1709, 112
        %v1969 = vpop.permute.xlu0 %1968
        %v2002 = vadd.f32 %v1872, %v1907
        %v2003 = vadd.f32 %v1873, %v1909
        %v2004 = vadd.f32 %v1874, %v1911
        %v2005 = vadd.f32 %v1875, %v1913
        %v2006 = vadd.f32 %v1876, %v1915
        %v2007 = vadd.f32 %v1877, %v1917
        %v2008 = vadd.f32 %v1878, %v1919
        %v2009 = vadd.f32 %v1879, %v1921
        %v2010 = vadd.f32 %v1880, %v1923
        %v2011 = vadd.f32 %v1881, %v1925
        %v2012 = vadd.f32 %v1882, %v1927
        %v2013 = vadd.f32 %v1883, %v1929
        %v2014 = vadd.f32 %v1884, %v1931
        %v2015 = vadd.f32 %v1885, %v1933
        %v2016 = vadd.f32 %v1886, %v1935
        %v2017 = vadd.f32 %v1887, %v1937
        %v2018 = vadd.f32 %v1888, %v1939
        %v2019 = vadd.f32 %v1889, %v1941
        %v2020 = vadd.f32 %v1890, %v1943
        %v2021 = vadd.f32 %v1891, %v1945
        %v2022 = vadd.f32 %v1892, %v1947
        %v2023 = vadd.f32 %v1893, %v1949
        %v2024 = vadd.f32 %v1894, %v1951
        %v2025 = vadd.f32 %v1895, %v1953
        %v2026 = vadd.f32 %v1896, %v1955
        %v2027 = vadd.f32 %v1897, %v1957
        %v2028 = vadd.f32 %v1898, %v1959
        %v2029 = vadd.f32 %v1899, %v1961
        %v2030 = vadd.f32 %v1900, %v1963
        %v2031 = vadd.f32 %v1901, %v1965
        %v2032 = vadd.f32 %v1902, %v1967
        %v2033 = vadd.f32 %v1903, %v1969
        %v2034 = vld [vmem:[#allocation2 + $0x2] sm:$0xff]
        %v2035 = vld [vmem:[#allocation2 + $0xa] sm:$0xff]
        %v2036 = vld [vmem:[#allocation2 + $0x1a] sm:$0xff]
        %v2037 = vld [vmem:[#allocation2 + $0x22] sm:$0xff]
        %v2038 = vld [vmem:[#allocation2 + $0x32] sm:$0xff]
        %v2039 = vld [vmem:[#allocation2 + $0x3a] sm:$0xff]
        %v2040 = vld [vmem:[#allocation2 + $0x4a] sm:$0xff]
        %v2041 = vld [vmem:[#allocation2 + $0x52] sm:$0xff]
        %v2042 = vld [vmem:[#allocation2 + $0x62] sm:$0xff]
        %v2043 = vld [vmem:[#allocation2 + $0x6a] sm:$0xff]
        %v2044 = vld [vmem:[#allocation2 + $0x7a] sm:$0xff]
        %v2045 = vld [vmem:[#allocation2 + $0x82] sm:$0xff]
        %v2046 = vld [vmem:[#allocation2 + $0x92] sm:$0xff]
        %v2047 = vld [vmem:[#allocation2 + $0x9a] sm:$0xff]
        %v2048 = vld [vmem:[#allocation2 + $0xaa] sm:$0xff]
        %v2049 = vld [vmem:[#allocation2 + $0xb2] sm:$0xff]
        %v2050 = vld [vmem:[#allocation2 + $0xc2] sm:$0xff]
        %v2051 = vld [vmem:[#allocation2 + $0xca] sm:$0xff]
        %v2052 = vld [vmem:[#allocation2 + $0xda] sm:$0xff]
        %v2053 = vld [vmem:[#allocation2 + $0xe2] sm:$0xff]
        %v2054 = vld [vmem:[#allocation2 + $0xf2] sm:$0xff]
        %v2055 = vld [vmem:[#allocation2 + $0xfa] sm:$0xff]
        %v2056 = vld [vmem:[#allocation2 + $0x10a] sm:$0xff]
        %v2057 = vld [vmem:[#allocation2 + $0x112] sm:$0xff]
        %v2058 = vld [vmem:[#allocation2 + $0x122] sm:$0xff]
        %v2059 = vld [vmem:[#allocation2 + $0x12a] sm:$0xff]
        %v2060 = vld [vmem:[#allocation2 + $0x13a] sm:$0xff]
        %v2061 = vld [vmem:[#allocation2 + $0x142] sm:$0xff]
        %v2062 = vld [vmem:[#allocation2 + $0x152] sm:$0xff]
        %v2063 = vld [vmem:[#allocation2 + $0x15a] sm:$0xff]
        %v2064 = vld [vmem:[#allocation2 + $0x16a] sm:$0xff]
        %v2065 = vld [vmem:[#allocation2 + $0x172] sm:$0xff]
        %v2066 = vld [vmem:[#allocation2 + $0x182] sm:$0xff]
        %v2067 = vld [vmem:[#allocation2 + $0x18a] sm:$0xff]
        %v2068 = vld [vmem:[#allocation2 + $0x19a] sm:$0xff]
        %v2069 = vld [vmem:[#allocation2 + $0x1a2] sm:$0xff]
        %s2070 = scalar_lea.vmem %s3, 8
        %v2071 = vld [vmem:[%s2070] sm:$0x7]
        %v2073 = vsel %vm513, %v2034, 0
        %v2076 = vsel %vm513, %v2035, 0
        %v2079 = vsel %vm513, %v2036, 0
        %v2082 = vsel %vm513, %v2037, 0
        %v2085 = vsel %vm513, %v2038, 0
        %v2088 = vsel %vm513, %v2039, 0
        %v2091 = vsel %vm513, %v2040, 0
        %v2094 = vsel %vm513, %v2041, 0
        %v2097 = vsel %vm513, %v2042, 0
        %v2100 = vsel %vm513, %v2043, 0
        %v2103 = vsel %vm513, %v2044, 0
        %v2106 = vsel %vm513, %v2045, 0
        %v2109 = vsel %vm513, %v2046, 0
        %v2112 = vsel %vm513, %v2047, 0
        %v2115 = vsel %vm513, %v2048, 0
        %v2118 = vsel %vm513, %v2049, 0
        %v2121 = vsel %vm513, %v2050, 0
        %v2124 = vsel %vm513, %v2051, 0
        %v2127 = vsel %vm513, %v2052, 0
        %v2130 = vsel %vm513, %v2053, 0
        %v2133 = vsel %vm513, %v2054, 0
        %v2136 = vsel %vm513, %v2055, 0
        %v2139 = vsel %vm513, %v2056, 0
        %v2142 = vsel %vm513, %v2057, 0
        %v2145 = vsel %vm513, %v2058, 0
        %v2148 = vsel %vm513, %v2059, 0
        %v2151 = vsel %vm513, %v2060, 0
        %v2154 = vsel %vm513, %v2061, 0
        %v2157 = vsel %vm513, %v2062, 0
        %v2160 = vsel %vm513, %v2063, 0
        %v2163 = vsel %vm513, %v2064, 0
        %v2166 = vsel %vm513, %v2065, 0
        %v2169 = vsel %vm513, %v2066, 0
        %v2172 = vsel %vm513, %v2067, 0
        %v2175 = vsel %vm513, %v2068, 0
        %v2178 = vsel %vm513, %v2069, 0
        %v2181 = vsel %vm747, %v2071, 0
        %2183 = vmatprep.subr.mxu0 0.0
        %2184 = vmatpush1.msra.mxu0 %v2181
        %2185 = vmatprep.subr.mxu0 0.0
        %2186 = vmatpush1.msra.mxu0 0.0
        %2187 = vmatprep.subr.mxu0 0.0
        %2188 = vmatpush1.msra.mxu0 0.0
        %2189 = vmatprep.subr.mxu0 0.0
        %2190 = vmatpush1.msra.mxu0 0.0
        %2191 = vmatprep.subr.mxu0 0.0
        %2192 = vmatpush1.msra.mxu0 0.0
        %2193 = vmatprep.subr.mxu0 0.0
        %2194 = vmatpush1.msra.mxu0 0.0
        %2195 = vmatprep.subr.mxu0 0.0
        %2196 = vmatpush1.msra.mxu0 0.0
        %2197 = vmatprep.subr.mxu0 0.0
        %2198 = vmatpush1.msra.mxu0 0.0
        %2199 = vmatprep.subr.mxu0 0.0
        %2200 = vmatpush1.msra.mxu0 0.0
        %2201 = vmatprep.subr.mxu0 0.0
        %2202 = vmatpush1.msra.mxu0 0.0
        %2203 = vmatprep.subr.mxu0 0.0
        %2204 = vmatpush1.msra.mxu0 0.0
        %2205 = vmatprep.subr.mxu0 0.0
        %2206 = vmatpush1.msra.mxu0 0.0
        %2207 = vmatprep.subr.mxu0 0.0
        %2208 = vmatpush1.msra.mxu0 0.0
        %2209 = vmatprep.subr.mxu0 0.0
        %2210 = vmatpush1.msra.mxu0 0.0
        %2211 = vmatprep.subr.mxu0 0.0
        %2212 = vmatpush1.msra.mxu0 0.0
        %2213 = vmatprep.subr.mxu0 0.0
        %2214 = vmatpush1.msra.mxu0 0.0
        %2215 = vmatprep.subr.mxu0 0.0
        %2216 = vmatpush1.msra.mxu0 0.0
        %2217 = vmatprep.subr.mxu0 0.0
        %2218 = vmatpush1.msra.mxu0 0.0
        %2219 = vmatprep.subr.mxu0 0.0
        %2220 = vmatpush1.msra.mxu0 0.0
        %2221 = vmatprep.subr.mxu0 0.0
        %2222 = vmatpush1.msra.mxu0 0.0
        %2223 = vmatprep.subr.mxu0 0.0
        %2224 = vmatpush1.msra.mxu0 0.0
        %2225 = vmatprep.subr.mxu0 0.0
        %2226 = vmatpush1.msra.mxu0 0.0
        %2227 = vmatprep.subr.mxu0 0.0
        %2228 = vmatpush1.msra.mxu0 0.0
        %2229 = vmatprep.subr.mxu0 0.0
        %2230 = vmatpush1.msra.mxu0 0.0
        %2231 = vmatprep.subr.mxu0 0.0
        %2232 = vmatpush1.msra.mxu0 0.0
        %2233 = vmatprep.subr.mxu0 0.0
        %2234 = vmatpush1.msra.mxu0 0.0
        %2235 = vmatprep.subr.mxu0 0.0
        %2236 = vmatpush1.msra.mxu0 0.0
        %2237 = vmatprep.subr.mxu0 0.0
        %2238 = vmatpush1.msra.mxu0 0.0
        %2239 = vmatprep.subr.mxu0 0.0
        %2240 = vmatpush1.msra.mxu0 0.0
        %2241 = vmatprep.subr.mxu0 0.0
        %2242 = vmatpush1.msra.mxu0 0.0
        %2243 = vmatprep.subr.mxu0 0.0
        %2244 = vmatpush1.msra.mxu0 0.0
        %2245 = vmatprep.subr.mxu0 0.0
        %2246 = vmatpush1.msra.mxu0 0.0
        %2247 = vmatprep.mubr.f32.mxu0 0.0
        %2248 = vmatmul.mubr.f32.gmra.mrb[0].mxu0 %v2073
        %v2249 = vpop.f32.mrb[0].mxu0
        %v2250 = vadd.f32 0.0, %v2249
        %v2251 = vpop.f32.mrb[0].mxu0
        %2252 = vmatprep.mubr.f32.mxu0 0.0
        %2253 = vmatmul.mubr.f32.gmra.mrb[0].mxu0 %v2076
        %v2254 = vpop.f32.mrb[0].mxu0
        %v2255 = vadd.f32 0.0, %v2254
        %v2256 = vpop.f32.mrb[0].mxu0
        %2257 = vmatprep.mubr.f32.mxu0 0.0
        %2258 = vmatmul.mubr.f32.gmra.mrb[0].mxu0 %v2079
        %v2259 = vpop.f32.mrb[0].mxu0
        %v2260 = vadd.f32 0.0, %v2259
        %v2261 = vpop.f32.mrb[0].mxu0
        %2262 = vmatprep.mubr.f32.mxu0 0.0
        %2263 = vmatmul.mubr.f32.gmra.mrb[0].mxu0 %v2082
        %v2264 = vpop.f32.mrb[0].mxu0
        %v2265 = vadd.f32 0.0, %v2264
        %v2266 = vpop.f32.mrb[0].mxu0
        %2267 = vmatprep.mubr.f32.mxu0 0.0
        %2268 = vmatmul.mubr.f32.gmra.mrb[0].mxu0 %v2085
        %v2269 = vpop.f32.mrb[0].mxu0
        %v2270 = vadd.f32 0.0, %v2269
        %v2271 = vpop.f32.mrb[0].mxu0
        %2272 = vmatprep.mubr.f32.mxu0 0.0
        %2273 = vmatmul.mubr.f32.gmra.mrb[0].mxu0 %v2088
        %v2274 = vpop.f32.mrb[0].mxu0
        %v2275 = vadd.f32 0.0, %v2274
        %v2276 = vpop.f32.mrb[0].mxu0
        %2277 = vmatprep.mubr.f32.mxu0 0.0
        %2278 = vmatmul.mubr.f32.gmra.mrb[0].mxu0 %v2091
        %v2279 = vpop.f32.mrb[0].mxu0
        %v2280 = vadd.f32 0.0, %v2279
        %v2281 = vpop.f32.mrb[0].mxu0
        %2282 = vmatprep.mubr.f32.mxu0 0.0
        %2283 = vmatmul.mubr.f32.gmra.mrb[0].mxu0 %v2094
        %v2284 = vpop.f32.mrb[0].mxu0
        %v2285 = vadd.f32 0.0, %v2284
        %v2286 = vpop.f32.mrb[0].mxu0
        %2287 = vmatprep.mubr.f32.mxu0 0.0
        %2288 = vmatmul.mubr.f32.gmra.mrb[0].mxu0 %v2097
        %v2289 = vpop.f32.mrb[0].mxu0
        %v2290 = vadd.f32 0.0, %v2289
        %v2291 = vpop.f32.mrb[0].mxu0
        %2292 = vmatprep.mubr.f32.mxu0 0.0
        %2293 = vmatmul.mubr.f32.gmra.mrb[0].mxu0 %v2100
        %v2294 = vpop.f32.mrb[0].mxu0
        %v2295 = vadd.f32 0.0, %v2294
        %v2296 = vpop.f32.mrb[0].mxu0
        %2297 = vmatprep.mubr.f32.mxu0 0.0
        %2298 = vmatmul.mubr.f32.gmra.mrb[0].mxu0 %v2103
        %v2299 = vpop.f32.mrb[0].mxu0
        %v2300 = vadd.f32 0.0, %v2299
        %v2301 = vpop.f32.mrb[0].mxu0
        %2302 = vmatprep.mubr.f32.mxu0 0.0
        %2303 = vmatmul.mubr.f32.gmra.mrb[0].mxu0 %v2106
        %v2304 = vpop.f32.mrb[0].mxu0
        %v2305 = vadd.f32 0.0, %v2304
        %v2306 = vpop.f32.mrb[0].mxu0
        %2307 = vmatprep.mubr.f32.mxu0 0.0
        %2308 = vmatmul.mubr.f32.gmra.mrb[0].mxu0 %v2109
        %v2309 = vpop.f32.mrb[0].mxu0
        %v2310 = vadd.f32 0.0, %v2309
        %v2311 = vpop.f32.mrb[0].mxu0
        %2312 = vmatprep.mubr.f32.mxu0 0.0
        %2313 = vmatmul.mubr.f32.gmra.mrb[0].mxu0 %v2112
        %v2314 = vpop.f32.mrb[0].mxu0
        %v2315 = vadd.f32 0.0, %v2314
        %v2316 = vpop.f32.mrb[0].mxu0
        %2317 = vmatprep.mubr.f32.mxu0 0.0
        %2318 = vmatmul.mubr.f32.gmra.mrb[0].mxu0 %v2115
        %v2319 = vpop.f32.mrb[0].mxu0
        %v2320 = vadd.f32 0.0, %v2319
        %v2321 = vpop.f32.mrb[0].mxu0
        %2322 = vmatprep.mubr.f32.mxu0 0.0
        %2323 = vmatmul.mubr.f32.gmra.mrb[0].mxu0 %v2118
        %v2324 = vpop.f32.mrb[0].mxu0
        %v2325 = vadd.f32 0.0, %v2324
        %v2326 = vpop.f32.mrb[0].mxu0
        %2327 = vmatprep.mubr.f32.mxu0 0.0
        %2328 = vmatmul.mubr.f32.gmra.mrb[0].mxu0 %v2121
        %v2329 = vpop.f32.mrb[0].mxu0
        %v2330 = vadd.f32 0.0, %v2329
        %v2331 = vpop.f32.mrb[0].mxu0
        %2332 = vmatprep.mubr.f32.mxu0 0.0
        %2333 = vmatmul.mubr.f32.gmra.mrb[0].mxu0 %v2124
        %v2334 = vpop.f32.mrb[0].mxu0
        %v2335 = vadd.f32 0.0, %v2334
        %v2336 = vpop.f32.mrb[0].mxu0
        %2337 = vmatprep.mubr.f32.mxu0 0.0
        %2338 = vmatmul.mubr.f32.gmra.mrb[0].mxu0 %v2127
        %v2339 = vpop.f32.mrb[0].mxu0
        %v2340 = vadd.f32 0.0, %v2339
        %v2341 = vpop.f32.mrb[0].mxu0
        %2342 = vmatprep.mubr.f32.mxu0 0.0
        %2343 = vmatmul.mubr.f32.gmra.mrb[0].mxu0 %v2130
        %v2344 = vpop.f32.mrb[0].mxu0
        %v2345 = vadd.f32 0.0, %v2344
        %v2346 = vpop.f32.mrb[0].mxu0
        %2347 = vmatprep.mubr.f32.mxu0 0.0
        %2348 = vmatmul.mubr.f32.gmra.mrb[0].mxu0 %v2133
        %v2349 = vpop.f32.mrb[0].mxu0
        %v2350 = vadd.f32 0.0, %v2349
        %v2351 = vpop.f32.mrb[0].mxu0
        %2352 = vmatprep.mubr.f32.mxu0 0.0
        %2353 = vmatmul.mubr.f32.gmra.mrb[0].mxu0 %v2136
        %v2354 = vpop.f32.mrb[0].mxu0
        %v2355 = vadd.f32 0.0, %v2354
        %v2356 = vpop.f32.mrb[0].mxu0
        %2357 = vmatprep.mubr.f32.mxu0 0.0
        %2358 = vmatmul.mubr.f32.gmra.mrb[0].mxu0 %v2139
        %v2359 = vpop.f32.mrb[0].mxu0
        %v2360 = vadd.f32 0.0, %v2359
        %v2361 = vpop.f32.mrb[0].mxu0
        %2362 = vmatprep.mubr.f32.mxu0 0.0
        %2363 = vmatmul.mubr.f32.gmra.mrb[0].mxu0 %v2142
        %v2364 = vpop.f32.mrb[0].mxu0
        %v2365 = vadd.f32 0.0, %v2364
        %v2366 = vpop.f32.mrb[0].mxu0
        %2367 = vmatprep.mubr.f32.mxu0 0.0
        %2368 = vmatmul.mubr.f32.gmra.mrb[0].mxu0 %v2145
        %v2369 = vpop.f32.mrb[0].mxu0
        %v2370 = vadd.f32 0.0, %v2369
        %v2371 = vpop.f32.mrb[0].mxu0
        %2372 = vmatprep.mubr.f32.mxu0 0.0
        %2373 = vmatmul.mubr.f32.gmra.mrb[0].mxu0 %v2148
        %v2374 = vpop.f32.mrb[0].mxu0
        %v2375 = vadd.f32 0.0, %v2374
        %v2376 = vpop.f32.mrb[0].mxu0
        %2377 = vmatprep.mubr.f32.mxu0 0.0
        %2378 = vmatmul.mubr.f32.gmra.mrb[0].mxu0 %v2151
        %v2379 = vpop.f32.mrb[0].mxu0
        %v2380 = vadd.f32 0.0, %v2379
        %v2381 = vpop.f32.mrb[0].mxu0
        %2382 = vmatprep.mubr.f32.mxu0 0.0
        %2383 = vmatmul.mubr.f32.gmra.mrb[0].mxu0 %v2154
        %v2384 = vpop.f32.mrb[0].mxu0
        %v2385 = vadd.f32 0.0, %v2384
        %v2386 = vpop.f32.mrb[0].mxu0
        %2387 = vmatprep.mubr.f32.mxu0 0.0
        %2388 = vmatmul.mubr.f32.gmra.mrb[0].mxu0 %v2157
        %v2389 = vpop.f32.mrb[0].mxu0
        %v2390 = vadd.f32 0.0, %v2389
        %v2391 = vpop.f32.mrb[0].mxu0
        %2392 = vmatprep.mubr.f32.mxu0 0.0
        %2393 = vmatmul.mubr.f32.gmra.mrb[0].mxu0 %v2160
        %v2394 = vpop.f32.mrb[0].mxu0
        %v2395 = vadd.f32 0.0, %v2394
        %v2396 = vpop.f32.mrb[0].mxu0
        %2397 = vmatprep.mubr.f32.mxu0 0.0
        %2398 = vmatmul.mubr.f32.gmra.mrb[0].mxu0 %v2163
        %v2399 = vpop.f32.mrb[0].mxu0
        %v2400 = vadd.f32 0.0, %v2399
        %v2401 = vpop.f32.mrb[0].mxu0
        %2402 = vmatprep.mubr.f32.mxu0 0.0
        %2403 = vmatmul.mubr.f32.gmra.mrb[0].mxu0 %v2166
        %v2404 = vpop.f32.mrb[0].mxu0
        %v2405 = vadd.f32 0.0, %v2404
        %v2406 = vpop.f32.mrb[0].mxu0
        %2407 = vmatprep.mubr.f32.mxu0 0.0
        %2408 = vmatmul.mubr.f32.gmra.mrb[0].mxu0 %v2169
        %v2409 = vpop.f32.mrb[0].mxu0
        %v2410 = vadd.f32 0.0, %v2409
        %v2411 = vpop.f32.mrb[0].mxu0
        %2412 = vmatprep.mubr.f32.mxu0 0.0
        %2413 = vmatmul.mubr.f32.gmra.mrb[0].mxu0 %v2172
        %v2414 = vpop.f32.mrb[0].mxu0
        %v2415 = vadd.f32 0.0, %v2414
        %v2416 = vpop.f32.mrb[0].mxu0
        %2417 = vmatprep.mubr.f32.mxu0 0.0
        %2418 = vmatmul.mubr.f32.gmra.mrb[0].mxu0 %v2175
        %v2419 = vpop.f32.mrb[0].mxu0
        %v2420 = vadd.f32 0.0, %v2419
        %v2421 = vpop.f32.mrb[0].mxu0
        %2422 = vmatprep.mubr.f32.mxu0 0.0
        %2423 = vmatmul.mubr.f32.gmra.mrb[0].mxu0 %v2178
        %v2424 = vpop.f32.mrb[0].mxu0
        %v2425 = vadd.f32 0.0, %v2424
        %v2426 = vpop.f32.mrb[0].mxu0
        %2427 = vdwg.mxu0
        %v2428 = vadd.f32 %v2002, %v2250
        %v2429 = vadd.f32 %v2003, %v2255
        %v2430 = vadd.f32 %v2004, %v2260
        %v2431 = vadd.f32 %v2005, %v2265
        %v2432 = vadd.f32 %v2006, %v2270
        %v2433 = vadd.f32 %v2007, %v2275
        %v2434 = vadd.f32 %v2008, %v2280
        %v2435 = vadd.f32 %v2009, %v2285
        %v2436 = vadd.f32 %v2010, %v2290
        %v2437 = vadd.f32 %v2011, %v2295
        %v2438 = vadd.f32 %v2012, %v2300
        %v2439 = vadd.f32 %v2013, %v2305
        %v2440 = vadd.f32 %v2014, %v2310
        %v2441 = vadd.f32 %v2015, %v2315
        %v2442 = vadd.f32 %v2016, %v2320
        %v2443 = vadd.f32 %v2017, %v2325
        %v2444 = vadd.f32 %v2018, %v2330
        %v2445 = vadd.f32 %v2019, %v2335
        %v2446 = vadd.f32 %v2020, %v2340
        %v2447 = vadd.f32 %v2021, %v2345
        %v2448 = vadd.f32 %v2022, %v2350
        %v2449 = vadd.f32 %v2023, %v2355
        %v2450 = vadd.f32 %v2024, %v2360
        %v2451 = vadd.f32 %v2025, %v2365
        %v2452 = vadd.f32 %v2026, %v2370
        %v2453 = vadd.f32 %v2027, %v2375
        %v2454 = vadd.f32 %v2028, %v2380
        %v2455 = vadd.f32 %v2029, %v2385
        %v2456 = vadd.f32 %v2030, %v2390
        %v2457 = vadd.f32 %v2031, %v2395
        %v2458 = vadd.f32 %v2032, %v2400
        %v2459 = vadd.f32 %v2033, %v2405
        %2492 = vrot.lane.b32.xlu0 %v2260, 120
        %v2493 = vpop.permute.xlu0 %2492
        %2494 = vrot.lane.b32.xlu0 %v2265, 120
        %v2495 = vpop.permute.xlu0 %2494
        %2496 = vrot.lane.b32.xlu0 %v2270, 120
        %v2497 = vpop.permute.xlu0 %2496
        %2498 = vrot.lane.b32.xlu0 %v2275, 120
        %v2499 = vpop.permute.xlu0 %2498
        %2500 = vrot.lane.b32.xlu0 %v2280, 120
        %v2501 = vpop.permute.xlu0 %2500
        %2502 = vrot.lane.b32.xlu0 %v2285, 120
        %v2503 = vpop.permute.xlu0 %2502
        %2504 = vrot.lane.b32.xlu0 %v2290, 120
        %v2505 = vpop.permute.xlu0 %2504
        %2506 = vrot.lane.b32.xlu0 %v2295, 120
        %v2507 = vpop.permute.xlu0 %2506
        %2508 = vrot.lane.b32.xlu0 %v2300, 120
        %v2509 = vpop.permute.xlu0 %2508
        %2510 = vrot.lane.b32.xlu0 %v2305, 120
        %v2511 = vpop.permute.xlu0 %2510
        %2512 = vrot.lane.b32.xlu0 %v2310, 120
        %v2513 = vpop.permute.xlu0 %2512
        %2514 = vrot.lane.b32.xlu0 %v2315, 120
        %v2515 = vpop.permute.xlu0 %2514
        %2516 = vrot.lane.b32.xlu0 %v2320, 120
        %v2517 = vpop.permute.xlu0 %2516
        %2518 = vrot.lane.b32.xlu0 %v2325, 120
        %v2519 = vpop.permute.xlu0 %2518
        %2520 = vrot.lane.b32.xlu0 %v2330, 120
        %v2521 = vpop.permute.xlu0 %2520
        %2522 = vrot.lane.b32.xlu0 %v2335, 120
        %v2523 = vpop.permute.xlu0 %2522
        %2524 = vrot.lane.b32.xlu0 %v2340, 120
        %v2525 = vpop.permute.xlu0 %2524
        %2526 = vrot.lane.b32.xlu0 %v2345, 120
        %v2527 = vpop.permute.xlu0 %2526
        %2528 = vrot.lane.b32.xlu0 %v2350, 120
        %v2529 = vpop.permute.xlu0 %2528
        %2530 = vrot.lane.b32.xlu0 %v2355, 120
        %v2531 = vpop.permute.xlu0 %2530
        %2532 = vrot.lane.b32.xlu0 %v2360, 120
        %v2533 = vpop.permute.xlu0 %2532
        %2534 = vrot.lane.b32.xlu0 %v2365, 120
        %v2535 = vpop.permute.xlu0 %2534
        %2536 = vrot.lane.b32.xlu0 %v2370, 120
        %v2537 = vpop.permute.xlu0 %2536
        %2538 = vrot.lane.b32.xlu0 %v2375, 120
        %v2539 = vpop.permute.xlu0 %2538
        %2540 = vrot.lane.b32.xlu0 %v2380, 120
        %v2541 = vpop.permute.xlu0 %2540
        %2542 = vrot.lane.b32.xlu0 %v2385, 120
        %v2543 = vpop.permute.xlu0 %2542
        %2544 = vrot.lane.b32.xlu0 %v2390, 120
        %v2545 = vpop.permute.xlu0 %2544
        %2546 = vrot.lane.b32.xlu0 %v2395, 120
        %v2547 = vpop.permute.xlu0 %2546
        %2548 = vrot.lane.b32.xlu0 %v2400, 120
        %v2549 = vpop.permute.xlu0 %2548
        %2550 = vrot.lane.b32.xlu0 %v2405, 120
        %v2551 = vpop.permute.xlu0 %2550
        %2552 = vrot.lane.b32.xlu0 %v2410, 120
        %v2553 = vpop.permute.xlu0 %2552
        %2554 = vrot.lane.b32.xlu0 %v2415, 120
        %v2555 = vpop.permute.xlu0 %2554
        %v2588 = vadd.f32 %v2428, %v2493
        %v2589 = vadd.f32 %v2429, %v2495
        %v2590 = vadd.f32 %v2430, %v2497
        %v2591 = vadd.f32 %v2431, %v2499
        %v2592 = vadd.f32 %v2432, %v2501
        %v2593 = vadd.f32 %v2433, %v2503
        %v2594 = vadd.f32 %v2434, %v2505
        %v2595 = vadd.f32 %v2435, %v2507
        %v2596 = vadd.f32 %v2436, %v2509
        %v2597 = vadd.f32 %v2437, %v2511
        %v2598 = vadd.f32 %v2438, %v2513
        %v2599 = vadd.f32 %v2439, %v2515
        %v2600 = vadd.f32 %v2440, %v2517
        %v2601 = vadd.f32 %v2441, %v2519
        %v2602 = vadd.f32 %v2442, %v2521
        %v2603 = vadd.f32 %v2443, %v2523
        %v2604 = vadd.f32 %v2444, %v2525
        %v2605 = vadd.f32 %v2445, %v2527
        %v2606 = vadd.f32 %v2446, %v2529
        %v2607 = vadd.f32 %v2447, %v2531
        %v2608 = vadd.f32 %v2448, %v2533
        %v2609 = vadd.f32 %v2449, %v2535
        %v2610 = vadd.f32 %v2450, %v2537
        %v2611 = vadd.f32 %v2451, %v2539
        %v2612 = vadd.f32 %v2452, %v2541
        %v2613 = vadd.f32 %v2453, %v2543
        %v2614 = vadd.f32 %v2454, %v2545
        %v2615 = vadd.f32 %v2455, %v2547
        %v2616 = vadd.f32 %v2456, %v2549
        %v2617 = vadd.f32 %v2457, %v2551
        %v2618 = vadd.f32 %v2458, %v2553
        %v2619 = vadd.f32 %v2459, %v2555
        %2622 = vrot.lane.b32.xlu0 %v2270, 112
        %v2623 = vpop.permute.xlu0 %2622
        %2624 = vrot.lane.b32.xlu0 %v2275, 112
        %v2625 = vpop.permute.xlu0 %2624
        %2626 = vrot.lane.b32.xlu0 %v2280, 112
        %v2627 = vpop.permute.xlu0 %2626
        %2628 = vrot.lane.b32.xlu0 %v2285, 112
        %v2629 = vpop.permute.xlu0 %2628
        %2630 = vrot.lane.b32.xlu0 %v2290, 112
        %v2631 = vpop.permute.xlu0 %2630
        %2632 = vrot.lane.b32.xlu0 %v2295, 112
        %v2633 = vpop.permute.xlu0 %2632
        %2634 = vrot.lane.b32.xlu0 %v2300, 112
        %v2635 = vpop.permute.xlu0 %2634
        %2636 = vrot.lane.b32.xlu0 %v2305, 112
        %v2637 = vpop.permute.xlu0 %2636
        %2638 = vrot.lane.b32.xlu0 %v2310, 112
        %v2639 = vpop.permute.xlu0 %2638
        %2640 = vrot.lane.b32.xlu0 %v2315, 112
        %v2641 = vpop.permute.xlu0 %2640
        %2642 = vrot.lane.b32.xlu0 %v2320, 112
        %v2643 = vpop.permute.xlu0 %2642
        %2644 = vrot.lane.b32.xlu0 %v2325, 112
        %v2645 = vpop.permute.xlu0 %2644
        %2646 = vrot.lane.b32.xlu0 %v2330, 112
        %v2647 = vpop.permute.xlu0 %2646
        %2648 = vrot.lane.b32.xlu0 %v2335, 112
        %v2649 = vpop.permute.xlu0 %2648
        %2650 = vrot.lane.b32.xlu0 %v2340, 112
        %v2651 = vpop.permute.xlu0 %2650
        %2652 = vrot.lane.b32.xlu0 %v2345, 112
        %v2653 = vpop.permute.xlu0 %2652
        %2654 = vrot.lane.b32.xlu0 %v2350, 112
        %v2655 = vpop.permute.xlu0 %2654
        %2656 = vrot.lane.b32.xlu0 %v2355, 112
        %v2657 = vpop.permute.xlu0 %2656
        %2658 = vrot.lane.b32.xlu0 %v2360, 112
        %v2659 = vpop.permute.xlu0 %2658
        %2660 = vrot.lane.b32.xlu0 %v2365, 112
        %v2661 = vpop.permute.xlu0 %2660
        %2662 = vrot.lane.b32.xlu0 %v2370, 112
        %v2663 = vpop.permute.xlu0 %2662
        %2664 = vrot.lane.b32.xlu0 %v2375, 112
        %v2665 = vpop.permute.xlu0 %2664
        %2666 = vrot.lane.b32.xlu0 %v2380, 112
        %v2667 = vpop.permute.xlu0 %2666
        %2668 = vrot.lane.b32.xlu0 %v2385, 112
        %v2669 = vpop.permute.xlu0 %2668
        %2670 = vrot.lane.b32.xlu0 %v2390, 112
        %v2671 = vpop.permute.xlu0 %2670
        %2672 = vrot.lane.b32.xlu0 %v2395, 112
        %v2673 = vpop.permute.xlu0 %2672
        %2674 = vrot.lane.b32.xlu0 %v2400, 112
        %v2675 = vpop.permute.xlu0 %2674
        %2676 = vrot.lane.b32.xlu0 %v2405, 112
        %v2677 = vpop.permute.xlu0 %2676
        %2678 = vrot.lane.b32.xlu0 %v2410, 112
        %v2679 = vpop.permute.xlu0 %2678
        %2680 = vrot.lane.b32.xlu0 %v2415, 112
        %v2681 = vpop.permute.xlu0 %2680
        %2682 = vrot.lane.b32.xlu0 %v2420, 112
        %v2683 = vpop.permute.xlu0 %2682
        %2684 = vrot.lane.b32.xlu0 %v2425, 112
        %v2685 = vpop.permute.xlu0 %2684
        %v2718 = vadd.f32 %v2588, %v2623
        %v2719 = vadd.f32 %v2589, %v2625
        %v2720 = vadd.f32 %v2590, %v2627
        %v2721 = vadd.f32 %v2591, %v2629
        %v2722 = vadd.f32 %v2592, %v2631
        %v2723 = vadd.f32 %v2593, %v2633
        %v2724 = vadd.f32 %v2594, %v2635
        %v2725 = vadd.f32 %v2595, %v2637
        %v2726 = vadd.f32 %v2596, %v2639
        %v2727 = vadd.f32 %v2597, %v2641
        %v2728 = vadd.f32 %v2598, %v2643
        %v2729 = vadd.f32 %v2599, %v2645
        %v2730 = vadd.f32 %v2600, %v2647
        %v2731 = vadd.f32 %v2601, %v2649
        %v2732 = vadd.f32 %v2602, %v2651
        %v2733 = vadd.f32 %v2603, %v2653
        %v2734 = vadd.f32 %v2604, %v2655
        %v2735 = vadd.f32 %v2605, %v2657
        %v2736 = vadd.f32 %v2606, %v2659
        %v2737 = vadd.f32 %v2607, %v2661
        %v2738 = vadd.f32 %v2608, %v2663
        %v2739 = vadd.f32 %v2609, %v2665
        %v2740 = vadd.f32 %v2610, %v2667
        %v2741 = vadd.f32 %v2611, %v2669
        %v2742 = vadd.f32 %v2612, %v2671
        %v2743 = vadd.f32 %v2613, %v2673
        %v2744 = vadd.f32 %v2614, %v2675
        %v2745 = vadd.f32 %v2615, %v2677
        %v2746 = vadd.f32 %v2616, %v2679
        %v2747 = vadd.f32 %v2617, %v2681
        %v2748 = vadd.f32 %v2618, %v2683
        %v2749 = vadd.f32 %v2619, %v2685
        %v2750 = vld [vmem:[%s4] sm:$0x1]
        %v2752 = vlaneseq
        %v2753 = vshrl.u32 %v2752, 7
        %v2754 = vsub.s32 0, %v2753
        %v2755 = vrot.slane %v2750, %v2754
        %v2757 = vadd.f32 %v2718, %v2755
        %v2758 = vadd.f32 %v2719, %v2755
        %v2759 = vadd.f32 %v2720, %v2755
        %v2760 = vadd.f32 %v2721, %v2755
        %v2761 = vadd.f32 %v2722, %v2755
        %v2762 = vadd.f32 %v2723, %v2755
        %v2763 = vadd.f32 %v2724, %v2755
        %v2764 = vadd.f32 %v2725, %v2755
        %v2765 = vadd.f32 %v2726, %v2755
        %v2766 = vadd.f32 %v2727, %v2755
        %v2767 = vadd.f32 %v2728, %v2755
        %v2768 = vadd.f32 %v2729, %v2755
        %v2769 = vadd.f32 %v2730, %v2755
        %v2770 = vadd.f32 %v2731, %v2755
        %v2771 = vadd.f32 %v2732, %v2755
        %v2772 = vadd.f32 %v2733, %v2755
        %v2773 = vadd.f32 %v2734, %v2755
        %v2774 = vadd.f32 %v2735, %v2755
        %v2775 = vadd.f32 %v2736, %v2755
        %v2776 = vadd.f32 %v2737, %v2755
        %v2777 = vadd.f32 %v2738, %v2755
        %v2778 = vadd.f32 %v2739, %v2755
        %v2779 = vadd.f32 %v2740, %v2755
        %v2780 = vadd.f32 %v2741, %v2755
        %v2781 = vadd.f32 %v2742, %v2755
        %v2782 = vadd.f32 %v2743, %v2755
        %v2783 = vadd.f32 %v2744, %v2755
        %v2784 = vadd.f32 %v2745, %v2755
        %v2785 = vadd.f32 %v2746, %v2755
        %v2786 = vadd.f32 %v2747, %v2755
        %v2787 = vadd.f32 %v2748, %v2755
        %v2788 = vadd.f32 %v2749, %v2755
        %v2789 = vmax.f32 %v2757, 0.0
        %v2790 = vmax.f32 %v2758, 0.0
        %v2791 = vmax.f32 %v2759, 0.0
        %v2792 = vmax.f32 %v2760, 0.0
        %v2793 = vmax.f32 %v2761, 0.0
        %v2794 = vmax.f32 %v2762, 0.0
        %v2795 = vmax.f32 %v2763, 0.0
        %v2796 = vmax.f32 %v2764, 0.0
        %v2797 = vmax.f32 %v2765, 0.0
        %v2798 = vmax.f32 %v2766, 0.0
        %v2799 = vmax.f32 %v2767, 0.0
        %v2800 = vmax.f32 %v2768, 0.0
        %v2801 = vmax.f32 %v2769, 0.0
        %v2802 = vmax.f32 %v2770, 0.0
        %v2803 = vmax.f32 %v2771, 0.0
        %v2804 = vmax.f32 %v2772, 0.0
        %v2805 = vmax.f32 %v2773, 0.0
        %v2806 = vmax.f32 %v2774, 0.0
        %v2807 = vmax.f32 %v2775, 0.0
        %v2808 = vmax.f32 %v2776, 0.0
        %v2809 = vmax.f32 %v2777, 0.0
        %v2810 = vmax.f32 %v2778, 0.0
        %v2811 = vmax.f32 %v2779, 0.0
        %v2812 = vmax.f32 %v2780, 0.0
        %v2813 = vmax.f32 %v2781, 0.0
        %v2814 = vmax.f32 %v2782, 0.0
        %v2815 = vmax.f32 %v2783, 0.0
        %v2816 = vmax.f32 %v2784, 0.0
        %v2817 = vmax.f32 %v2785, 0.0
        %v2818 = vmax.f32 %v2786, 0.0
        %v2819 = vmax.f32 %v2787, 0.0
        %v2820 = vmax.f32 %v2788, 0.0
        %2821 = vxpose.xlu0.b32.start [1/16] %v2789, 128
        %2822 = vxpose.xlu0.b32.cont [2/16] %v2790, 128
        %2823 = vxpose.xlu0.b32.cont [3/16] %v2791, 128
        %2824 = vxpose.xlu0.b32.cont [4/16] %v2792, 128
        %2825 = vxpose.xlu0.b32.cont [5/16] %v2793, 128
        %2826 = vxpose.xlu0.b32.cont [6/16] %v2794, 128
        %2827 = vxpose.xlu0.b32.cont [7/16] %v2795, 128
        %2828 = vxpose.xlu0.b32.cont [8/16] %v2796, 128
        %2829 = vxpose.xlu0.b32.cont [9/16] %v2797, 128
        %2830 = vxpose.xlu0.b32.cont [10/16] %v2798, 128
        %2831 = vxpose.xlu0.b32.cont [11/16] %v2799, 128
        %2832 = vxpose.xlu0.b32.cont [12/16] %v2800, 128
        %2833 = vxpose.xlu0.b32.cont [13/16] %v2801, 128
        %2834 = vxpose.xlu0.b32.cont [14/16] %v2802, 128
        %2835 = vxpose.xlu0.b32.cont [15/16] %v2803, 128
        %2836 = vxpose.xlu0.b32.end [16/16] %v2804, 128
        %v2837 = vpop.trf.xlu0
        %v2838 = vpop.trf.xlu0
        %v2839 = vpop.trf.xlu0
        %v2840 = vpop.trf.xlu0
        %v2841 = vpop.trf.xlu0
        %v2842 = vpop.trf.xlu0
        %v2843 = vpop.trf.xlu0
        %v2844 = vpop.trf.xlu0
        %v2845 = vpop.trf.xlu0
        %v2846 = vpop.trf.xlu0
        %v2847 = vpop.trf.xlu0
        %v2848 = vpop.trf.xlu0
        %v2849 = vpop.trf.xlu0
        %v2850 = vpop.trf.xlu0
        %v2851 = vpop.trf.xlu0
        %v2852 = vpop.trf.xlu0
        %2853 = vxpose.xlu0.b32.start [1/16] %v2805, 128
        %2854 = vxpose.xlu0.b32.cont [2/16] %v2806, 128
        %2855 = vxpose.xlu0.b32.cont [3/16] %v2807, 128
        %2856 = vxpose.xlu0.b32.cont [4/16] %v2808, 128
        %2857 = vxpose.xlu0.b32.cont [5/16] %v2809, 128
        %2858 = vxpose.xlu0.b32.cont [6/16] %v2810, 128
        %2859 = vxpose.xlu0.b32.cont [7/16] %v2811, 128
        %2860 = vxpose.xlu0.b32.cont [8/16] %v2812, 128
        %2861 = vxpose.xlu0.b32.cont [9/16] %v2813, 128
        %2862 = vxpose.xlu0.b32.cont [10/16] %v2814, 128
        %2863 = vxpose.xlu0.b32.cont [11/16] %v2815, 128
        %2864 = vxpose.xlu0.b32.cont [12/16] %v2816, 128
        %2865 = vxpose.xlu0.b32.cont [13/16] %v2817, 128
        %2866 = vxpose.xlu0.b32.cont [14/16] %v2818, 128
        %2867 = vxpose.xlu0.b32.cont [15/16] %v2819, 128
        %2868 = vxpose.xlu0.b32.end [16/16] %v2820, 128
        %v2869 = vpop.trf.xlu0
        %v2870 = vpop.trf.xlu0
        %v2871 = vpop.trf.xlu0
        %v2872 = vpop.trf.xlu0
        %v2873 = vpop.trf.xlu0
        %v2874 = vpop.trf.xlu0
        %v2875 = vpop.trf.xlu0
        %v2876 = vpop.trf.xlu0
        %v2877 = vpop.trf.xlu0
        %v2878 = vpop.trf.xlu0
        %v2879 = vpop.trf.xlu0
        %v2880 = vpop.trf.xlu0
        %v2881 = vpop.trf.xlu0
        %v2882 = vpop.trf.xlu0
        %v2883 = vpop.trf.xlu0
        %v2884 = vpop.trf.xlu0
        %2885 = vst [vmem:[%s383] sm:$0xff] %v2837
        %2886 = vst [vmem:[%s383 + $0x8] sm:$0xff] %v2869
        %vm2887 = vcmask 64512
        %2888 = vst.msk [vmem:[#allocation3] sm:$0xff] %vm2887, 0.0
        %2889 = vst.msk [vmem:[#allocation3 + $0x8] sm:$0xff] %vm2887, 0.0
        %vm2890 = vcmask 58368
        %2891 = vst.msk [vmem:[#allocation3 + $0x10] sm:$0x3] %vm2890, 0.0
        %2892 = vst.msk [vmem:[#allocation3 + $0x18] sm:$0xff] %vm2887, 0.0
        %2893 = vst.msk [vmem:[#allocation3 + $0x20] sm:$0xff] %vm2887, 0.0
        %2894 = vst.msk [vmem:[#allocation3 + $0x28] sm:$0x3] %vm2890, 0.0
        %2895 = vst.msk [vmem:[#allocation3 + $0x30] sm:$0xff] %vm2887, 0.0
        %2896 = vst.msk [vmem:[#allocation3 + $0x38] sm:$0xff] %vm2887, 0.0
        %2897 = vst.msk [vmem:[#allocation3 + $0x40] sm:$0x3] %vm2890, 0.0
        %2898 = vst.msk [vmem:[#allocation3 + $0x48] sm:$0xff] %vm2887, 0.0
        %2899 = vst.msk [vmem:[#allocation3 + $0x50] sm:$0xff] %vm2887, 0.0
        %2900 = vst.msk [vmem:[#allocation3 + $0x58] sm:$0x3] %vm2890, 0.0
        %2901 = vst.msk [vmem:[#allocation3 + $0x60] sm:$0xff] %vm2887, 0.0
        %2902 = vst.msk [vmem:[#allocation3 + $0x68] sm:$0xff] %vm2887, 0.0
        %2903 = vst.msk [vmem:[#allocation3 + $0x70] sm:$0x3] %vm2890, 0.0
        %2904 = vst.msk [vmem:[#allocation3 + $0x78] sm:$0xff] %vm2887, 0.0
        %2905 = vst.msk [vmem:[#allocation3 + $0x80] sm:$0xff] %vm2887, 0.0
        %2906 = vst.msk [vmem:[#allocation3 + $0x88] sm:$0x3] %vm2890, 0.0
        %2907 = vst.msk [vmem:[#allocation3 + $0x90] sm:$0xff] %vm2887, 0.0
        %2908 = vst.msk [vmem:[#allocation3 + $0x98] sm:$0xff] %vm2887, 0.0
        %2909 = vst.msk [vmem:[#allocation3 + $0xa0] sm:$0x3] %vm2890, 0.0
        %2910 = vst.msk [vmem:[#allocation3 + $0xa8] sm:$0xff] %vm2887, 0.0
        %2911 = vst.msk [vmem:[#allocation3 + $0xb0] sm:$0xff] %vm2887, 0.0
        %2912 = vst.msk [vmem:[#allocation3 + $0xb8] sm:$0x3] %vm2890, 0.0
        %2913 = vst.msk [vmem:[#allocation3 + $0xc0] sm:$0xff] %vm2887, 0.0
        %2914 = vst.msk [vmem:[#allocation3 + $0xc8] sm:$0xff] %vm2887, 0.0
        %2915 = vst.msk [vmem:[#allocation3 + $0xd0] sm:$0x3] %vm2890, 0.0
        %2916 = vst.msk [vmem:[#allocation3 + $0xd8] sm:$0xff] %vm2887, 0.0
        %2917 = vst.msk [vmem:[#allocation3 + $0xe0] sm:$0xff] %vm2887, 0.0
        %2918 = vst.msk [vmem:[#allocation3 + $0xe8] sm:$0x3] %vm2890, 0.0
        %2919 = vst.msk [vmem:[#allocation3 + $0xf0] sm:$0xff] %vm2887, 0.0
        %2920 = vst.msk [vmem:[#allocation3 + $0xf8] sm:$0xff] %vm2887, 0.0
        %2921 = vst.msk [vmem:[#allocation3 + $0x100] sm:$0x3] %vm2890, 0.0
        %2922 = vst.msk [vmem:[#allocation3 + $0x108] sm:$0xff] %vm2887, 0.0
        %2923 = vst.msk [vmem:[#allocation3 + $0x110] sm:$0xff] %vm2887, 0.0
        %2924 = vst.msk [vmem:[#allocation3 + $0x118] sm:$0x3] %vm2890, 0.0
        %2925 = vst.msk [vmem:[#allocation3 + $0x120] sm:$0xff] %vm2887, 0.0
        %2926 = vst.msk [vmem:[#allocation3 + $0x128] sm:$0xff] %vm2887, 0.0
        %2927 = vst.msk [vmem:[#allocation3 + $0x130] sm:$0x3] %vm2890, 0.0
        %2928 = vst.msk [vmem:[#allocation3 + $0x138] sm:$0xff] %vm2887, 0.0
        %2929 = vst.msk [vmem:[#allocation3 + $0x140] sm:$0xff] %vm2887, 0.0
        %2930 = vst.msk [vmem:[#allocation3 + $0x148] sm:$0x3] %vm2890, 0.0
        %2931 = vst.msk [vmem:[#allocation3 + $0x150] sm:$0xff] %vm2887, 0.0
        %2932 = vst.msk [vmem:[#allocation3 + $0x158] sm:$0xff] %vm2887, 0.0
        %2933 = vst.msk [vmem:[#allocation3 + $0x160] sm:$0x3] %vm2890, 0.0
        %2934 = vst.msk [vmem:[#allocation3 + $0x168] sm:$0xff] %vm2887, 0.0
        %2935 = vst.msk [vmem:[#allocation3 + $0x170] sm:$0xff] %vm2887, 0.0
        %2936 = vst.msk [vmem:[#allocation3 + $0x178] sm:$0x3] %vm2890, 0.0
        %2937 = vst.msk [vmem:[#allocation3 + $0x180] sm:$0xff] %vm2887, 0.0
        %2938 = vst.msk [vmem:[#allocation3 + $0x188] sm:$0xff] %vm2887, 0.0
        %2939 = vst.msk [vmem:[#allocation3 + $0x190] sm:$0x3] %vm2890, 0.0
        %2940 = vst.msk [vmem:[#allocation3 + $0x198] sm:$0xff] %vm2887, 0.0
        %2941 = vst.msk [vmem:[#allocation3 + $0x1a0] sm:$0xff] %vm2887, 0.0
        %2942 = vst.msk [vmem:[#allocation3 + $0x1a8] sm:$0x3] %vm2890, 0.0
        %s2943 = scalar_lea.vmem [#allocation3], 24
        %2944 = vst.msk [vmem:[%s2943 + $0x1] sm:$0xff] %vm2887, %v2789
        %2945 = vst.msk [vmem:[%s2943 + $0x9] sm:$0xff] %vm2887, %v2790
        %2946 = vst.msk [vmem:[%s2943 + $0x19] sm:$0xff] %vm2887, %v2791
        %2947 = vst.msk [vmem:[%s2943 + $0x21] sm:$0xff] %vm2887, %v2792
        %2948 = vst.msk [vmem:[%s2943 + $0x31] sm:$0xff] %vm2887, %v2793
        %2949 = vst.msk [vmem:[%s2943 + $0x39] sm:$0xff] %vm2887, %v2794
        %2950 = vst.msk [vmem:[%s2943 + $0x49] sm:$0xff] %vm2887, %v2795
        %2951 = vst.msk [vmem:[%s2943 + $0x51] sm:$0xff] %vm2887, %v2796
        %2952 = vst.msk [vmem:[%s2943 + $0x61] sm:$0xff] %vm2887, %v2797
        %2953 = vst.msk [vmem:[%s2943 + $0x69] sm:$0xff] %vm2887, %v2798
        %2954 = vst.msk [vmem:[%s2943 + $0x79] sm:$0xff] %vm2887, %v2799
        %2955 = vst.msk [vmem:[%s2943 + $0x81] sm:$0xff] %vm2887, %v2800
        %2956 = vst.msk [vmem:[%s2943 + $0x91] sm:$0xff] %vm2887, %v2801
        %2957 = vst.msk [vmem:[%s2943 + $0x99] sm:$0xff] %vm2887, %v2802
        %2958 = vst.msk [vmem:[%s2943 + $0xa9] sm:$0xff] %vm2887, %v2803
        %2959 = vst.msk [vmem:[%s2943 + $0xb1] sm:$0xff] %vm2887, %v2804
        %2960 = vst.msk [vmem:[%s2943 + $0xc1] sm:$0xff] %vm2887, %v2805
        %2961 = vst.msk [vmem:[%s2943 + $0xc9] sm:$0xff] %vm2887, %v2806
        %2962 = vst.msk [vmem:[%s2943 + $0xd9] sm:$0xff] %vm2887, %v2807
        %2963 = vst.msk [vmem:[%s2943 + $0xe1] sm:$0xff] %vm2887, %v2808
        %2964 = vst.msk [vmem:[%s2943 + $0xf1] sm:$0xff] %vm2887, %v2809
        %2965 = vst.msk [vmem:[%s2943 + $0xf9] sm:$0xff] %vm2887, %v2810
        %2966 = vst.msk [vmem:[%s2943 + $0x109] sm:$0xff] %vm2887, %v2811
        %2967 = vst.msk [vmem:[%s2943 + $0x111] sm:$0xff] %vm2887, %v2812
        %2968 = vst.msk [vmem:[%s2943 + $0x121] sm:$0xff] %vm2887, %v2813
        %2969 = vst.msk [vmem:[%s2943 + $0x129] sm:$0xff] %vm2887, %v2814
        %2970 = vst.msk [vmem:[%s2943 + $0x139] sm:$0xff] %vm2887, %v2815
        %2971 = vst.msk [vmem:[%s2943 + $0x141] sm:$0xff] %vm2887, %v2816
        %2972 = vst.msk [vmem:[%s2943 + $0x151] sm:$0xff] %vm2887, %v2817
        %2973 = vst.msk [vmem:[%s2943 + $0x159] sm:$0xff] %vm2887, %v2818
        %2974 = vst.msk [vmem:[%s2943 + $0x169] sm:$0xff] %vm2887, %v2819
        %2975 = vst.msk [vmem:[%s2943 + $0x171] sm:$0xff] %vm2887, %v2820
        %v2976 = vld [vmem:[#allocation3] sm:$0xff]
        %v2977 = vld [vmem:[#allocation3 + $0x8] sm:$0xff]
        %v2978 = vld [vmem:[#allocation3 + $0x18] sm:$0xff]
        %v2979 = vld [vmem:[#allocation3 + $0x20] sm:$0xff]
        %v2980 = vld [vmem:[#allocation3 + $0x30] sm:$0xff]
        %v2981 = vld [vmem:[#allocation3 + $0x38] sm:$0xff]
        %v2982 = vld [vmem:[#allocation3 + $0x48] sm:$0xff]
        %v2983 = vld [vmem:[#allocation3 + $0x50] sm:$0xff]
        %v2984 = vld [vmem:[#allocation3 + $0x60] sm:$0xff]
        %v2985 = vld [vmem:[#allocation3 + $0x68] sm:$0xff]
        %v2986 = vld [vmem:[#allocation3 + $0x78] sm:$0xff]
        %v2987 = vld [vmem:[#allocation3 + $0x80] sm:$0xff]
        %v2988 = vld [vmem:[#allocation3 + $0x90] sm:$0xff]
        %v2989 = vld [vmem:[#allocation3 + $0x98] sm:$0xff]
        %v2990 = vld [vmem:[#allocation3 + $0xa8] sm:$0xff]
        %v2991 = vld [vmem:[#allocation3 + $0xb0] sm:$0xff]
        %v2992 = vld [vmem:[#allocation3 + $0xc0] sm:$0xff]
        %v2993 = vld [vmem:[#allocation3 + $0xc8] sm:$0xff]
        %v2994 = vld [vmem:[#allocation3 + $0xd8] sm:$0xff]
        %v2995 = vld [vmem:[#allocation3 + $0xe0] sm:$0xff]
        %v2996 = vld [vmem:[#allocation3 + $0xf0] sm:$0xff]
        %v2997 = vld [vmem:[#allocation3 + $0xf8] sm:$0xff]
        %v2998 = vld [vmem:[#allocation3 + $0x108] sm:$0xff]
        %v2999 = vld [vmem:[#allocation3 + $0x110] sm:$0xff]
        %v3000 = vld [vmem:[#allocation3 + $0x120] sm:$0xff]
        %v3001 = vld [vmem:[#allocation3 + $0x128] sm:$0xff]
        %v3002 = vld [vmem:[#allocation3 + $0x138] sm:$0xff]
        %v3003 = vld [vmem:[#allocation3 + $0x140] sm:$0xff]
        %v3004 = vld [vmem:[#allocation3 + $0x150] sm:$0xff]
        %v3005 = vld [vmem:[#allocation3 + $0x158] sm:$0xff]
        %v3006 = vld [vmem:[#allocation3 + $0x168] sm:$0xff]
        %v3007 = vld [vmem:[#allocation3 + $0x170] sm:$0xff]
        %v3008 = vld [vmem:[#allocation3 + $0x180] sm:$0xff]
        %v3009 = vld [vmem:[#allocation3 + $0x188] sm:$0xff]
        %v3010 = vld [vmem:[#allocation3 + $0x198] sm:$0xff]
        %v3011 = vld [vmem:[#allocation3 + $0x1a0] sm:$0xff]
        %v3012 = vld [vmem:[%s5] sm:$0xff]
        %v3014 = vsel %vm2887, %v2976, 0
        %v3017 = vsel %vm2887, %v2977, 0
        %v3020 = vsel %vm2887, %v2978, 0
        %v3023 = vsel %vm2887, %v2979, 0
        %v3026 = vsel %vm2887, %v2980, 0
        %v3029 = vsel %vm2887, %v2981, 0
        %v3032 = vsel %vm2887, %v2982, 0
        %v3035 = vsel %vm2887, %v2983, 0
        %v3038 = vsel %vm2887, %v2984, 0
        %v3041 = vsel %vm2887, %v2985, 0
        %v3044 = vsel %vm2887, %v2986, 0
        %v3047 = vsel %vm2887, %v2987, 0
        %v3050 = vsel %vm2887, %v2988, 0
        %v3053 = vsel %vm2887, %v2989, 0
        %v3056 = vsel %vm2887, %v2990, 0
        %v3059 = vsel %vm2887, %v2991, 0
        %v3062 = vsel %vm2887, %v2992, 0
        %v3065 = vsel %vm2887, %v2993, 0
        %v3068 = vsel %vm2887, %v2994, 0
        %v3071 = vsel %vm2887, %v2995, 0
        %v3074 = vsel %vm2887, %v2996, 0
        %v3077 = vsel %vm2887, %v2997, 0
        %v3080 = vsel %vm2887, %v2998, 0
        %v3083 = vsel %vm2887, %v2999, 0
        %v3086 = vsel %vm2887, %v3000, 0
        %v3089 = vsel %vm2887, %v3001, 0
        %v3092 = vsel %vm2887, %v3002, 0
        %v3095 = vsel %vm2887, %v3003, 0
        %v3098 = vsel %vm2887, %v3004, 0
        %v3101 = vsel %vm2887, %v3005, 0
        %v3104 = vsel %vm2887, %v3006, 0
        %v3107 = vsel %vm2887, %v3007, 0
        %v3110 = vsel %vm2887, %v3008, 0
        %v3113 = vsel %vm2887, %v3009, 0
        %v3116 = vsel %vm2887, %v3010, 0
        %v3119 = vsel %vm2887, %v3011, 0
        %3121 = vmatprep.subr.mxu0 0.0
        %3122 = vmatpush1.msra.mxu0 %v3012
        %3123 = vmatprep.subr.mxu0 0.0
        %3124 = vmatpush1.msra.mxu0 0.0
        %3125 = vmatprep.subr.mxu0 0.0
        %3126 = vmatpush1.msra.mxu0 0.0
        %3127 = vmatprep.subr.mxu0 0.0
        %3128 = vmatpush1.msra.mxu0 0.0
        %3129 = vmatprep.subr.mxu0 0.0
        %3130 = vmatpush1.msra.mxu0 0.0
        %3131 = vmatprep.subr.mxu0 0.0
        %3132 = vmatpush1.msra.mxu0 0.0
        %3133 = vmatprep.subr.mxu0 0.0
        %3134 = vmatpush1.msra.mxu0 0.0
        %3135 = vmatprep.subr.mxu0 0.0
        %3136 = vmatpush1.msra.mxu0 0.0
        %3137 = vmatprep.subr.mxu0 0.0
        %3138 = vmatpush1.msra.mxu0 0.0
        %3139 = vmatprep.subr.mxu0 0.0
        %3140 = vmatpush1.msra.mxu0 0.0
        %3141 = vmatprep.subr.mxu0 0.0
        %3142 = vmatpush1.msra.mxu0 0.0
        %3143 = vmatprep.subr.mxu0 0.0
        %3144 = vmatpush1.msra.mxu0 0.0
        %3145 = vmatprep.subr.mxu0 0.0
        %3146 = vmatpush1.msra.mxu0 0.0
        %3147 = vmatprep.subr.mxu0 0.0
        %3148 = vmatpush1.msra.mxu0 0.0
        %3149 = vmatprep.subr.mxu0 0.0
        %3150 = vmatpush1.msra.mxu0 0.0
        %3151 = vmatprep.subr.mxu0 0.0
        %3152 = vmatpush1.msra.mxu0 0.0
        %3153 = vmatprep.subr.mxu0 0.0
        %3154 = vmatpush1.msra.mxu0 0.0
        %3155 = vmatprep.subr.mxu0 0.0
        %3156 = vmatpush1.msra.mxu0 0.0
        %3157 = vmatprep.subr.mxu0 0.0
        %3158 = vmatpush1.msra.mxu0 0.0
        %3159 = vmatprep.subr.mxu0 0.0
        %3160 = vmatpush1.msra.mxu0 0.0
        %3161 = vmatprep.subr.mxu0 0.0
        %3162 = vmatpush1.msra.mxu0 0.0
        %3163 = vmatprep.subr.mxu0 0.0
        %3164 = vmatpush1.msra.mxu0 0.0
        %3165 = vmatprep.subr.mxu0 0.0
        %3166 = vmatpush1.msra.mxu0 0.0
        %3167 = vmatprep.subr.mxu0 0.0
        %3168 = vmatpush1.msra.mxu0 0.0
        %3169 = vmatprep.subr.mxu0 0.0
        %3170 = vmatpush1.msra.mxu0 0.0
        %3171 = vmatprep.subr.mxu0 0.0
        %3172 = vmatpush1.msra.mxu0 0.0
        %3173 = vmatprep.subr.mxu0 0.0
        %3174 = vmatpush1.msra.mxu0 0.0
        %3175 = vmatprep.subr.mxu0 0.0
        %3176 = vmatpush1.msra.mxu0 0.0
        %3177 = vmatprep.subr.mxu0 0.0
        %3178 = vmatpush1.msra.mxu0 0.0
        %3179 = vmatprep.subr.mxu0 0.0
        %3180 = vmatpush1.msra.mxu0 0.0
        %3181 = vmatprep.subr.mxu0 0.0
        %3182 = vmatpush1.msra.mxu0 0.0
        %3183 = vmatprep.subr.mxu0 0.0
        %3184 = vmatpush1.msra.mxu0 0.0
        %3185 = vmatprep.mubr.f32.mxu0 0.0
        %3186 = vmatmul.mubr.f32.gmra.mrb[0].mxu0 %v3014
        %v3187 = vpop.f32.mrb[0].mxu0
        %v3188 = vadd.f32 0.0, %v3187
        %v3189 = vpop.f32.mrb[0].mxu0
        %3190 = vmatprep.mubr.f32.mxu0 0.0
        %3191 = vmatmul.mubr.f32.gmra.mrb[0].mxu0 %v3017
        %v3192 = vpop.f32.mrb[0].mxu0
        %v3193 = vadd.f32 0.0, %v3192
        %v3194 = vpop.f32.mrb[0].mxu0
        %3195 = vmatprep.mubr.f32.mxu0 0.0
        %3196 = vmatmul.mubr.f32.gmra.mrb[0].mxu0 %v3020
        %v3197 = vpop.f32.mrb[0].mxu0
        %v3198 = vadd.f32 0.0, %v3197
        %v3199 = vpop.f32.mrb[0].mxu0
        %3200 = vmatprep.mubr.f32.mxu0 0.0
        %3201 = vmatmul.mubr.f32.gmra.mrb[0].mxu0 %v3023
        %v3202 = vpop.f32.mrb[0].mxu0
        %v3203 = vadd.f32 0.0, %v3202
        %v3204 = vpop.f32.mrb[0].mxu0
        %3205 = vmatprep.mubr.f32.mxu0 0.0
        %3206 = vmatmul.mubr.f32.gmra.mrb[0].mxu0 %v3026
        %v3207 = vpop.f32.mrb[0].mxu0
        %v3208 = vadd.f32 0.0, %v3207
        %v3209 = vpop.f32.mrb[0].mxu0
        %3210 = vmatprep.mubr.f32.mxu0 0.0
        %3211 = vmatmul.mubr.f32.gmra.mrb[0].mxu0 %v3029
        %v3212 = vpop.f32.mrb[0].mxu0
        %v3213 = vadd.f32 0.0, %v3212
        %v3214 = vpop.f32.mrb[0].mxu0
        %3215 = vmatprep.mubr.f32.mxu0 0.0
        %3216 = vmatmul.mubr.f32.gmra.mrb[0].mxu0 %v3032
        %v3217 = vpop.f32.mrb[0].mxu0
        %v3218 = vadd.f32 0.0, %v3217
        %v3219 = vpop.f32.mrb[0].mxu0
        %3220 = vmatprep.mubr.f32.mxu0 0.0
        %3221 = vmatmul.mubr.f32.gmra.mrb[0].mxu0 %v3035
        %v3222 = vpop.f32.mrb[0].mxu0
        %v3223 = vadd.f32 0.0, %v3222
        %v3224 = vpop.f32.mrb[0].mxu0
        %3225 = vmatprep.mubr.f32.mxu0 0.0
        %3226 = vmatmul.mubr.f32.gmra.mrb[0].mxu0 %v3038
        %v3227 = vpop.f32.mrb[0].mxu0
        %v3228 = vadd.f32 0.0, %v3227
        %v3229 = vpop.f32.mrb[0].mxu0
        %3230 = vmatprep.mubr.f32.mxu0 0.0
        %3231 = vmatmul.mubr.f32.gmra.mrb[0].mxu0 %v3041
        %v3232 = vpop.f32.mrb[0].mxu0
        %v3233 = vadd.f32 0.0, %v3232
        %v3234 = vpop.f32.mrb[0].mxu0
        %3235 = vmatprep.mubr.f32.mxu0 0.0
        %3236 = vmatmul.mubr.f32.gmra.mrb[0].mxu0 %v3044
        %v3237 = vpop.f32.mrb[0].mxu0
        %v3238 = vadd.f32 0.0, %v3237
        %v3239 = vpop.f32.mrb[0].mxu0
        %3240 = vmatprep.mubr.f32.mxu0 0.0
        %3241 = vmatmul.mubr.f32.gmra.mrb[0].mxu0 %v3047
        %v3242 = vpop.f32.mrb[0].mxu0
        %v3243 = vadd.f32 0.0, %v3242
        %v3244 = vpop.f32.mrb[0].mxu0
        %3245 = vmatprep.mubr.f32.mxu0 0.0
        %3246 = vmatmul.mubr.f32.gmra.mrb[0].mxu0 %v3050
        %v3247 = vpop.f32.mrb[0].mxu0
        %v3248 = vadd.f32 0.0, %v3247
        %v3249 = vpop.f32.mrb[0].mxu0
        %3250 = vmatprep.mubr.f32.mxu0 0.0
        %3251 = vmatmul.mubr.f32.gmra.mrb[0].mxu0 %v3053
        %v3252 = vpop.f32.mrb[0].mxu0
        %v3253 = vadd.f32 0.0, %v3252
        %v3254 = vpop.f32.mrb[0].mxu0
        %3255 = vmatprep.mubr.f32.mxu0 0.0
        %3256 = vmatmul.mubr.f32.gmra.mrb[0].mxu0 %v3056
        %v3257 = vpop.f32.mrb[0].mxu0
        %v3258 = vadd.f32 0.0, %v3257
        %v3259 = vpop.f32.mrb[0].mxu0
        %3260 = vmatprep.mubr.f32.mxu0 0.0
        %3261 = vmatmul.mubr.f32.gmra.mrb[0].mxu0 %v3059
        %v3262 = vpop.f32.mrb[0].mxu0
        %v3263 = vadd.f32 0.0, %v3262
        %v3264 = vpop.f32.mrb[0].mxu0
        %3265 = vmatprep.mubr.f32.mxu0 0.0
        %3266 = vmatmul.mubr.f32.gmra.mrb[0].mxu0 %v3062
        %v3267 = vpop.f32.mrb[0].mxu0
        %v3268 = vadd.f32 0.0, %v3267
        %v3269 = vpop.f32.mrb[0].mxu0
        %3270 = vmatprep.mubr.f32.mxu0 0.0
        %3271 = vmatmul.mubr.f32.gmra.mrb[0].mxu0 %v3065
        %v3272 = vpop.f32.mrb[0].mxu0
        %v3273 = vadd.f32 0.0, %v3272
        %v3274 = vpop.f32.mrb[0].mxu0
        %3275 = vmatprep.mubr.f32.mxu0 0.0
        %3276 = vmatmul.mubr.f32.gmra.mrb[0].mxu0 %v3068
        %v3277 = vpop.f32.mrb[0].mxu0
        %v3278 = vadd.f32 0.0, %v3277
        %v3279 = vpop.f32.mrb[0].mxu0
        %3280 = vmatprep.mubr.f32.mxu0 0.0
        %3281 = vmatmul.mubr.f32.gmra.mrb[0].mxu0 %v3071
        %v3282 = vpop.f32.mrb[0].mxu0
        %v3283 = vadd.f32 0.0, %v3282
        %v3284 = vpop.f32.mrb[0].mxu0
        %3285 = vmatprep.mubr.f32.mxu0 0.0
        %3286 = vmatmul.mubr.f32.gmra.mrb[0].mxu0 %v3074
        %v3287 = vpop.f32.mrb[0].mxu0
        %v3288 = vadd.f32 0.0, %v3287
        %v3289 = vpop.f32.mrb[0].mxu0
        %3290 = vmatprep.mubr.f32.mxu0 0.0
        %3291 = vmatmul.mubr.f32.gmra.mrb[0].mxu0 %v3077
        %v3292 = vpop.f32.mrb[0].mxu0
        %v3293 = vadd.f32 0.0, %v3292
        %v3294 = vpop.f32.mrb[0].mxu0
        %3295 = vmatprep.mubr.f32.mxu0 0.0
        %3296 = vmatmul.mubr.f32.gmra.mrb[0].mxu0 %v3080
        %v3297 = vpop.f32.mrb[0].mxu0
        %v3298 = vadd.f32 0.0, %v3297
        %v3299 = vpop.f32.mrb[0].mxu0
        %3300 = vmatprep.mubr.f32.mxu0 0.0
        %3301 = vmatmul.mubr.f32.gmra.mrb[0].mxu0 %v3083
        %v3302 = vpop.f32.mrb[0].mxu0
        %v3303 = vadd.f32 0.0, %v3302
        %v3304 = vpop.f32.mrb[0].mxu0
        %3305 = vmatprep.mubr.f32.mxu0 0.0
        %3306 = vmatmul.mubr.f32.gmra.mrb[0].mxu0 %v3086
        %v3307 = vpop.f32.mrb[0].mxu0
        %v3308 = vadd.f32 0.0, %v3307
        %v3309 = vpop.f32.mrb[0].mxu0
        %3310 = vmatprep.mubr.f32.mxu0 0.0
        %3311 = vmatmul.mubr.f32.gmra.mrb[0].mxu0 %v3089
        %v3312 = vpop.f32.mrb[0].mxu0
        %v3313 = vadd.f32 0.0, %v3312
        %v3314 = vpop.f32.mrb[0].mxu0
        %3315 = vmatprep.mubr.f32.mxu0 0.0
        %3316 = vmatmul.mubr.f32.gmra.mrb[0].mxu0 %v3092
        %v3317 = vpop.f32.mrb[0].mxu0
        %v3318 = vadd.f32 0.0, %v3317
        %v3319 = vpop.f32.mrb[0].mxu0
        %3320 = vmatprep.mubr.f32.mxu0 0.0
        %3321 = vmatmul.mubr.f32.gmra.mrb[0].mxu0 %v3095
        %v3322 = vpop.f32.mrb[0].mxu0
        %v3323 = vadd.f32 0.0, %v3322
        %v3324 = vpop.f32.mrb[0].mxu0
        %3325 = vmatprep.mubr.f32.mxu0 0.0
        %3326 = vmatmul.mubr.f32.gmra.mrb[0].mxu0 %v3098
        %v3327 = vpop.f32.mrb[0].mxu0
        %v3328 = vadd.f32 0.0, %v3327
        %v3329 = vpop.f32.mrb[0].mxu0
        %3330 = vmatprep.mubr.f32.mxu0 0.0
        %3331 = vmatmul.mubr.f32.gmra.mrb[0].mxu0 %v3101
        %v3332 = vpop.f32.mrb[0].mxu0
        %v3333 = vadd.f32 0.0, %v3332
        %v3334 = vpop.f32.mrb[0].mxu0
        %3335 = vmatprep.mubr.f32.mxu0 0.0
        %3336 = vmatmul.mubr.f32.gmra.mrb[0].mxu0 %v3104
        %v3337 = vpop.f32.mrb[0].mxu0
        %v3338 = vadd.f32 0.0, %v3337
        %v3339 = vpop.f32.mrb[0].mxu0
        %3340 = vmatprep.mubr.f32.mxu0 0.0
        %3341 = vmatmul.mubr.f32.gmra.mrb[0].mxu0 %v3107
        %v3342 = vpop.f32.mrb[0].mxu0
        %v3343 = vadd.f32 0.0, %v3342
        %v3344 = vpop.f32.mrb[0].mxu0
        %3345 = vmatprep.mubr.f32.mxu0 0.0
        %3346 = vmatmul.mubr.f32.gmra.mrb[0].mxu0 %v3110
        %v3347 = vpop.f32.mrb[0].mxu0
        %v3348 = vadd.f32 0.0, %v3347
        %v3349 = vpop.f32.mrb[0].mxu0
        %3350 = vmatprep.mubr.f32.mxu0 0.0
        %3351 = vmatmul.mubr.f32.gmra.mrb[0].mxu0 %v3113
        %v3352 = vpop.f32.mrb[0].mxu0
        %v3353 = vadd.f32 0.0, %v3352
        %v3354 = vpop.f32.mrb[0].mxu0
        %3355 = vmatprep.mubr.f32.mxu0 0.0
        %3356 = vmatmul.mubr.f32.gmra.mrb[0].mxu0 %v3116
        %v3357 = vpop.f32.mrb[0].mxu0
        %v3358 = vadd.f32 0.0, %v3357
        %v3359 = vpop.f32.mrb[0].mxu0
        %3360 = vmatprep.mubr.f32.mxu0 0.0
        %3361 = vmatmul.mubr.f32.gmra.mrb[0].mxu0 %v3119
        %v3362 = vpop.f32.mrb[0].mxu0
        %v3363 = vadd.f32 0.0, %v3362
        %v3364 = vpop.f32.mrb[0].mxu0
        %3365 = vdwg.mxu0
        %v3366 = vadd.f32 %v3188, 0.0
        %v3367 = vadd.f32 %v3193, 0.0
        %v3368 = vadd.f32 %v3198, 0.0
        %v3369 = vadd.f32 %v3203, 0.0
        %v3370 = vadd.f32 %v3208, 0.0
        %v3371 = vadd.f32 %v3213, 0.0
        %v3372 = vadd.f32 %v3218, 0.0
        %v3373 = vadd.f32 %v3223, 0.0
        %v3374 = vadd.f32 %v3228, 0.0
        %v3375 = vadd.f32 %v3233, 0.0
        %v3376 = vadd.f32 %v3238, 0.0
        %v3377 = vadd.f32 %v3243, 0.0
        %v3378 = vadd.f32 %v3248, 0.0
        %v3379 = vadd.f32 %v3253, 0.0
        %v3380 = vadd.f32 %v3258, 0.0
        %v3381 = vadd.f32 %v3263, 0.0
        %v3382 = vadd.f32 %v3268, 0.0
        %v3383 = vadd.f32 %v3273, 0.0
        %v3384 = vadd.f32 %v3278, 0.0
        %v3385 = vadd.f32 %v3283, 0.0
        %v3386 = vadd.f32 %v3288, 0.0
        %v3387 = vadd.f32 %v3293, 0.0
        %v3388 = vadd.f32 %v3298, 0.0
        %v3389 = vadd.f32 %v3303, 0.0
        %v3390 = vadd.f32 %v3308, 0.0
        %v3391 = vadd.f32 %v3313, 0.0
        %v3392 = vadd.f32 %v3318, 0.0
        %v3393 = vadd.f32 %v3323, 0.0
        %v3394 = vadd.f32 %v3328, 0.0
        %v3395 = vadd.f32 %v3333, 0.0
        %v3396 = vadd.f32 %v3338, 0.0
        %v3397 = vadd.f32 %v3343, 0.0
        %3430 = vrot.lane.b32.xlu0 %v3198, 120
        %v3431 = vpop.permute.xlu0 %3430
        %3432 = vrot.lane.b32.xlu0 %v3203, 120
        %v3433 = vpop.permute.xlu0 %3432
        %3434 = vrot.lane.b32.xlu0 %v3208, 120
        %v3435 = vpop.permute.xlu0 %3434
        %3436 = vrot.lane.b32.xlu0 %v3213, 120
        %v3437 = vpop.permute.xlu0 %3436
        %3438 = vrot.lane.b32.xlu0 %v3218, 120
        %v3439 = vpop.permute.xlu0 %3438
        %3440 = vrot.lane.b32.xlu0 %v3223, 120
        %v3441 = vpop.permute.xlu0 %3440
        %3442 = vrot.lane.b32.xlu0 %v3228, 120
        %v3443 = vpop.permute.xlu0 %3442
        %3444 = vrot.lane.b32.xlu0 %v3233, 120
        %v3445 = vpop.permute.xlu0 %3444
        %3446 = vrot.lane.b32.xlu0 %v3238, 120
        %v3447 = vpop.permute.xlu0 %3446
        %3448 = vrot.lane.b32.xlu0 %v3243, 120
        %v3449 = vpop.permute.xlu0 %3448
        %3450 = vrot.lane.b32.xlu0 %v3248, 120
        %v3451 = vpop.permute.xlu0 %3450
        %3452 = vrot.lane.b32.xlu0 %v3253, 120
        %v3453 = vpop.permute.xlu0 %3452
        %3454 = vrot.lane.b32.xlu0 %v3258, 120
        %v3455 = vpop.permute.xlu0 %3454
        %3456 = vrot.lane.b32.xlu0 %v3263, 120
        %v3457 = vpop.permute.xlu0 %3456
        %3458 = vrot.lane.b32.xlu0 %v3268, 120
        %v3459 = vpop.permute.xlu0 %3458
        %3460 = vrot.lane.b32.xlu0 %v3273, 120
        %v3461 = vpop.permute.xlu0 %3460
        %3462 = vrot.lane.b32.xlu0 %v3278, 120
        %v3463 = vpop.permute.xlu0 %3462
        %3464 = vrot.lane.b32.xlu0 %v3283, 120
        %v3465 = vpop.permute.xlu0 %3464
        %3466 = vrot.lane.b32.xlu0 %v3288, 120
        %v3467 = vpop.permute.xlu0 %3466
        %3468 = vrot.lane.b32.xlu0 %v3293, 120
        %v3469 = vpop.permute.xlu0 %3468
        %3470 = vrot.lane.b32.xlu0 %v3298, 120
        %v3471 = vpop.permute.xlu0 %3470
        %3472 = vrot.lane.b32.xlu0 %v3303, 120
        %v3473 = vpop.permute.xlu0 %3472
        %3474 = vrot.lane.b32.xlu0 %v3308, 120
        %v3475 = vpop.permute.xlu0 %3474
        %3476 = vrot.lane.b32.xlu0 %v3313, 120
        %v3477 = vpop.permute.xlu0 %3476
        %3478 = vrot.lane.b32.xlu0 %v3318, 120
        %v3479 = vpop.permute.xlu0 %3478
        %3480 = vrot.lane.b32.xlu0 %v3323, 120
        %v3481 = vpop.permute.xlu0 %3480
        %3482 = vrot.lane.b32.xlu0 %v3328, 120
        %v3483 = vpop.permute.xlu0 %3482
        %3484 = vrot.lane.b32.xlu0 %v3333, 120
        %v3485 = vpop.permute.xlu0 %3484
        %3486 = vrot.lane.b32.xlu0 %v3338, 120
        %v3487 = vpop.permute.xlu0 %3486
        %3488 = vrot.lane.b32.xlu0 %v3343, 120
        %v3489 = vpop.permute.xlu0 %3488
        %3490 = vrot.lane.b32.xlu0 %v3348, 120
        %v3491 = vpop.permute.xlu0 %3490
        %3492 = vrot.lane.b32.xlu0 %v3353, 120
        %v3493 = vpop.permute.xlu0 %3492
        %v3526 = vadd.f32 %v3366, %v3431
        %v3527 = vadd.f32 %v3367, %v3433
        %v3528 = vadd.f32 %v3368, %v3435
        %v3529 = vadd.f32 %v3369, %v3437
        %v3530 = vadd.f32 %v3370, %v3439
        %v3531 = vadd.f32 %v3371, %v3441
        %v3532 = vadd.f32 %v3372, %v3443
        %v3533 = vadd.f32 %v3373, %v3445
        %v3534 = vadd.f32 %v3374, %v3447
        %v3535 = vadd.f32 %v3375, %v3449
        %v3536 = vadd.f32 %v3376, %v3451
        %v3537 = vadd.f32 %v3377, %v3453
        %v3538 = vadd.f32 %v3378, %v3455
        %v3539 = vadd.f32 %v3379, %v3457
        %v3540 = vadd.f32 %v3380, %v3459
        %v3541 = vadd.f32 %v3381, %v3461
        %v3542 = vadd.f32 %v3382, %v3463
        %v3543 = vadd.f32 %v3383, %v3465
        %v3544 = vadd.f32 %v3384, %v3467
        %v3545 = vadd.f32 %v3385, %v3469
        %v3546 = vadd.f32 %v3386, %v3471
        %v3547 = vadd.f32 %v3387, %v3473
        %v3548 = vadd.f32 %v3388, %v3475
        %v3549 = vadd.f32 %v3389, %v3477
        %v3550 = vadd.f32 %v3390, %v3479
        %v3551 = vadd.f32 %v3391, %v3481
        %v3552 = vadd.f32 %v3392, %v3483
        %v3553 = vadd.f32 %v3393, %v3485
        %v3554 = vadd.f32 %v3394, %v3487
        %v3555 = vadd.f32 %v3395, %v3489
        %v3556 = vadd.f32 %v3396, %v3491
        %v3557 = vadd.f32 %v3397, %v3493
        %3560 = vrot.lane.b32.xlu0 %v3208, 112
        %v3561 = vpop.permute.xlu0 %3560
        %3562 = vrot.lane.b32.xlu0 %v3213, 112
        %v3563 = vpop.permute.xlu0 %3562
        %3564 = vrot.lane.b32.xlu0 %v3218, 112
        %v3565 = vpop.permute.xlu0 %3564
        %3566 = vrot.lane.b32.xlu0 %v3223, 112
        %v3567 = vpop.permute.xlu0 %3566
        %3568 = vrot.lane.b32.xlu0 %v3228, 112
        %v3569 = vpop.permute.xlu0 %3568
        %3570 = vrot.lane.b32.xlu0 %v3233, 112
        %v3571 = vpop.permute.xlu0 %3570
        %3572 = vrot.lane.b32.xlu0 %v3238, 112
        %v3573 = vpop.permute.xlu0 %3572
        %3574 = vrot.lane.b32.xlu0 %v3243, 112
        %v3575 = vpop.permute.xlu0 %3574
        %3576 = vrot.lane.b32.xlu0 %v3248, 112
        %v3577 = vpop.permute.xlu0 %3576
        %3578 = vrot.lane.b32.xlu0 %v3253, 112
        %v3579 = vpop.permute.xlu0 %3578
        %3580 = vrot.lane.b32.xlu0 %v3258, 112
        %v3581 = vpop.permute.xlu0 %3580
        %3582 = vrot.lane.b32.xlu0 %v3263, 112
        %v3583 = vpop.permute.xlu0 %3582
        %3584 = vrot.lane.b32.xlu0 %v3268, 112
        %v3585 = vpop.permute.xlu0 %3584
        %3586 = vrot.lane.b32.xlu0 %v3273, 112
        %v3587 = vpop.permute.xlu0 %3586
        %3588 = vrot.lane.b32.xlu0 %v3278, 112
        %v3589 = vpop.permute.xlu0 %3588
        %3590 = vrot.lane.b32.xlu0 %v3283, 112
        %v3591 = vpop.permute.xlu0 %3590
        %3592 = vrot.lane.b32.xlu0 %v3288, 112
        %v3593 = vpop.permute.xlu0 %3592
        %3594 = vrot.lane.b32.xlu0 %v3293, 112
        %v3595 = vpop.permute.xlu0 %3594
        %3596 = vrot.lane.b32.xlu0 %v3298, 112
        %v3597 = vpop.permute.xlu0 %3596
        %3598 = vrot.lane.b32.xlu0 %v3303, 112
        %v3599 = vpop.permute.xlu0 %3598
        %3600 = vrot.lane.b32.xlu0 %v3308, 112
        %v3601 = vpop.permute.xlu0 %3600
        %3602 = vrot.lane.b32.xlu0 %v3313, 112
        %v3603 = vpop.permute.xlu0 %3602
        %3604 = vrot.lane.b32.xlu0 %v3318, 112
        %v3605 = vpop.permute.xlu0 %3604
        %3606 = vrot.lane.b32.xlu0 %v3323, 112
        %v3607 = vpop.permute.xlu0 %3606
        %3608 = vrot.lane.b32.xlu0 %v3328, 112
        %v3609 = vpop.permute.xlu0 %3608
        %3610 = vrot.lane.b32.xlu0 %v3333, 112
        %v3611 = vpop.permute.xlu0 %3610
        %3612 = vrot.lane.b32.xlu0 %v3338, 112
        %v3613 = vpop.permute.xlu0 %3612
        %3614 = vrot.lane.b32.xlu0 %v3343, 112
        %v3615 = vpop.permute.xlu0 %3614
        %3616 = vrot.lane.b32.xlu0 %v3348, 112
        %v3617 = vpop.permute.xlu0 %3616
        %3618 = vrot.lane.b32.xlu0 %v3353, 112
        %v3619 = vpop.permute.xlu0 %3618
        %3620 = vrot.lane.b32.xlu0 %v3358, 112
        %v3621 = vpop.permute.xlu0 %3620
        %3622 = vrot.lane.b32.xlu0 %v3363, 112
        %v3623 = vpop.permute.xlu0 %3622
        %v3656 = vadd.f32 %v3526, %v3561
        %v3657 = vadd.f32 %v3527, %v3563
        %v3658 = vadd.f32 %v3528, %v3565
        %v3659 = vadd.f32 %v3529, %v3567
        %v3660 = vadd.f32 %v3530, %v3569
        %v3661 = vadd.f32 %v3531, %v3571
        %v3662 = vadd.f32 %v3532, %v3573
        %v3663 = vadd.f32 %v3533, %v3575
        %v3664 = vadd.f32 %v3534, %v3577
        %v3665 = vadd.f32 %v3535, %v3579
        %v3666 = vadd.f32 %v3536, %v3581
        %v3667 = vadd.f32 %v3537, %v3583
        %v3668 = vadd.f32 %v3538, %v3585
        %v3669 = vadd.f32 %v3539, %v3587
        %v3670 = vadd.f32 %v3540, %v3589
        %v3671 = vadd.f32 %v3541, %v3591
        %v3672 = vadd.f32 %v3542, %v3593
        %v3673 = vadd.f32 %v3543, %v3595
        %v3674 = vadd.f32 %v3544, %v3597
        %v3675 = vadd.f32 %v3545, %v3599
        %v3676 = vadd.f32 %v3546, %v3601
        %v3677 = vadd.f32 %v3547, %v3603
        %v3678 = vadd.f32 %v3548, %v3605
        %v3679 = vadd.f32 %v3549, %v3607
        %v3680 = vadd.f32 %v3550, %v3609
        %v3681 = vadd.f32 %v3551, %v3611
        %v3682 = vadd.f32 %v3552, %v3613
        %v3683 = vadd.f32 %v3553, %v3615
        %v3684 = vadd.f32 %v3554, %v3617
        %v3685 = vadd.f32 %v3555, %v3619
        %v3686 = vadd.f32 %v3556, %v3621
        %v3687 = vadd.f32 %v3557, %v3623
        %v3688 = vld [vmem:[#allocation3 + $0x1] sm:$0xff]
        %v3689 = vld [vmem:[#allocation3 + $0x9] sm:$0xff]
        %v3690 = vld [vmem:[#allocation3 + $0x19] sm:$0xff]
        %v3691 = vld [vmem:[#allocation3 + $0x21] sm:$0xff]
        %v3692 = vld [vmem:[#allocation3 + $0x31] sm:$0xff]
        %v3693 = vld [vmem:[#allocation3 + $0x39] sm:$0xff]
        %v3694 = vld [vmem:[#allocation3 + $0x49] sm:$0xff]
        %v3695 = vld [vmem:[#allocation3 + $0x51] sm:$0xff]
        %v3696 = vld [vmem:[#allocation3 + $0x61] sm:$0xff]
        %v3697 = vld [vmem:[#allocation3 + $0x69] sm:$0xff]
        %v3698 = vld [vmem:[#allocation3 + $0x79] sm:$0xff]
        %v3699 = vld [vmem:[#allocation3 + $0x81] sm:$0xff]
        %v3700 = vld [vmem:[#allocation3 + $0x91] sm:$0xff]
        %v3701 = vld [vmem:[#allocation3 + $0x99] sm:$0xff]
        %v3702 = vld [vmem:[#allocation3 + $0xa9] sm:$0xff]
        %v3703 = vld [vmem:[#allocation3 + $0xb1] sm:$0xff]
        %v3704 = vld [vmem:[#allocation3 + $0xc1] sm:$0xff]
        %v3705 = vld [vmem:[#allocation3 + $0xc9] sm:$0xff]
        %v3706 = vld [vmem:[#allocation3 + $0xd9] sm:$0xff]
        %v3707 = vld [vmem:[#allocation3 + $0xe1] sm:$0xff]
        %v3708 = vld [vmem:[#allocation3 + $0xf1] sm:$0xff]
        %v3709 = vld [vmem:[#allocation3 + $0xf9] sm:$0xff]
        %v3710 = vld [vmem:[#allocation3 + $0x109] sm:$0xff]
        %v3711 = vld [vmem:[#allocation3 + $0x111] sm:$0xff]
        %v3712 = vld [vmem:[#allocation3 + $0x121] sm:$0xff]
        %v3713 = vld [vmem:[#allocation3 + $0x129] sm:$0xff]
        %v3714 = vld [vmem:[#allocation3 + $0x139] sm:$0xff]
        %v3715 = vld [vmem:[#allocation3 + $0x141] sm:$0xff]
        %v3716 = vld [vmem:[#allocation3 + $0x151] sm:$0xff]
        %v3717 = vld [vmem:[#allocation3 + $0x159] sm:$0xff]
        %v3718 = vld [vmem:[#allocation3 + $0x169] sm:$0xff]
        %v3719 = vld [vmem:[#allocation3 + $0x171] sm:$0xff]
        %v3720 = vld [vmem:[#allocation3 + $0x181] sm:$0xff]
        %v3721 = vld [vmem:[#allocation3 + $0x189] sm:$0xff]
        %v3722 = vld [vmem:[#allocation3 + $0x199] sm:$0xff]
        %v3723 = vld [vmem:[#allocation3 + $0x1a1] sm:$0xff]
        %s3724 = scalar_lea.vmem %s5, 8
        %v3725 = vld [vmem:[%s3724] sm:$0xff]
        %v3727 = vsel %vm2887, %v3688, 0
        %v3730 = vsel %vm2887, %v3689, 0
        %v3733 = vsel %vm2887, %v3690, 0
        %v3736 = vsel %vm2887, %v3691, 0
        %v3739 = vsel %vm2887, %v3692, 0
        %v3742 = vsel %vm2887, %v3693, 0
        %v3745 = vsel %vm2887, %v3694, 0
        %v3748 = vsel %vm2887, %v3695, 0
        %v3751 = vsel %vm2887, %v3696, 0
        %v3754 = vsel %vm2887, %v3697, 0
        %v3757 = vsel %vm2887, %v3698, 0
        %v3760 = vsel %vm2887, %v3699, 0
        %v3763 = vsel %vm2887, %v3700, 0
        %v3766 = vsel %vm2887, %v3701, 0
        %v3769 = vsel %vm2887, %v3702, 0
        %v3772 = vsel %vm2887, %v3703, 0
        %v3775 = vsel %vm2887, %v3704, 0
        %v3778 = vsel %vm2887, %v3705, 0
        %v3781 = vsel %vm2887, %v3706, 0
        %v3784 = vsel %vm2887, %v3707, 0
        %v3787 = vsel %vm2887, %v3708, 0
        %v3790 = vsel %vm2887, %v3709, 0
        %v3793 = vsel %vm2887, %v3710, 0
        %v3796 = vsel %vm2887, %v3711, 0
        %v3799 = vsel %vm2887, %v3712, 0
        %v3802 = vsel %vm2887, %v3713, 0
        %v3805 = vsel %vm2887, %v3714, 0
        %v3808 = vsel %vm2887, %v3715, 0
        %v3811 = vsel %vm2887, %v3716, 0
        %v3814 = vsel %vm2887, %v3717, 0
        %v3817 = vsel %vm2887, %v3718, 0
        %v3820 = vsel %vm2887, %v3719, 0
        %v3823 = vsel %vm2887, %v3720, 0
        %v3826 = vsel %vm2887, %v3721, 0
        %v3829 = vsel %vm2887, %v3722, 0
        %v3832 = vsel %vm2887, %v3723, 0
        %3834 = vmatprep.subr.mxu0 0.0
        %3835 = vmatpush1.msra.mxu0 %v3725
        %3836 = vmatprep.subr.mxu0 0.0
        %3837 = vmatpush1.msra.mxu0 0.0
        %3838 = vmatprep.subr.mxu0 0.0
        %3839 = vmatpush1.msra.mxu0 0.0
        %3840 = vmatprep.subr.mxu0 0.0
        %3841 = vmatpush1.msra.mxu0 0.0
        %3842 = vmatprep.subr.mxu0 0.0
        %3843 = vmatpush1.msra.mxu0 0.0
        %3844 = vmatprep.subr.mxu0 0.0
        %3845 = vmatpush1.msra.mxu0 0.0
        %3846 = vmatprep.subr.mxu0 0.0
        %3847 = vmatpush1.msra.mxu0 0.0
        %3848 = vmatprep.subr.mxu0 0.0
        %3849 = vmatpush1.msra.mxu0 0.0
        %3850 = vmatprep.subr.mxu0 0.0
        %3851 = vmatpush1.msra.mxu0 0.0
        %3852 = vmatprep.subr.mxu0 0.0
        %3853 = vmatpush1.msra.mxu0 0.0
        %3854 = vmatprep.subr.mxu0 0.0
        %3855 = vmatpush1.msra.mxu0 0.0
        %3856 = vmatprep.subr.mxu0 0.0
        %3857 = vmatpush1.msra.mxu0 0.0
        %3858 = vmatprep.subr.mxu0 0.0
        %3859 = vmatpush1.msra.mxu0 0.0
        %3860 = vmatprep.subr.mxu0 0.0
        %3861 = vmatpush1.msra.mxu0 0.0
        %3862 = vmatprep.subr.mxu0 0.0
        %3863 = vmatpush1.msra.mxu0 0.0
        %3864 = vmatprep.subr.mxu0 0.0
        %3865 = vmatpush1.msra.mxu0 0.0
        %3866 = vmatprep.subr.mxu0 0.0
        %3867 = vmatpush1.msra.mxu0 0.0
        %3868 = vmatprep.subr.mxu0 0.0
        %3869 = vmatpush1.msra.mxu0 0.0
        %3870 = vmatprep.subr.mxu0 0.0
        %3871 = vmatpush1.msra.mxu0 0.0
        %3872 = vmatprep.subr.mxu0 0.0
        %3873 = vmatpush1.msra.mxu0 0.0
        %3874 = vmatprep.subr.mxu0 0.0
        %3875 = vmatpush1.msra.mxu0 0.0
        %3876 = vmatprep.subr.mxu0 0.0
        %3877 = vmatpush1.msra.mxu0 0.0
        %3878 = vmatprep.subr.mxu0 0.0
        %3879 = vmatpush1.msra.mxu0 0.0
        %3880 = vmatprep.subr.mxu0 0.0
        %3881 = vmatpush1.msra.mxu0 0.0
        %3882 = vmatprep.subr.mxu0 0.0
        %3883 = vmatpush1.msra.mxu0 0.0
        %3884 = vmatprep.subr.mxu0 0.0
        %3885 = vmatpush1.msra.mxu0 0.0
        %3886 = vmatprep.subr.mxu0 0.0
        %3887 = vmatpush1.msra.mxu0 0.0
        %3888 = vmatprep.subr.mxu0 0.0
        %3889 = vmatpush1.msra.mxu0 0.0
        %3890 = vmatprep.subr.mxu0 0.0
        %3891 = vmatpush1.msra.mxu0 0.0
        %3892 = vmatprep.subr.mxu0 0.0
        %3893 = vmatpush1.msra.mxu0 0.0
        %3894 = vmatprep.subr.mxu0 0.0
        %3895 = vmatpush1.msra.mxu0 0.0
        %3896 = vmatprep.subr.mxu0 0.0
        %3897 = vmatpush1.msra.mxu0 0.0
        %3898 = vmatprep.mubr.f32.mxu0 0.0
        %3899 = vmatmul.mubr.f32.gmra.mrb[0].mxu0 %v3727
        %v3900 = vpop.f32.mrb[0].mxu0
        %v3901 = vadd.f32 0.0, %v3900
        %v3902 = vpop.f32.mrb[0].mxu0
        %3903 = vmatprep.mubr.f32.mxu0 0.0
        %3904 = vmatmul.mubr.f32.gmra.mrb[0].mxu0 %v3730
        %v3905 = vpop.f32.mrb[0].mxu0
        %v3906 = vadd.f32 0.0, %v3905
        %v3907 = vpop.f32.mrb[0].mxu0
        %3908 = vmatprep.mubr.f32.mxu0 0.0
        %3909 = vmatmul.mubr.f32.gmra.mrb[0].mxu0 %v3733
        %v3910 = vpop.f32.mrb[0].mxu0
        %v3911 = vadd.f32 0.0, %v3910
        %v3912 = vpop.f32.mrb[0].mxu0
        %3913 = vmatprep.mubr.f32.mxu0 0.0
        %3914 = vmatmul.mubr.f32.gmra.mrb[0].mxu0 %v3736
        %v3915 = vpop.f32.mrb[0].mxu0
        %v3916 = vadd.f32 0.0, %v3915
        %v3917 = vpop.f32.mrb[0].mxu0
        %3918 = vmatprep.mubr.f32.mxu0 0.0
        %3919 = vmatmul.mubr.f32.gmra.mrb[0].mxu0 %v3739
        %v3920 = vpop.f32.mrb[0].mxu0
        %v3921 = vadd.f32 0.0, %v3920
        %v3922 = vpop.f32.mrb[0].mxu0
        %3923 = vmatprep.mubr.f32.mxu0 0.0
        %3924 = vmatmul.mubr.f32.gmra.mrb[0].mxu0 %v3742
        %v3925 = vpop.f32.mrb[0].mxu0
        %v3926 = vadd.f32 0.0, %v3925
        %v3927 = vpop.f32.mrb[0].mxu0
        %3928 = vmatprep.mubr.f32.mxu0 0.0
        %3929 = vmatmul.mubr.f32.gmra.mrb[0].mxu0 %v3745
        %v3930 = vpop.f32.mrb[0].mxu0
        %v3931 = vadd.f32 0.0, %v3930
        %v3932 = vpop.f32.mrb[0].mxu0
        %3933 = vmatprep.mubr.f32.mxu0 0.0
        %3934 = vmatmul.mubr.f32.gmra.mrb[0].mxu0 %v3748
        %v3935 = vpop.f32.mrb[0].mxu0
        %v3936 = vadd.f32 0.0, %v3935
        %v3937 = vpop.f32.mrb[0].mxu0
        %3938 = vmatprep.mubr.f32.mxu0 0.0
        %3939 = vmatmul.mubr.f32.gmra.mrb[0].mxu0 %v3751
        %v3940 = vpop.f32.mrb[0].mxu0
        %v3941 = vadd.f32 0.0, %v3940
        %v3942 = vpop.f32.mrb[0].mxu0
        %3943 = vmatprep.mubr.f32.mxu0 0.0
        %3944 = vmatmul.mubr.f32.gmra.mrb[0].mxu0 %v3754
        %v3945 = vpop.f32.mrb[0].mxu0
        %v3946 = vadd.f32 0.0, %v3945
        %v3947 = vpop.f32.mrb[0].mxu0
        %3948 = vmatprep.mubr.f32.mxu0 0.0
        %3949 = vmatmul.mubr.f32.gmra.mrb[0].mxu0 %v3757
        %v3950 = vpop.f32.mrb[0].mxu0
        %v3951 = vadd.f32 0.0, %v3950
        %v3952 = vpop.f32.mrb[0].mxu0
        %3953 = vmatprep.mubr.f32.mxu0 0.0
        %3954 = vmatmul.mubr.f32.gmra.mrb[0].mxu0 %v3760
        %v3955 = vpop.f32.mrb[0].mxu0
        %v3956 = vadd.f32 0.0, %v3955
        %v3957 = vpop.f32.mrb[0].mxu0
        %3958 = vmatprep.mubr.f32.mxu0 0.0
        %3959 = vmatmul.mubr.f32.gmra.mrb[0].mxu0 %v3763
        %v3960 = vpop.f32.mrb[0].mxu0
        %v3961 = vadd.f32 0.0, %v3960
        %v3962 = vpop.f32.mrb[0].mxu0
        %3963 = vmatprep.mubr.f32.mxu0 0.0
        %3964 = vmatmul.mubr.f32.gmra.mrb[0].mxu0 %v3766
        %v3965 = vpop.f32.mrb[0].mxu0
        %v3966 = vadd.f32 0.0, %v3965
        %v3967 = vpop.f32.mrb[0].mxu0
        %3968 = vmatprep.mubr.f32.mxu0 0.0
        %3969 = vmatmul.mubr.f32.gmra.mrb[0].mxu0 %v3769
        %v3970 = vpop.f32.mrb[0].mxu0
        %v3971 = vadd.f32 0.0, %v3970
        %v3972 = vpop.f32.mrb[0].mxu0
        %3973 = vmatprep.mubr.f32.mxu0 0.0
        %3974 = vmatmul.mubr.f32.gmra.mrb[0].mxu0 %v3772
        %v3975 = vpop.f32.mrb[0].mxu0
        %v3976 = vadd.f32 0.0, %v3975
        %v3977 = vpop.f32.mrb[0].mxu0
        %3978 = vmatprep.mubr.f32.mxu0 0.0
        %3979 = vmatmul.mubr.f32.gmra.mrb[0].mxu0 %v3775
        %v3980 = vpop.f32.mrb[0].mxu0
        %v3981 = vadd.f32 0.0, %v3980
        %v3982 = vpop.f32.mrb[0].mxu0
        %3983 = vmatprep.mubr.f32.mxu0 0.0
        %3984 = vmatmul.mubr.f32.gmra.mrb[0].mxu0 %v3778
        %v3985 = vpop.f32.mrb[0].mxu0
        %v3986 = vadd.f32 0.0, %v3985
        %v3987 = vpop.f32.mrb[0].mxu0
        %3988 = vmatprep.mubr.f32.mxu0 0.0
        %3989 = vmatmul.mubr.f32.gmra.mrb[0].mxu0 %v3781
        %v3990 = vpop.f32.mrb[0].mxu0
        %v3991 = vadd.f32 0.0, %v3990
        %v3992 = vpop.f32.mrb[0].mxu0
        %3993 = vmatprep.mubr.f32.mxu0 0.0
        %3994 = vmatmul.mubr.f32.gmra.mrb[0].mxu0 %v3784
        %v3995 = vpop.f32.mrb[0].mxu0
        %v3996 = vadd.f32 0.0, %v3995
        %v3997 = vpop.f32.mrb[0].mxu0
        %3998 = vmatprep.mubr.f32.mxu0 0.0
        %3999 = vmatmul.mubr.f32.gmra.mrb[0].mxu0 %v3787
        %v4000 = vpop.f32.mrb[0].mxu0
        %v4001 = vadd.f32 0.0, %v4000
        %v4002 = vpop.f32.mrb[0].mxu0
        %4003 = vmatprep.mubr.f32.mxu0 0.0
        %4004 = vmatmul.mubr.f32.gmra.mrb[0].mxu0 %v3790
        %v4005 = vpop.f32.mrb[0].mxu0
        %v4006 = vadd.f32 0.0, %v4005
        %v4007 = vpop.f32.mrb[0].mxu0
        %4008 = vmatprep.mubr.f32.mxu0 0.0
        %4009 = vmatmul.mubr.f32.gmra.mrb[0].mxu0 %v3793
        %v4010 = vpop.f32.mrb[0].mxu0
        %v4011 = vadd.f32 0.0, %v4010
        %v4012 = vpop.f32.mrb[0].mxu0
        %4013 = vmatprep.mubr.f32.mxu0 0.0
        %4014 = vmatmul.mubr.f32.gmra.mrb[0].mxu0 %v3796
        %v4015 = vpop.f32.mrb[0].mxu0
        %v4016 = vadd.f32 0.0, %v4015
        %v4017 = vpop.f32.mrb[0].mxu0
        %4018 = vmatprep.mubr.f32.mxu0 0.0
        %4019 = vmatmul.mubr.f32.gmra.mrb[0].mxu0 %v3799
        %v4020 = vpop.f32.mrb[0].mxu0
        %v4021 = vadd.f32 0.0, %v4020
        %v4022 = vpop.f32.mrb[0].mxu0
        %4023 = vmatprep.mubr.f32.mxu0 0.0
        %4024 = vmatmul.mubr.f32.gmra.mrb[0].mxu0 %v3802
        %v4025 = vpop.f32.mrb[0].mxu0
        %v4026 = vadd.f32 0.0, %v4025
        %v4027 = vpop.f32.mrb[0].mxu0
        %4028 = vmatprep.mubr.f32.mxu0 0.0
        %4029 = vmatmul.mubr.f32.gmra.mrb[0].mxu0 %v3805
        %v4030 = vpop.f32.mrb[0].mxu0
        %v4031 = vadd.f32 0.0, %v4030
        %v4032 = vpop.f32.mrb[0].mxu0
        %4033 = vmatprep.mubr.f32.mxu0 0.0
        %4034 = vmatmul.mubr.f32.gmra.mrb[0].mxu0 %v3808
        %v4035 = vpop.f32.mrb[0].mxu0
        %v4036 = vadd.f32 0.0, %v4035
        %v4037 = vpop.f32.mrb[0].mxu0
        %4038 = vmatprep.mubr.f32.mxu0 0.0
        %4039 = vmatmul.mubr.f32.gmra.mrb[0].mxu0 %v3811
        %v4040 = vpop.f32.mrb[0].mxu0
        %v4041 = vadd.f32 0.0, %v4040
        %v4042 = vpop.f32.mrb[0].mxu0
        %4043 = vmatprep.mubr.f32.mxu0 0.0
        %4044 = vmatmul.mubr.f32.gmra.mrb[0].mxu0 %v3814
        %v4045 = vpop.f32.mrb[0].mxu0
        %v4046 = vadd.f32 0.0, %v4045
        %v4047 = vpop.f32.mrb[0].mxu0
        %4048 = vmatprep.mubr.f32.mxu0 0.0
        %4049 = vmatmul.mubr.f32.gmra.mrb[0].mxu0 %v3817
        %v4050 = vpop.f32.mrb[0].mxu0
        %v4051 = vadd.f32 0.0, %v4050
        %v4052 = vpop.f32.mrb[0].mxu0
        %4053 = vmatprep.mubr.f32.mxu0 0.0
        %4054 = vmatmul.mubr.f32.gmra.mrb[0].mxu0 %v3820
        %v4055 = vpop.f32.mrb[0].mxu0
        %v4056 = vadd.f32 0.0, %v4055
        %v4057 = vpop.f32.mrb[0].mxu0
        %4058 = vmatprep.mubr.f32.mxu0 0.0
        %4059 = vmatmul.mubr.f32.gmra.mrb[0].mxu0 %v3823
        %v4060 = vpop.f32.mrb[0].mxu0
        %v4061 = vadd.f32 0.0, %v4060
        %v4062 = vpop.f32.mrb[0].mxu0
        %4063 = vmatprep.mubr.f32.mxu0 0.0
        %4064 = vmatmul.mubr.f32.gmra.mrb[0].mxu0 %v3826
        %v4065 = vpop.f32.mrb[0].mxu0
        %v4066 = vadd.f32 0.0, %v4065
        %v4067 = vpop.f32.mrb[0].mxu0
        %4068 = vmatprep.mubr.f32.mxu0 0.0
        %4069 = vmatmul.mubr.f32.gmra.mrb[0].mxu0 %v3829
        %v4070 = vpop.f32.mrb[0].mxu0
        %v4071 = vadd.f32 0.0, %v4070
        %v4072 = vpop.f32.mrb[0].mxu0
        %4073 = vmatprep.mubr.f32.mxu0 0.0
        %4074 = vmatmul.mubr.f32.gmra.mrb[0].mxu0 %v3832
        %v4075 = vpop.f32.mrb[0].mxu0
        %v4076 = vadd.f32 0.0, %v4075
        %v4077 = vpop.f32.mrb[0].mxu0
        %4078 = vdwg.mxu0
        %v4079 = vadd.f32 %v3656, %v3901
        %v4080 = vadd.f32 %v3657, %v3906
        %v4081 = vadd.f32 %v3658, %v3911
        %v4082 = vadd.f32 %v3659, %v3916
        %v4083 = vadd.f32 %v3660, %v3921
        %v4084 = vadd.f32 %v3661, %v3926
        %v4085 = vadd.f32 %v3662, %v3931
        %v4086 = vadd.f32 %v3663, %v3936
        %v4087 = vadd.f32 %v3664, %v3941
        %v4088 = vadd.f32 %v3665, %v3946
        %v4089 = vadd.f32 %v3666, %v3951
        %v4090 = vadd.f32 %v3667, %v3956
        %v4091 = vadd.f32 %v3668, %v3961
        %v4092 = vadd.f32 %v3669, %v3966
        %v4093 = vadd.f32 %v3670, %v3971
        %v4094 = vadd.f32 %v3671, %v3976
        %v4095 = vadd.f32 %v3672, %v3981
        %v4096 = vadd.f32 %v3673, %v3986
        %v4097 = vadd.f32 %v3674, %v3991
        %v4098 = vadd.f32 %v3675, %v3996
        %v4099 = vadd.f32 %v3676, %v4001
        %v4100 = vadd.f32 %v3677, %v4006
        %v4101 = vadd.f32 %v3678, %v4011
        %v4102 = vadd.f32 %v3679, %v4016
        %v4103 = vadd.f32 %v3680, %v4021
        %v4104 = vadd.f32 %v3681, %v4026
        %v4105 = vadd.f32 %v3682, %v4031
        %v4106 = vadd.f32 %v3683, %v4036
        %v4107 = vadd.f32 %v3684, %v4041
        %v4108 = vadd.f32 %v3685, %v4046
        %v4109 = vadd.f32 %v3686, %v4051
        %v4110 = vadd.f32 %v3687, %v4056
        %4143 = vrot.lane.b32.xlu0 %v3911, 120
        %v4144 = vpop.permute.xlu0 %4143
        %4145 = vrot.lane.b32.xlu0 %v3916, 120
        %v4146 = vpop.permute.xlu0 %4145
        %4147 = vrot.lane.b32.xlu0 %v3921, 120
        %v4148 = vpop.permute.xlu0 %4147
        %4149 = vrot.lane.b32.xlu0 %v3926, 120
        %v4150 = vpop.permute.xlu0 %4149
        %4151 = vrot.lane.b32.xlu0 %v3931, 120
        %v4152 = vpop.permute.xlu0 %4151
        %4153 = vrot.lane.b32.xlu0 %v3936, 120
        %v4154 = vpop.permute.xlu0 %4153
        %4155 = vrot.lane.b32.xlu0 %v3941, 120
        %v4156 = vpop.permute.xlu0 %4155
        %4157 = vrot.lane.b32.xlu0 %v3946, 120
        %v4158 = vpop.permute.xlu0 %4157
        %4159 = vrot.lane.b32.xlu0 %v3951, 120
        %v4160 = vpop.permute.xlu0 %4159
        %4161 = vrot.lane.b32.xlu0 %v3956, 120
        %v4162 = vpop.permute.xlu0 %4161
        %4163 = vrot.lane.b32.xlu0 %v3961, 120
        %v4164 = vpop.permute.xlu0 %4163
        %4165 = vrot.lane.b32.xlu0 %v3966, 120
        %v4166 = vpop.permute.xlu0 %4165
        %4167 = vrot.lane.b32.xlu0 %v3971, 120
        %v4168 = vpop.permute.xlu0 %4167
        %4169 = vrot.lane.b32.xlu0 %v3976, 120
        %v4170 = vpop.permute.xlu0 %4169
        %4171 = vrot.lane.b32.xlu0 %v3981, 120
        %v4172 = vpop.permute.xlu0 %4171
        %4173 = vrot.lane.b32.xlu0 %v3986, 120
        %v4174 = vpop.permute.xlu0 %4173
        %4175 = vrot.lane.b32.xlu0 %v3991, 120
        %v4176 = vpop.permute.xlu0 %4175
        %4177 = vrot.lane.b32.xlu0 %v3996, 120
        %v4178 = vpop.permute.xlu0 %4177
        %4179 = vrot.lane.b32.xlu0 %v4001, 120
        %v4180 = vpop.permute.xlu0 %4179
        %4181 = vrot.lane.b32.xlu0 %v4006, 120
        %v4182 = vpop.permute.xlu0 %4181
        %4183 = vrot.lane.b32.xlu0 %v4011, 120
        %v4184 = vpop.permute.xlu0 %4183
        %4185 = vrot.lane.b32.xlu0 %v4016, 120
        %v4186 = vpop.permute.xlu0 %4185
        %4187 = vrot.lane.b32.xlu0 %v4021, 120
        %v4188 = vpop.permute.xlu0 %4187
        %4189 = vrot.lane.b32.xlu0 %v4026, 120
        %v4190 = vpop.permute.xlu0 %4189
        %4191 = vrot.lane.b32.xlu0 %v4031, 120
        %v4192 = vpop.permute.xlu0 %4191
        %4193 = vrot.lane.b32.xlu0 %v4036, 120
        %v4194 = vpop.permute.xlu0 %4193
        %4195 = vrot.lane.b32.xlu0 %v4041, 120
        %v4196 = vpop.permute.xlu0 %4195
        %4197 = vrot.lane.b32.xlu0 %v4046, 120
        %v4198 = vpop.permute.xlu0 %4197
        %4199 = vrot.lane.b32.xlu0 %v4051, 120
        %v4200 = vpop.permute.xlu0 %4199
        %4201 = vrot.lane.b32.xlu0 %v4056, 120
        %v4202 = vpop.permute.xlu0 %4201
        %4203 = vrot.lane.b32.xlu0 %v4061, 120
        %v4204 = vpop.permute.xlu0 %4203
        %4205 = vrot.lane.b32.xlu0 %v4066, 120
        %v4206 = vpop.permute.xlu0 %4205
        %v4239 = vadd.f32 %v4079, %v4144
        %v4240 = vadd.f32 %v4080, %v4146
        %v4241 = vadd.f32 %v4081, %v4148
        %v4242 = vadd.f32 %v4082, %v4150
        %v4243 = vadd.f32 %v4083, %v4152
        %v4244 = vadd.f32 %v4084, %v4154
        %v4245 = vadd.f32 %v4085, %v4156
        %v4246 = vadd.f32 %v4086, %v4158
        %v4247 = vadd.f32 %v4087, %v4160
        %v4248 = vadd.f32 %v4088, %v4162
        %v4249 = vadd.f32 %v4089, %v4164
        %v4250 = vadd.f32 %v4090, %v4166
        %v4251 = vadd.f32 %v4091, %v4168
        %v4252 = vadd.f32 %v4092, %v4170
        %v4253 = vadd.f32 %v4093, %v4172
        %v4254 = vadd.f32 %v4094, %v4174
        %v4255 = vadd.f32 %v4095, %v4176
        %v4256 = vadd.f32 %v4096, %v4178
        %v4257 = vadd.f32 %v4097, %v4180
        %v4258 = vadd.f32 %v4098, %v4182
        %v4259 = vadd.f32 %v4099, %v4184
        %v4260 = vadd.f32 %v4100, %v4186
        %v4261 = vadd.f32 %v4101, %v4188
        %v4262 = vadd.f32 %v4102, %v4190
        %v4263 = vadd.f32 %v4103, %v4192
        %v4264 = vadd.f32 %v4104, %v4194
        %v4265 = vadd.f32 %v4105, %v4196
        %v4266 = vadd.f32 %v4106, %v4198
        %v4267 = vadd.f32 %v4107, %v4200
        %v4268 = vadd.f32 %v4108, %v4202
        %v4269 = vadd.f32 %v4109, %v4204
        %v4270 = vadd.f32 %v4110, %v4206
        %4273 = vrot.lane.b32.xlu0 %v3921, 112
        %v4274 = vpop.permute.xlu0 %4273
        %4275 = vrot.lane.b32.xlu0 %v3926, 112
        %v4276 = vpop.permute.xlu0 %4275
        %4277 = vrot.lane.b32.xlu0 %v3931, 112
        %v4278 = vpop.permute.xlu0 %4277
        %4279 = vrot.lane.b32.xlu0 %v3936, 112
        %v4280 = vpop.permute.xlu0 %4279
        %4281 = vrot.lane.b32.xlu0 %v3941, 112
        %v4282 = vpop.permute.xlu0 %4281
        %4283 = vrot.lane.b32.xlu0 %v3946, 112
        %v4284 = vpop.permute.xlu0 %4283
        %4285 = vrot.lane.b32.xlu0 %v3951, 112
        %v4286 = vpop.permute.xlu0 %4285
        %4287 = vrot.lane.b32.xlu0 %v3956, 112
        %v4288 = vpop.permute.xlu0 %4287
        %4289 = vrot.lane.b32.xlu0 %v3961, 112
        %v4290 = vpop.permute.xlu0 %4289
        %4291 = vrot.lane.b32.xlu0 %v3966, 112
        %v4292 = vpop.permute.xlu0 %4291
        %4293 = vrot.lane.b32.xlu0 %v3971, 112
        %v4294 = vpop.permute.xlu0 %4293
        %4295 = vrot.lane.b32.xlu0 %v3976, 112
        %v4296 = vpop.permute.xlu0 %4295
        %4297 = vrot.lane.b32.xlu0 %v3981, 112
        %v4298 = vpop.permute.xlu0 %4297
        %4299 = vrot.lane.b32.xlu0 %v3986, 112
        %v4300 = vpop.permute.xlu0 %4299
        %4301 = vrot.lane.b32.xlu0 %v3991, 112
        %v4302 = vpop.permute.xlu0 %4301
        %4303 = vrot.lane.b32.xlu0 %v3996, 112
        %v4304 = vpop.permute.xlu0 %4303
        %4305 = vrot.lane.b32.xlu0 %v4001, 112
        %v4306 = vpop.permute.xlu0 %4305
        %4307 = vrot.lane.b32.xlu0 %v4006, 112
        %v4308 = vpop.permute.xlu0 %4307
        %4309 = vrot.lane.b32.xlu0 %v4011, 112
        %v4310 = vpop.permute.xlu0 %4309
        %4311 = vrot.lane.b32.xlu0 %v4016, 112
        %v4312 = vpop.permute.xlu0 %4311
        %4313 = vrot.lane.b32.xlu0 %v4021, 112
        %v4314 = vpop.permute.xlu0 %4313
        %4315 = vrot.lane.b32.xlu0 %v4026, 112
        %v4316 = vpop.permute.xlu0 %4315
        %4317 = vrot.lane.b32.xlu0 %v4031, 112
        %v4318 = vpop.permute.xlu0 %4317
        %4319 = vrot.lane.b32.xlu0 %v4036, 112
        %v4320 = vpop.permute.xlu0 %4319
        %4321 = vrot.lane.b32.xlu0 %v4041, 112
        %v4322 = vpop.permute.xlu0 %4321
        %4323 = vrot.lane.b32.xlu0 %v4046, 112
        %v4324 = vpop.permute.xlu0 %4323
        %4325 = vrot.lane.b32.xlu0 %v4051, 112
        %v4326 = vpop.permute.xlu0 %4325
        %4327 = vrot.lane.b32.xlu0 %v4056, 112
        %v4328 = vpop.permute.xlu0 %4327
        %4329 = vrot.lane.b32.xlu0 %v4061, 112
        %v4330 = vpop.permute.xlu0 %4329
        %4331 = vrot.lane.b32.xlu0 %v4066, 112
        %v4332 = vpop.permute.xlu0 %4331
        %4333 = vrot.lane.b32.xlu0 %v4071, 112
        %v4334 = vpop.permute.xlu0 %4333
        %4335 = vrot.lane.b32.xlu0 %v4076, 112
        %v4336 = vpop.permute.xlu0 %4335
        %v4369 = vadd.f32 %v4239, %v4274
        %v4370 = vadd.f32 %v4240, %v4276
        %v4371 = vadd.f32 %v4241, %v4278
        %v4372 = vadd.f32 %v4242, %v4280
        %v4373 = vadd.f32 %v4243, %v4282
        %v4374 = vadd.f32 %v4244, %v4284
        %v4375 = vadd.f32 %v4245, %v4286
        %v4376 = vadd.f32 %v4246, %v4288
        %v4377 = vadd.f32 %v4247, %v4290
        %v4378 = vadd.f32 %v4248, %v4292
        %v4379 = vadd.f32 %v4249, %v4294
        %v4380 = vadd.f32 %v4250, %v4296
        %v4381 = vadd.f32 %v4251, %v4298
        %v4382 = vadd.f32 %v4252, %v4300
        %v4383 = vadd.f32 %v4253, %v4302
        %v4384 = vadd.f32 %v4254, %v4304
        %v4385 = vadd.f32 %v4255, %v4306
        %v4386 = vadd.f32 %v4256, %v4308
        %v4387 = vadd.f32 %v4257, %v4310
        %v4388 = vadd.f32 %v4258, %v4312
        %v4389 = vadd.f32 %v4259, %v4314
        %v4390 = vadd.f32 %v4260, %v4316
        %v4391 = vadd.f32 %v4261, %v4318
        %v4392 = vadd.f32 %v4262, %v4320
        %v4393 = vadd.f32 %v4263, %v4322
        %v4394 = vadd.f32 %v4264, %v4324
        %v4395 = vadd.f32 %v4265, %v4326
        %v4396 = vadd.f32 %v4266, %v4328
        %v4397 = vadd.f32 %v4267, %v4330
        %v4398 = vadd.f32 %v4268, %v4332
        %v4399 = vadd.f32 %v4269, %v4334
        %v4400 = vadd.f32 %v4270, %v4336
        %v4401 = vld [vmem:[#allocation3 + $0x2] sm:$0xff]
        %v4402 = vld [vmem:[#allocation3 + $0xa] sm:$0xff]
        %v4403 = vld [vmem:[#allocation3 + $0x1a] sm:$0xff]
        %v4404 = vld [vmem:[#allocation3 + $0x22] sm:$0xff]
        %v4405 = vld [vmem:[#allocation3 + $0x32] sm:$0xff]
        %v4406 = vld [vmem:[#allocation3 + $0x3a] sm:$0xff]
        %v4407 = vld [vmem:[#allocation3 + $0x4a] sm:$0xff]
        %v4408 = vld [vmem:[#allocation3 + $0x52] sm:$0xff]
        %v4409 = vld [vmem:[#allocation3 + $0x62] sm:$0xff]
        %v4410 = vld [vmem:[#allocation3 + $0x6a] sm:$0xff]
        %v4411 = vld [vmem:[#allocation3 + $0x7a] sm:$0xff]
        %v4412 = vld [vmem:[#allocation3 + $0x82] sm:$0xff]
        %v4413 = vld [vmem:[#allocation3 + $0x92] sm:$0xff]
        %v4414 = vld [vmem:[#allocation3 + $0x9a] sm:$0xff]
        %v4415 = vld [vmem:[#allocation3 + $0xaa] sm:$0xff]
        %v4416 = vld [vmem:[#allocation3 + $0xb2] sm:$0xff]
        %v4417 = vld [vmem:[#allocation3 + $0xc2] sm:$0xff]
        %v4418 = vld [vmem:[#allocation3 + $0xca] sm:$0xff]
        %v4419 = vld [vmem:[#allocation3 + $0xda] sm:$0xff]
        %v4420 = vld [vmem:[#allocation3 + $0xe2] sm:$0xff]
        %v4421 = vld [vmem:[#allocation3 + $0xf2] sm:$0xff]
        %v4422 = vld [vmem:[#allocation3 + $0xfa] sm:$0xff]
        %v4423 = vld [vmem:[#allocation3 + $0x10a] sm:$0xff]
        %v4424 = vld [vmem:[#allocation3 + $0x112] sm:$0xff]
        %v4425 = vld [vmem:[#allocation3 + $0x122] sm:$0xff]
        %v4426 = vld [vmem:[#allocation3 + $0x12a] sm:$0xff]
        %v4427 = vld [vmem:[#allocation3 + $0x13a] sm:$0xff]
        %v4428 = vld [vmem:[#allocation3 + $0x142] sm:$0xff]
        %v4429 = vld [vmem:[#allocation3 + $0x152] sm:$0xff]
        %v4430 = vld [vmem:[#allocation3 + $0x15a] sm:$0xff]
        %v4431 = vld [vmem:[#allocation3 + $0x16a] sm:$0xff]
        %v4432 = vld [vmem:[#allocation3 + $0x172] sm:$0xff]
        %v4433 = vld [vmem:[#allocation3 + $0x182] sm:$0xff]
        %v4434 = vld [vmem:[#allocation3 + $0x18a] sm:$0xff]
        %v4435 = vld [vmem:[#allocation3 + $0x19a] sm:$0xff]
        %v4436 = vld [vmem:[#allocation3 + $0x1a2] sm:$0xff]
        %s4437 = scalar_lea.vmem %s5, 16
        %v4438 = vld [vmem:[%s4437] sm:$0xff]
        %v4440 = vsel %vm2887, %v4401, 0
        %v4443 = vsel %vm2887, %v4402, 0
        %v4446 = vsel %vm2887, %v4403, 0
        %v4449 = vsel %vm2887, %v4404, 0
        %v4452 = vsel %vm2887, %v4405, 0
        %v4455 = vsel %vm2887, %v4406, 0
        %v4458 = vsel %vm2887, %v4407, 0
        %v4461 = vsel %vm2887, %v4408, 0
        %v4464 = vsel %vm2887, %v4409, 0
        %v4467 = vsel %vm2887, %v4410, 0
        %v4470 = vsel %vm2887, %v4411, 0
        %v4473 = vsel %vm2887, %v4412, 0
        %v4476 = vsel %vm2887, %v4413, 0
        %v4479 = vsel %vm2887, %v4414, 0
        %v4482 = vsel %vm2887, %v4415, 0
        %v4485 = vsel %vm2887, %v4416, 0
        %v4488 = vsel %vm2887, %v4417, 0
        %v4491 = vsel %vm2887, %v4418, 0
        %v4494 = vsel %vm2887, %v4419, 0
        %v4497 = vsel %vm2887, %v4420, 0
        %v4500 = vsel %vm2887, %v4421, 0
        %v4503 = vsel %vm2887, %v4422, 0
        %v4506 = vsel %vm2887, %v4423, 0
        %v4509 = vsel %vm2887, %v4424, 0
        %v4512 = vsel %vm2887, %v4425, 0
        %v4515 = vsel %vm2887, %v4426, 0
        %v4518 = vsel %vm2887, %v4427, 0
        %v4521 = vsel %vm2887, %v4428, 0
        %v4524 = vsel %vm2887, %v4429, 0
        %v4527 = vsel %vm2887, %v4430, 0
        %v4530 = vsel %vm2887, %v4431, 0
        %v4533 = vsel %vm2887, %v4432, 0
        %v4536 = vsel %vm2887, %v4433, 0
        %v4539 = vsel %vm2887, %v4434, 0
        %v4542 = vsel %vm2887, %v4435, 0
        %v4545 = vsel %vm2887, %v4436, 0
        %4547 = vmatprep.subr.mxu0 0.0
        %4548 = vmatpush1.msra.mxu0 %v4438
        %4549 = vmatprep.subr.mxu0 0.0
        %4550 = vmatpush1.msra.mxu0 0.0
        %4551 = vmatprep.subr.mxu0 0.0
        %4552 = vmatpush1.msra.mxu0 0.0
        %4553 = vmatprep.subr.mxu0 0.0
        %4554 = vmatpush1.msra.mxu0 0.0
        %4555 = vmatprep.subr.mxu0 0.0
        %4556 = vmatpush1.msra.mxu0 0.0
        %4557 = vmatprep.subr.mxu0 0.0
        %4558 = vmatpush1.msra.mxu0 0.0
        %4559 = vmatprep.subr.mxu0 0.0
        %4560 = vmatpush1.msra.mxu0 0.0
        %4561 = vmatprep.subr.mxu0 0.0
        %4562 = vmatpush1.msra.mxu0 0.0
        %4563 = vmatprep.subr.mxu0 0.0
        %4564 = vmatpush1.msra.mxu0 0.0
        %4565 = vmatprep.subr.mxu0 0.0
        %4566 = vmatpush1.msra.mxu0 0.0
        %4567 = vmatprep.subr.mxu0 0.0
        %4568 = vmatpush1.msra.mxu0 0.0
        %4569 = vmatprep.subr.mxu0 0.0
        %4570 = vmatpush1.msra.mxu0 0.0
        %4571 = vmatprep.subr.mxu0 0.0
        %4572 = vmatpush1.msra.mxu0 0.0
        %4573 = vmatprep.subr.mxu0 0.0
        %4574 = vmatpush1.msra.mxu0 0.0
        %4575 = vmatprep.subr.mxu0 0.0
        %4576 = vmatpush1.msra.mxu0 0.0
        %4577 = vmatprep.subr.mxu0 0.0
        %4578 = vmatpush1.msra.mxu0 0.0
        %4579 = vmatprep.subr.mxu0 0.0
        %4580 = vmatpush1.msra.mxu0 0.0
        %4581 = vmatprep.subr.mxu0 0.0
        %4582 = vmatpush1.msra.mxu0 0.0
        %4583 = vmatprep.subr.mxu0 0.0
        %4584 = vmatpush1.msra.mxu0 0.0
        %4585 = vmatprep.subr.mxu0 0.0
        %4586 = vmatpush1.msra.mxu0 0.0
        %4587 = vmatprep.subr.mxu0 0.0
        %4588 = vmatpush1.msra.mxu0 0.0
        %4589 = vmatprep.subr.mxu0 0.0
        %4590 = vmatpush1.msra.mxu0 0.0
        %4591 = vmatprep.subr.mxu0 0.0
        %4592 = vmatpush1.msra.mxu0 0.0
        %4593 = vmatprep.subr.mxu0 0.0
        %4594 = vmatpush1.msra.mxu0 0.0
        %4595 = vmatprep.subr.mxu0 0.0
        %4596 = vmatpush1.msra.mxu0 0.0
        %4597 = vmatprep.subr.mxu0 0.0
        %4598 = vmatpush1.msra.mxu0 0.0
        %4599 = vmatprep.subr.mxu0 0.0
        %4600 = vmatpush1.msra.mxu0 0.0
        %4601 = vmatprep.subr.mxu0 0.0
        %4602 = vmatpush1.msra.mxu0 0.0
        %4603 = vmatprep.subr.mxu0 0.0
        %4604 = vmatpush1.msra.mxu0 0.0
        %4605 = vmatprep.subr.mxu0 0.0
        %4606 = vmatpush1.msra.mxu0 0.0
        %4607 = vmatprep.subr.mxu0 0.0
        %4608 = vmatpush1.msra.mxu0 0.0
        %4609 = vmatprep.subr.mxu0 0.0
        %4610 = vmatpush1.msra.mxu0 0.0
        %4611 = vmatprep.mubr.f32.mxu0 0.0
        %4612 = vmatmul.mubr.f32.gmra.mrb[0].mxu0 %v4440
        %v4613 = vpop.f32.mrb[0].mxu0
        %v4614 = vadd.f32 0.0, %v4613
        %v4615 = vpop.f32.mrb[0].mxu0
        %4616 = vmatprep.mubr.f32.mxu0 0.0
        %4617 = vmatmul.mubr.f32.gmra.mrb[0].mxu0 %v4443
        %v4618 = vpop.f32.mrb[0].mxu0
        %v4619 = vadd.f32 0.0, %v4618
        %v4620 = vpop.f32.mrb[0].mxu0
        %4621 = vmatprep.mubr.f32.mxu0 0.0
        %4622 = vmatmul.mubr.f32.gmra.mrb[0].mxu0 %v4446
        %v4623 = vpop.f32.mrb[0].mxu0
        %v4624 = vadd.f32 0.0, %v4623
        %v4625 = vpop.f32.mrb[0].mxu0
        %4626 = vmatprep.mubr.f32.mxu0 0.0
        %4627 = vmatmul.mubr.f32.gmra.mrb[0].mxu0 %v4449
        %v4628 = vpop.f32.mrb[0].mxu0
        %v4629 = vadd.f32 0.0, %v4628
        %v4630 = vpop.f32.mrb[0].mxu0
        %4631 = vmatprep.mubr.f32.mxu0 0.0
        %4632 = vmatmul.mubr.f32.gmra.mrb[0].mxu0 %v4452
        %v4633 = vpop.f32.mrb[0].mxu0
        %v4634 = vadd.f32 0.0, %v4633
        %v4635 = vpop.f32.mrb[0].mxu0
        %4636 = vmatprep.mubr.f32.mxu0 0.0
        %4637 = vmatmul.mubr.f32.gmra.mrb[0].mxu0 %v4455
        %v4638 = vpop.f32.mrb[0].mxu0
        %v4639 = vadd.f32 0.0, %v4638
        %v4640 = vpop.f32.mrb[0].mxu0
        %4641 = vmatprep.mubr.f32.mxu0 0.0
        %4642 = vmatmul.mubr.f32.gmra.mrb[0].mxu0 %v4458
        %v4643 = vpop.f32.mrb[0].mxu0
        %v4644 = vadd.f32 0.0, %v4643
        %v4645 = vpop.f32.mrb[0].mxu0
        %4646 = vmatprep.mubr.f32.mxu0 0.0
        %4647 = vmatmul.mubr.f32.gmra.mrb[0].mxu0 %v4461
        %v4648 = vpop.f32.mrb[0].mxu0
        %v4649 = vadd.f32 0.0, %v4648
        %v4650 = vpop.f32.mrb[0].mxu0
        %4651 = vmatprep.mubr.f32.mxu0 0.0
        %4652 = vmatmul.mubr.f32.gmra.mrb[0].mxu0 %v4464
        %v4653 = vpop.f32.mrb[0].mxu0
        %v4654 = vadd.f32 0.0, %v4653
        %v4655 = vpop.f32.mrb[0].mxu0
        %4656 = vmatprep.mubr.f32.mxu0 0.0
        %4657 = vmatmul.mubr.f32.gmra.mrb[0].mxu0 %v4467
        %v4658 = vpop.f32.mrb[0].mxu0
        %v4659 = vadd.f32 0.0, %v4658
        %v4660 = vpop.f32.mrb[0].mxu0
        %4661 = vmatprep.mubr.f32.mxu0 0.0
        %4662 = vmatmul.mubr.f32.gmra.mrb[0].mxu0 %v4470
        %v4663 = vpop.f32.mrb[0].mxu0
        %v4664 = vadd.f32 0.0, %v4663
        %v4665 = vpop.f32.mrb[0].mxu0
        %4666 = vmatprep.mubr.f32.mxu0 0.0
        %4667 = vmatmul.mubr.f32.gmra.mrb[0].mxu0 %v4473
        %v4668 = vpop.f32.mrb[0].mxu0
        %v4669 = vadd.f32 0.0, %v4668
        %v4670 = vpop.f32.mrb[0].mxu0
        %4671 = vmatprep.mubr.f32.mxu0 0.0
        %4672 = vmatmul.mubr.f32.gmra.mrb[0].mxu0 %v4476
        %v4673 = vpop.f32.mrb[0].mxu0
        %v4674 = vadd.f32 0.0, %v4673
        %v4675 = vpop.f32.mrb[0].mxu0
        %4676 = vmatprep.mubr.f32.mxu0 0.0
        %4677 = vmatmul.mubr.f32.gmra.mrb[0].mxu0 %v4479
        %v4678 = vpop.f32.mrb[0].mxu0
        %v4679 = vadd.f32 0.0, %v4678
        %v4680 = vpop.f32.mrb[0].mxu0
        %4681 = vmatprep.mubr.f32.mxu0 0.0
        %4682 = vmatmul.mubr.f32.gmra.mrb[0].mxu0 %v4482
        %v4683 = vpop.f32.mrb[0].mxu0
        %v4684 = vadd.f32 0.0, %v4683
        %v4685 = vpop.f32.mrb[0].mxu0
        %4686 = vmatprep.mubr.f32.mxu0 0.0
        %4687 = vmatmul.mubr.f32.gmra.mrb[0].mxu0 %v4485
        %v4688 = vpop.f32.mrb[0].mxu0
        %v4689 = vadd.f32 0.0, %v4688
        %v4690 = vpop.f32.mrb[0].mxu0
        %4691 = vmatprep.mubr.f32.mxu0 0.0
        %4692 = vmatmul.mubr.f32.gmra.mrb[0].mxu0 %v4488
        %v4693 = vpop.f32.mrb[0].mxu0
        %v4694 = vadd.f32 0.0, %v4693
        %v4695 = vpop.f32.mrb[0].mxu0
        %4696 = vmatprep.mubr.f32.mxu0 0.0
        %4697 = vmatmul.mubr.f32.gmra.mrb[0].mxu0 %v4491
        %v4698 = vpop.f32.mrb[0].mxu0
        %v4699 = vadd.f32 0.0, %v4698
        %v4700 = vpop.f32.mrb[0].mxu0
        %4701 = vmatprep.mubr.f32.mxu0 0.0
        %4702 = vmatmul.mubr.f32.gmra.mrb[0].mxu0 %v4494
        %v4703 = vpop.f32.mrb[0].mxu0
        %v4704 = vadd.f32 0.0, %v4703
        %v4705 = vpop.f32.mrb[0].mxu0
        %4706 = vmatprep.mubr.f32.mxu0 0.0
        %4707 = vmatmul.mubr.f32.gmra.mrb[0].mxu0 %v4497
        %v4708 = vpop.f32.mrb[0].mxu0
        %v4709 = vadd.f32 0.0, %v4708
        %v4710 = vpop.f32.mrb[0].mxu0
        %4711 = vmatprep.mubr.f32.mxu0 0.0
        %4712 = vmatmul.mubr.f32.gmra.mrb[0].mxu0 %v4500
        %v4713 = vpop.f32.mrb[0].mxu0
        %v4714 = vadd.f32 0.0, %v4713
        %v4715 = vpop.f32.mrb[0].mxu0
        %4716 = vmatprep.mubr.f32.mxu0 0.0
        %4717 = vmatmul.mubr.f32.gmra.mrb[0].mxu0 %v4503
        %v4718 = vpop.f32.mrb[0].mxu0
        %v4719 = vadd.f32 0.0, %v4718
        %v4720 = vpop.f32.mrb[0].mxu0
        %4721 = vmatprep.mubr.f32.mxu0 0.0
        %4722 = vmatmul.mubr.f32.gmra.mrb[0].mxu0 %v4506
        %v4723 = vpop.f32.mrb[0].mxu0
        %v4724 = vadd.f32 0.0, %v4723
        %v4725 = vpop.f32.mrb[0].mxu0
        %4726 = vmatprep.mubr.f32.mxu0 0.0
        %4727 = vmatmul.mubr.f32.gmra.mrb[0].mxu0 %v4509
        %v4728 = vpop.f32.mrb[0].mxu0
        %v4729 = vadd.f32 0.0, %v4728
        %v4730 = vpop.f32.mrb[0].mxu0
        %4731 = vmatprep.mubr.f32.mxu0 0.0
        %4732 = vmatmul.mubr.f32.gmra.mrb[0].mxu0 %v4512
        %v4733 = vpop.f32.mrb[0].mxu0
        %v4734 = vadd.f32 0.0, %v4733
        %v4735 = vpop.f32.mrb[0].mxu0
        %4736 = vmatprep.mubr.f32.mxu0 0.0
        %4737 = vmatmul.mubr.f32.gmra.mrb[0].mxu0 %v4515
        %v4738 = vpop.f32.mrb[0].mxu0
        %v4739 = vadd.f32 0.0, %v4738
        %v4740 = vpop.f32.mrb[0].mxu0
        %4741 = vmatprep.mubr.f32.mxu0 0.0
        %4742 = vmatmul.mubr.f32.gmra.mrb[0].mxu0 %v4518
        %v4743 = vpop.f32.mrb[0].mxu0
        %v4744 = vadd.f32 0.0, %v4743
        %v4745 = vpop.f32.mrb[0].mxu0
        %4746 = vmatprep.mubr.f32.mxu0 0.0
        %4747 = vmatmul.mubr.f32.gmra.mrb[0].mxu0 %v4521
        %v4748 = vpop.f32.mrb[0].mxu0
        %v4749 = vadd.f32 0.0, %v4748
        %v4750 = vpop.f32.mrb[0].mxu0
        %4751 = vmatprep.mubr.f32.mxu0 0.0
        %4752 = vmatmul.mubr.f32.gmra.mrb[0].mxu0 %v4524
        %v4753 = vpop.f32.mrb[0].mxu0
        %v4754 = vadd.f32 0.0, %v4753
        %v4755 = vpop.f32.mrb[0].mxu0
        %4756 = vmatprep.mubr.f32.mxu0 0.0
        %4757 = vmatmul.mubr.f32.gmra.mrb[0].mxu0 %v4527
        %v4758 = vpop.f32.mrb[0].mxu0
        %v4759 = vadd.f32 0.0, %v4758
        %v4760 = vpop.f32.mrb[0].mxu0
        %4761 = vmatprep.mubr.f32.mxu0 0.0
        %4762 = vmatmul.mubr.f32.gmra.mrb[0].mxu0 %v4530
        %v4763 = vpop.f32.mrb[0].mxu0
        %v4764 = vadd.f32 0.0, %v4763
        %v4765 = vpop.f32.mrb[0].mxu0
        %4766 = vmatprep.mubr.f32.mxu0 0.0
        %4767 = vmatmul.mubr.f32.gmra.mrb[0].mxu0 %v4533
        %v4768 = vpop.f32.mrb[0].mxu0
        %v4769 = vadd.f32 0.0, %v4768
        %v4770 = vpop.f32.mrb[0].mxu0
        %4771 = vmatprep.mubr.f32.mxu0 0.0
        %4772 = vmatmul.mubr.f32.gmra.mrb[0].mxu0 %v4536
        %v4773 = vpop.f32.mrb[0].mxu0
        %v4774 = vadd.f32 0.0, %v4773
        %v4775 = vpop.f32.mrb[0].mxu0
        %4776 = vmatprep.mubr.f32.mxu0 0.0
        %4777 = vmatmul.mubr.f32.gmra.mrb[0].mxu0 %v4539
        %v4778 = vpop.f32.mrb[0].mxu0
        %v4779 = vadd.f32 0.0, %v4778
        %v4780 = vpop.f32.mrb[0].mxu0
        %4781 = vmatprep.mubr.f32.mxu0 0.0
        %4782 = vmatmul.mubr.f32.gmra.mrb[0].mxu0 %v4542
        %v4783 = vpop.f32.mrb[0].mxu0
        %v4784 = vadd.f32 0.0, %v4783
        %v4785 = vpop.f32.mrb[0].mxu0
        %4786 = vmatprep.mubr.f32.mxu0 0.0
        %4787 = vmatmul.mubr.f32.gmra.mrb[0].mxu0 %v4545
        %v4788 = vpop.f32.mrb[0].mxu0
        %v4789 = vadd.f32 0.0, %v4788
        %v4790 = vpop.f32.mrb[0].mxu0
        %4791 = vdwg.mxu0
        %v4792 = vadd.f32 %v4369, %v4614
        %v4793 = vadd.f32 %v4370, %v4619
        %v4794 = vadd.f32 %v4371, %v4624
        %v4795 = vadd.f32 %v4372, %v4629
        %v4796 = vadd.f32 %v4373, %v4634
        %v4797 = vadd.f32 %v4374, %v4639
        %v4798 = vadd.f32 %v4375, %v4644
        %v4799 = vadd.f32 %v4376, %v4649
        %v4800 = vadd.f32 %v4377, %v4654
        %v4801 = vadd.f32 %v4378, %v4659
        %v4802 = vadd.f32 %v4379, %v4664
        %v4803 = vadd.f32 %v4380, %v4669
        %v4804 = vadd.f32 %v4381, %v4674
        %v4805 = vadd.f32 %v4382, %v4679
        %v4806 = vadd.f32 %v4383, %v4684
        %v4807 = vadd.f32 %v4384, %v4689
        %v4808 = vadd.f32 %v4385, %v4694
        %v4809 = vadd.f32 %v4386, %v4699
        %v4810 = vadd.f32 %v4387, %v4704
        %v4811 = vadd.f32 %v4388, %v4709
        %v4812 = vadd.f32 %v4389, %v4714
        %v4813 = vadd.f32 %v4390, %v4719
        %v4814 = vadd.f32 %v4391, %v4724
        %v4815 = vadd.f32 %v4392, %v4729
        %v4816 = vadd.f32 %v4393, %v4734
        %v4817 = vadd.f32 %v4394, %v4739
        %v4818 = vadd.f32 %v4395, %v4744
        %v4819 = vadd.f32 %v4396, %v4749
        %v4820 = vadd.f32 %v4397, %v4754
        %v4821 = vadd.f32 %v4398, %v4759
        %v4822 = vadd.f32 %v4399, %v4764
        %v4823 = vadd.f32 %v4400, %v4769
        %4856 = vrot.lane.b32.xlu0 %v4624, 120
        %v4857 = vpop.permute.xlu0 %4856
        %4858 = vrot.lane.b32.xlu0 %v4629, 120
        %v4859 = vpop.permute.xlu0 %4858
        %4860 = vrot.lane.b32.xlu0 %v4634, 120
        %v4861 = vpop.permute.xlu0 %4860
        %4862 = vrot.lane.b32.xlu0 %v4639, 120
        %v4863 = vpop.permute.xlu0 %4862
        %4864 = vrot.lane.b32.xlu0 %v4644, 120
        %v4865 = vpop.permute.xlu0 %4864
        %4866 = vrot.lane.b32.xlu0 %v4649, 120
        %v4867 = vpop.permute.xlu0 %4866
        %4868 = vrot.lane.b32.xlu0 %v4654, 120
        %v4869 = vpop.permute.xlu0 %4868
        %4870 = vrot.lane.b32.xlu0 %v4659, 120
        %v4871 = vpop.permute.xlu0 %4870
        %4872 = vrot.lane.b32.xlu0 %v4664, 120
        %v4873 = vpop.permute.xlu0 %4872
        %4874 = vrot.lane.b32.xlu0 %v4669, 120
        %v4875 = vpop.permute.xlu0 %4874
        %4876 = vrot.lane.b32.xlu0 %v4674, 120
        %v4877 = vpop.permute.xlu0 %4876
        %4878 = vrot.lane.b32.xlu0 %v4679, 120
        %v4879 = vpop.permute.xlu0 %4878
        %4880 = vrot.lane.b32.xlu0 %v4684, 120
        %v4881 = vpop.permute.xlu0 %4880
        %4882 = vrot.lane.b32.xlu0 %v4689, 120
        %v4883 = vpop.permute.xlu0 %4882
        %4884 = vrot.lane.b32.xlu0 %v4694, 120
        %v4885 = vpop.permute.xlu0 %4884
        %4886 = vrot.lane.b32.xlu0 %v4699, 120
        %v4887 = vpop.permute.xlu0 %4886
        %4888 = vrot.lane.b32.xlu0 %v4704, 120
        %v4889 = vpop.permute.xlu0 %4888
        %4890 = vrot.lane.b32.xlu0 %v4709, 120
        %v4891 = vpop.permute.xlu0 %4890
        %4892 = vrot.lane.b32.xlu0 %v4714, 120
        %v4893 = vpop.permute.xlu0 %4892
        %4894 = vrot.lane.b32.xlu0 %v4719, 120
        %v4895 = vpop.permute.xlu0 %4894
        %4896 = vrot.lane.b32.xlu0 %v4724, 120
        %v4897 = vpop.permute.xlu0 %4896
        %4898 = vrot.lane.b32.xlu0 %v4729, 120
        %v4899 = vpop.permute.xlu0 %4898
        %4900 = vrot.lane.b32.xlu0 %v4734, 120
        %v4901 = vpop.permute.xlu0 %4900
        %4902 = vrot.lane.b32.xlu0 %v4739, 120
        %v4903 = vpop.permute.xlu0 %4902
        %4904 = vrot.lane.b32.xlu0 %v4744, 120
        %v4905 = vpop.permute.xlu0 %4904
        %4906 = vrot.lane.b32.xlu0 %v4749, 120
        %v4907 = vpop.permute.xlu0 %4906
        %4908 = vrot.lane.b32.xlu0 %v4754, 120
        %v4909 = vpop.permute.xlu0 %4908
        %4910 = vrot.lane.b32.xlu0 %v4759, 120
        %v4911 = vpop.permute.xlu0 %4910
        %4912 = vrot.lane.b32.xlu0 %v4764, 120
        %v4913 = vpop.permute.xlu0 %4912
        %4914 = vrot.lane.b32.xlu0 %v4769, 120
        %v4915 = vpop.permute.xlu0 %4914
        %4916 = vrot.lane.b32.xlu0 %v4774, 120
        %v4917 = vpop.permute.xlu0 %4916
        %4918 = vrot.lane.b32.xlu0 %v4779, 120
        %v4919 = vpop.permute.xlu0 %4918
        %v4952 = vadd.f32 %v4792, %v4857
        %v4953 = vadd.f32 %v4793, %v4859
        %v4954 = vadd.f32 %v4794, %v4861
        %v4955 = vadd.f32 %v4795, %v4863
        %v4956 = vadd.f32 %v4796, %v4865
        %v4957 = vadd.f32 %v4797, %v4867
        %v4958 = vadd.f32 %v4798, %v4869
        %v4959 = vadd.f32 %v4799, %v4871
        %v4960 = vadd.f32 %v4800, %v4873
        %v4961 = vadd.f32 %v4801, %v4875
        %v4962 = vadd.f32 %v4802, %v4877
        %v4963 = vadd.f32 %v4803, %v4879
        %v4964 = vadd.f32 %v4804, %v4881
        %v4965 = vadd.f32 %v4805, %v4883
        %v4966 = vadd.f32 %v4806, %v4885
        %v4967 = vadd.f32 %v4807, %v4887
        %v4968 = vadd.f32 %v4808, %v4889
        %v4969 = vadd.f32 %v4809, %v4891
        %v4970 = vadd.f32 %v4810, %v4893
        %v4971 = vadd.f32 %v4811, %v4895
        %v4972 = vadd.f32 %v4812, %v4897
        %v4973 = vadd.f32 %v4813, %v4899
        %v4974 = vadd.f32 %v4814, %v4901
        %v4975 = vadd.f32 %v4815, %v4903
        %v4976 = vadd.f32 %v4816, %v4905
        %v4977 = vadd.f32 %v4817, %v4907
        %v4978 = vadd.f32 %v4818, %v4909
        %v4979 = vadd.f32 %v4819, %v4911
        %v4980 = vadd.f32 %v4820, %v4913
        %v4981 = vadd.f32 %v4821, %v4915
        %v4982 = vadd.f32 %v4822, %v4917
        %v4983 = vadd.f32 %v4823, %v4919
        %4986 = vrot.lane.b32.xlu0 %v4634, 112
        %v4987 = vpop.permute.xlu0 %4986
        %4988 = vrot.lane.b32.xlu0 %v4639, 112
        %v4989 = vpop.permute.xlu0 %4988
        %4990 = vrot.lane.b32.xlu0 %v4644, 112
        %v4991 = vpop.permute.xlu0 %4990
        %4992 = vrot.lane.b32.xlu0 %v4649, 112
        %v4993 = vpop.permute.xlu0 %4992
        %4994 = vrot.lane.b32.xlu0 %v4654, 112
        %v4995 = vpop.permute.xlu0 %4994
        %4996 = vrot.lane.b32.xlu0 %v4659, 112
        %v4997 = vpop.permute.xlu0 %4996
        %4998 = vrot.lane.b32.xlu0 %v4664, 112
        %v4999 = vpop.permute.xlu0 %4998
        %5000 = vrot.lane.b32.xlu0 %v4669, 112
        %v5001 = vpop.permute.xlu0 %5000
        %5002 = vrot.lane.b32.xlu0 %v4674, 112
        %v5003 = vpop.permute.xlu0 %5002
        %5004 = vrot.lane.b32.xlu0 %v4679, 112
        %v5005 = vpop.permute.xlu0 %5004
        %5006 = vrot.lane.b32.xlu0 %v4684, 112
        %v5007 = vpop.permute.xlu0 %5006
        %5008 = vrot.lane.b32.xlu0 %v4689, 112
        %v5009 = vpop.permute.xlu0 %5008
        %5010 = vrot.lane.b32.xlu0 %v4694, 112
        %v5011 = vpop.permute.xlu0 %5010
        %5012 = vrot.lane.b32.xlu0 %v4699, 112
        %v5013 = vpop.permute.xlu0 %5012
        %5014 = vrot.lane.b32.xlu0 %v4704, 112
        %v5015 = vpop.permute.xlu0 %5014
        %5016 = vrot.lane.b32.xlu0 %v4709, 112
        %v5017 = vpop.permute.xlu0 %5016
        %5018 = vrot.lane.b32.xlu0 %v4714, 112
        %v5019 = vpop.permute.xlu0 %5018
        %5020 = vrot.lane.b32.xlu0 %v4719, 112
        %v5021 = vpop.permute.xlu0 %5020
        %5022 = vrot.lane.b32.xlu0 %v4724, 112
        %v5023 = vpop.permute.xlu0 %5022
        %5024 = vrot.lane.b32.xlu0 %v4729, 112
        %v5025 = vpop.permute.xlu0 %5024
        %5026 = vrot.lane.b32.xlu0 %v4734, 112
        %v5027 = vpop.permute.xlu0 %5026
        %5028 = vrot.lane.b32.xlu0 %v4739, 112
        %v5029 = vpop.permute.xlu0 %5028
        %5030 = vrot.lane.b32.xlu0 %v4744, 112
        %v5031 = vpop.permute.xlu0 %5030
        %5032 = vrot.lane.b32.xlu0 %v4749, 112
        %v5033 = vpop.permute.xlu0 %5032
        %5034 = vrot.lane.b32.xlu0 %v4754, 112
        %v5035 = vpop.permute.xlu0 %5034
        %5036 = vrot.lane.b32.xlu0 %v4759, 112
        %v5037 = vpop.permute.xlu0 %5036
        %5038 = vrot.lane.b32.xlu0 %v4764, 112
        %v5039 = vpop.permute.xlu0 %5038
        %5040 = vrot.lane.b32.xlu0 %v4769, 112
        %v5041 = vpop.permute.xlu0 %5040
        %5042 = vrot.lane.b32.xlu0 %v4774, 112
        %v5043 = vpop.permute.xlu0 %5042
        %5044 = vrot.lane.b32.xlu0 %v4779, 112
        %v5045 = vpop.permute.xlu0 %5044
        %5046 = vrot.lane.b32.xlu0 %v4784, 112
        %v5047 = vpop.permute.xlu0 %5046
        %5048 = vrot.lane.b32.xlu0 %v4789, 112
        %v5049 = vpop.permute.xlu0 %5048
        %v5082 = vadd.f32 %v4952, %v4987
        %v5083 = vadd.f32 %v4953, %v4989
        %v5084 = vadd.f32 %v4954, %v4991
        %v5085 = vadd.f32 %v4955, %v4993
        %v5086 = vadd.f32 %v4956, %v4995
        %v5087 = vadd.f32 %v4957, %v4997
        %v5088 = vadd.f32 %v4958, %v4999
        %v5089 = vadd.f32 %v4959, %v5001
        %v5090 = vadd.f32 %v4960, %v5003
        %v5091 = vadd.f32 %v4961, %v5005
        %v5092 = vadd.f32 %v4962, %v5007
        %v5093 = vadd.f32 %v4963, %v5009
        %v5094 = vadd.f32 %v4964, %v5011
        %v5095 = vadd.f32 %v4965, %v5013
        %v5096 = vadd.f32 %v4966, %v5015
        %v5097 = vadd.f32 %v4967, %v5017
        %v5098 = vadd.f32 %v4968, %v5019
        %v5099 = vadd.f32 %v4969, %v5021
        %v5100 = vadd.f32 %v4970, %v5023
        %v5101 = vadd.f32 %v4971, %v5025
        %v5102 = vadd.f32 %v4972, %v5027
        %v5103 = vadd.f32 %v4973, %v5029
        %v5104 = vadd.f32 %v4974, %v5031
        %v5105 = vadd.f32 %v4975, %v5033
        %v5106 = vadd.f32 %v4976, %v5035
        %v5107 = vadd.f32 %v4977, %v5037
        %v5108 = vadd.f32 %v4978, %v5039
        %v5109 = vadd.f32 %v4979, %v5041
        %v5110 = vadd.f32 %v4980, %v5043
        %v5111 = vadd.f32 %v4981, %v5045
        %v5112 = vadd.f32 %v4982, %v5047
        %v5113 = vadd.f32 %v4983, %v5049
        %v5114 = vld [vmem:[%s6] sm:$0x1]
        %v5116 = vlaneseq
        %v5117 = vshrl.u32 %v5116, 7
        %v5118 = vsub.s32 0, %v5117
        %v5119 = vrot.slane %v5114, %v5118
        %v5121 = vadd.f32 %v5082, %v5119
        %v5122 = vadd.f32 %v5083, %v5119
        %v5123 = vadd.f32 %v5084, %v5119
        %v5124 = vadd.f32 %v5085, %v5119
        %v5125 = vadd.f32 %v5086, %v5119
        %v5126 = vadd.f32 %v5087, %v5119
        %v5127 = vadd.f32 %v5088, %v5119
        %v5128 = vadd.f32 %v5089, %v5119
        %v5129 = vadd.f32 %v5090, %v5119
        %v5130 = vadd.f32 %v5091, %v5119
        %v5131 = vadd.f32 %v5092, %v5119
        %v5132 = vadd.f32 %v5093, %v5119
        %v5133 = vadd.f32 %v5094, %v5119
        %v5134 = vadd.f32 %v5095, %v5119
        %v5135 = vadd.f32 %v5096, %v5119
        %v5136 = vadd.f32 %v5097, %v5119
        %v5137 = vadd.f32 %v5098, %v5119
        %v5138 = vadd.f32 %v5099, %v5119
        %v5139 = vadd.f32 %v5100, %v5119
        %v5140 = vadd.f32 %v5101, %v5119
        %v5141 = vadd.f32 %v5102, %v5119
        %v5142 = vadd.f32 %v5103, %v5119
        %v5143 = vadd.f32 %v5104, %v5119
        %v5144 = vadd.f32 %v5105, %v5119
        %v5145 = vadd.f32 %v5106, %v5119
        %v5146 = vadd.f32 %v5107, %v5119
        %v5147 = vadd.f32 %v5108, %v5119
        %v5148 = vadd.f32 %v5109, %v5119
        %v5149 = vadd.f32 %v5110, %v5119
        %v5150 = vadd.f32 %v5111, %v5119
        %v5151 = vadd.f32 %v5112, %v5119
        %v5152 = vadd.f32 %v5113, %v5119
        %v5153 = vmax.f32 %v5121, 0.0
        %v5154 = vmax.f32 %v5122, 0.0
        %v5155 = vmax.f32 %v5123, 0.0
        %v5156 = vmax.f32 %v5124, 0.0
        %v5157 = vmax.f32 %v5125, 0.0
        %v5158 = vmax.f32 %v5126, 0.0
        %v5159 = vmax.f32 %v5127, 0.0
        %v5160 = vmax.f32 %v5128, 0.0
        %v5161 = vmax.f32 %v5129, 0.0
        %v5162 = vmax.f32 %v5130, 0.0
        %v5163 = vmax.f32 %v5131, 0.0
        %v5164 = vmax.f32 %v5132, 0.0
        %v5165 = vmax.f32 %v5133, 0.0
        %v5166 = vmax.f32 %v5134, 0.0
        %v5167 = vmax.f32 %v5135, 0.0
        %v5168 = vmax.f32 %v5136, 0.0
        %v5169 = vmax.f32 %v5137, 0.0
        %v5170 = vmax.f32 %v5138, 0.0
        %v5171 = vmax.f32 %v5139, 0.0
        %v5172 = vmax.f32 %v5140, 0.0
        %v5173 = vmax.f32 %v5141, 0.0
        %v5174 = vmax.f32 %v5142, 0.0
        %v5175 = vmax.f32 %v5143, 0.0
        %v5176 = vmax.f32 %v5144, 0.0
        %v5177 = vmax.f32 %v5145, 0.0
        %v5178 = vmax.f32 %v5146, 0.0
        %v5179 = vmax.f32 %v5147, 0.0
        %v5180 = vmax.f32 %v5148, 0.0
        %v5181 = vmax.f32 %v5149, 0.0
        %v5182 = vmax.f32 %v5150, 0.0
        %v5183 = vmax.f32 %v5151, 0.0
        %v5184 = vmax.f32 %v5152, 0.0
        %5185 = vxpose.xlu0.b32.start [1/16] %v5153, 128
        %5186 = vxpose.xlu0.b32.cont [2/16] %v5154, 128
        %5187 = vxpose.xlu0.b32.cont [3/16] %v5155, 128
        %5188 = vxpose.xlu0.b32.cont [4/16] %v5156, 128
        %5189 = vxpose.xlu0.b32.cont [5/16] %v5157, 128
        %5190 = vxpose.xlu0.b32.cont [6/16] %v5158, 128
        %5191 = vxpose.xlu0.b32.cont [7/16] %v5159, 128
        %5192 = vxpose.xlu0.b32.cont [8/16] %v5160, 128
        %5193 = vxpose.xlu0.b32.cont [9/16] %v5161, 128
        %5194 = vxpose.xlu0.b32.cont [10/16] %v5162, 128
        %5195 = vxpose.xlu0.b32.cont [11/16] %v5163, 128
        %5196 = vxpose.xlu0.b32.cont [12/16] %v5164, 128
        %5197 = vxpose.xlu0.b32.cont [13/16] %v5165, 128
        %5198 = vxpose.xlu0.b32.cont [14/16] %v5166, 128
        %5199 = vxpose.xlu0.b32.cont [15/16] %v5167, 128
        %5200 = vxpose.xlu0.b32.end [16/16] %v5168, 128
        %v5201 = vpop.trf.xlu0
        %v5202 = vpop.trf.xlu0
        %v5203 = vpop.trf.xlu0
        %v5204 = vpop.trf.xlu0
        %v5205 = vpop.trf.xlu0
        %v5206 = vpop.trf.xlu0
        %v5207 = vpop.trf.xlu0
        %v5208 = vpop.trf.xlu0
        %v5209 = vpop.trf.xlu0
        %v5210 = vpop.trf.xlu0
        %v5211 = vpop.trf.xlu0
        %v5212 = vpop.trf.xlu0
        %v5213 = vpop.trf.xlu0
        %v5214 = vpop.trf.xlu0
        %v5215 = vpop.trf.xlu0
        %v5216 = vpop.trf.xlu0
        %5217 = vxpose.xlu0.b32.start [1/16] %v5169, 128
        %5218 = vxpose.xlu0.b32.cont [2/16] %v5170, 128
        %5219 = vxpose.xlu0.b32.cont [3/16] %v5171, 128
        %5220 = vxpose.xlu0.b32.cont [4/16] %v5172, 128
        %5221 = vxpose.xlu0.b32.cont [5/16] %v5173, 128
        %5222 = vxpose.xlu0.b32.cont [6/16] %v5174, 128
        %5223 = vxpose.xlu0.b32.cont [7/16] %v5175, 128
        %5224 = vxpose.xlu0.b32.cont [8/16] %v5176, 128
        %5225 = vxpose.xlu0.b32.cont [9/16] %v5177, 128
        %5226 = vxpose.xlu0.b32.cont [10/16] %v5178, 128
        %5227 = vxpose.xlu0.b32.cont [11/16] %v5179, 128
        %5228 = vxpose.xlu0.b32.cont [12/16] %v5180, 128
        %5229 = vxpose.xlu0.b32.cont [13/16] %v5181, 128
        %5230 = vxpose.xlu0.b32.cont [14/16] %v5182, 128
        %5231 = vxpose.xlu0.b32.cont [15/16] %v5183, 128
        %5232 = vxpose.xlu0.b32.end [16/16] %v5184, 128
        %v5233 = vpop.trf.xlu0
        %v5234 = vpop.trf.xlu0
        %v5235 = vpop.trf.xlu0
        %v5236 = vpop.trf.xlu0
        %v5237 = vpop.trf.xlu0
        %v5238 = vpop.trf.xlu0
        %v5239 = vpop.trf.xlu0
        %v5240 = vpop.trf.xlu0
        %v5241 = vpop.trf.xlu0
        %v5242 = vpop.trf.xlu0
        %v5243 = vpop.trf.xlu0
        %v5244 = vpop.trf.xlu0
        %v5245 = vpop.trf.xlu0
        %v5246 = vpop.trf.xlu0
        %v5247 = vpop.trf.xlu0
        %v5248 = vpop.trf.xlu0
        %5249 = vst [vmem:[%s390] sm:$0xff] %v5201
        %5250 = vst [vmem:[%s390 + $0x8] sm:$0xff] %v5233
        %5251 = vst.msk [vmem:[#allocation4] sm:$0xff] %vm2887, %v5153
        %5252 = vst.msk [vmem:[#allocation4 + $0x8] sm:$0xff] %vm2887, %v5154
        %5253 = vst.msk [vmem:[#allocation4 + $0x10] sm:$0xff] %vm2887, %v5155
        %5254 = vst.msk [vmem:[#allocation4 + $0x18] sm:$0xff] %vm2887, %v5156
        %5255 = vst.msk [vmem:[#allocation4 + $0x20] sm:$0xff] %vm2887, %v5157
        %5256 = vst.msk [vmem:[#allocation4 + $0x28] sm:$0xff] %vm2887, %v5158
        %5257 = vst.msk [vmem:[#allocation4 + $0x30] sm:$0xff] %vm2887, %v5159
        %5258 = vst.msk [vmem:[#allocation4 + $0x38] sm:$0xff] %vm2887, %v5160
        %5259 = vst.msk [vmem:[#allocation4 + $0x40] sm:$0xff] %vm2887, %v5161
        %5260 = vst.msk [vmem:[#allocation4 + $0x48] sm:$0xff] %vm2887, %v5162
        %5261 = vst.msk [vmem:[#allocation4 + $0x50] sm:$0xff] %vm2887, %v5163
        %5262 = vst.msk [vmem:[#allocation4 + $0x58] sm:$0xff] %vm2887, %v5164
        %5263 = vst.msk [vmem:[#allocation4 + $0x60] sm:$0xff] %vm2887, %v5165
        %5264 = vst.msk [vmem:[#allocation4 + $0x68] sm:$0xff] %vm2887, %v5166
        %5265 = vst.msk [vmem:[#allocation4 + $0x70] sm:$0xff] %vm2887, %v5167
        %5266 = vst.msk [vmem:[#allocation4 + $0x78] sm:$0xff] %vm2887, %v5168
        %5267 = vst.msk [vmem:[#allocation4 + $0x80] sm:$0xff] %vm2887, %v5169
        %5268 = vst.msk [vmem:[#allocation4 + $0x88] sm:$0xff] %vm2887, %v5170
        %5269 = vst.msk [vmem:[#allocation4 + $0x90] sm:$0xff] %vm2887, %v5171
        %5270 = vst.msk [vmem:[#allocation4 + $0x98] sm:$0xff] %vm2887, %v5172
        %5271 = vst.msk [vmem:[#allocation4 + $0xa0] sm:$0xff] %vm2887, %v5173
        %5272 = vst.msk [vmem:[#allocation4 + $0xa8] sm:$0xff] %vm2887, %v5174
        %5273 = vst.msk [vmem:[#allocation4 + $0xb0] sm:$0xff] %vm2887, %v5175
        %5274 = vst.msk [vmem:[#allocation4 + $0xb8] sm:$0xff] %vm2887, %v5176
        %5275 = vst.msk [vmem:[#allocation4 + $0xc0] sm:$0xff] %vm2887, %v5177
        %5276 = vst.msk [vmem:[#allocation4 + $0xc8] sm:$0xff] %vm2887, %v5178
        %5277 = vst.msk [vmem:[#allocation4 + $0xd0] sm:$0xff] %vm2887, %v5179
        %5278 = vst.msk [vmem:[#allocation4 + $0xd8] sm:$0xff] %vm2887, %v5180
        %5279 = vst.msk [vmem:[#allocation4 + $0xe0] sm:$0xff] %vm2887, %v5181
        %5280 = vst.msk [vmem:[#allocation4 + $0xe8] sm:$0xff] %vm2887, %v5182
        %5281 = vst.msk [vmem:[#allocation4 + $0xf0] sm:$0xff] %vm2887, %v5183
        %5282 = vst.msk [vmem:[#allocation4 + $0xf8] sm:$0xff] %vm2887, %v5184
        %v5283 = vld [vmem:[#allocation4] ss:$2 sm:$0xff]
        %s5284 = scalar_lea.vmem [#allocation4], 32
        %v5285 = vld [vmem:[%s5284] ss:$2 sm:$0xff]
        %s5286 = scalar_lea.vmem [#allocation4], 64
        %v5287 = vld [vmem:[%s5286] ss:$2 sm:$0xff]
        %s5288 = scalar_lea.vmem [#allocation4], 96
        %v5289 = vld [vmem:[%s5288] ss:$2 sm:$0xff]
        %s5290 = scalar_lea.vmem [#allocation4], 128
        %v5291 = vld [vmem:[%s5290] ss:$2 sm:$0xff]
        %s5292 = scalar_lea.vmem [#allocation4], 160
        %v5293 = vld [vmem:[%s5292] ss:$2 sm:$0xff]
        %s5294 = scalar_lea.vmem [#allocation4], 192
        %v5295 = vld [vmem:[%s5294] ss:$2 sm:$0xff]
        %s5296 = scalar_lea.vmem [#allocation4], 224
        %v5297 = vld [vmem:[%s5296] ss:$2 sm:$0xff]
        %s5298 = scalar_lea.vmem [#allocation4], 16
        %v5299 = vld [vmem:[%s5298] ss:$2 sm:$0xff]
        %s5300 = scalar_lea.vmem %s5298, 32 [#allocation4]
        %v5301 = vld [vmem:[%s5300] ss:$2 sm:$0xff]
        %s5302 = scalar_lea.vmem %s5298, 64 [#allocation4]
        %v5303 = vld [vmem:[%s5302] ss:$2 sm:$0xff]
        %s5304 = scalar_lea.vmem %s5298, 96 [#allocation4]
        %v5305 = vld [vmem:[%s5304] ss:$2 sm:$0xff]
        %s5306 = scalar_lea.vmem %s5298, 128 [#allocation4]
        %v5307 = vld [vmem:[%s5306] ss:$2 sm:$0xff]
        %s5308 = scalar_lea.vmem %s5298, 160 [#allocation4]
        %v5309 = vld [vmem:[%s5308] ss:$2 sm:$0xff]
        %s5310 = scalar_lea.vmem %s5298, 192 [#allocation4]
        %v5311 = vld [vmem:[%s5310] ss:$2 sm:$0xff]
        %s5312 = scalar_lea.vmem %s5298, 224 [#allocation4]
        %v5313 = vld [vmem:[%s5312] ss:$2 sm:$0xff]
        %v5314 = vadd.f32 %v5283, %v5299
        %v5315 = vadd.f32 %v5285, %v5301
        %v5316 = vadd.f32 %v5287, %v5303
        %v5317 = vadd.f32 %v5289, %v5305
        %v5318 = vadd.f32 %v5291, %v5307
        %v5319 = vadd.f32 %v5293, %v5309
        %v5320 = vadd.f32 %v5295, %v5311
        %v5321 = vadd.f32 %v5297, %v5313
        %s5322 = scalar_lea.vmem [#allocation4], 1
        %v5323 = vld [vmem:[%s5322] ss:$2 sm:$0xff]
        %s5324 = scalar_lea.vmem [#allocation4], 33
        %v5325 = vld [vmem:[%s5324] ss:$2 sm:$0xff]
        %s5326 = scalar_lea.vmem [#allocation4], 65
        %v5327 = vld [vmem:[%s5326] ss:$2 sm:$0xff]
        %s5328 = scalar_lea.vmem [#allocation4], 97
        %v5329 = vld [vmem:[%s5328] ss:$2 sm:$0xff]
        %s5330 = scalar_lea.vmem [#allocation4], 129
        %v5331 = vld [vmem:[%s5330] ss:$2 sm:$0xff]
        %s5332 = scalar_lea.vmem [#allocation4], 161
        %v5333 = vld [vmem:[%s5332] ss:$2 sm:$0xff]
        %s5334 = scalar_lea.vmem [#allocation4], 193
        %v5335 = vld [vmem:[%s5334] ss:$2 sm:$0xff]
        %s5336 = scalar_lea.vmem [#allocation4], 225
        %v5337 = vld [vmem:[%s5336] ss:$2 sm:$0xff]
        %v5338 = vadd.f32 %v5314, %v5323
        %v5339 = vadd.f32 %v5315, %v5325
        %v5340 = vadd.f32 %v5316, %v5327
        %v5341 = vadd.f32 %v5317, %v5329
        %v5342 = vadd.f32 %v5318, %v5331
        %v5343 = vadd.f32 %v5319, %v5333
        %v5344 = vadd.f32 %v5320, %v5335
        %v5345 = vadd.f32 %v5321, %v5337
        %s5346 = scalar_lea.vmem %s5298, 1 [#allocation4]
        %v5347 = vld [vmem:[%s5346] ss:$2 sm:$0xff]
        %s5348 = scalar_lea.vmem %s5298, 33 [#allocation4]
        %v5349 = vld [vmem:[%s5348] ss:$2 sm:$0xff]
        %s5350 = scalar_lea.vmem %s5298, 65 [#allocation4]
        %v5351 = vld [vmem:[%s5350] ss:$2 sm:$0xff]
        %s5352 = scalar_lea.vmem %s5298, 97 [#allocation4]
        %v5353 = vld [vmem:[%s5352] ss:$2 sm:$0xff]
        %s5354 = scalar_lea.vmem %s5298, 129 [#allocation4]
        %v5355 = vld [vmem:[%s5354] ss:$2 sm:$0xff]
        %s5356 = scalar_lea.vmem %s5298, 161 [#allocation4]
        %v5357 = vld [vmem:[%s5356] ss:$2 sm:$0xff]
        %s5358 = scalar_lea.vmem %s5298, 193 [#allocation4]
        %v5359 = vld [vmem:[%s5358] ss:$2 sm:$0xff]
        %s5360 = scalar_lea.vmem %s5298, 225 [#allocation4]
        %v5361 = vld [vmem:[%s5360] ss:$2 sm:$0xff]
        %v5362 = vadd.f32 %v5338, %v5347
        %v5363 = vadd.f32 %v5339, %v5349
        %v5364 = vadd.f32 %v5340, %v5351
        %v5365 = vadd.f32 %v5341, %v5353
        %v5366 = vadd.f32 %v5342, %v5355
        %v5367 = vadd.f32 %v5343, %v5357
        %v5368 = vadd.f32 %v5344, %v5359
        %v5369 = vadd.f32 %v5345, %v5361
        %v5370 = vmul.f32 %v5362, 0.25
        %v5371 = vmul.f32 %v5363, 0.25
        %v5372 = vmul.f32 %v5364, 0.25
        %v5373 = vmul.f32 %v5365, 0.25
        %v5374 = vmul.f32 %v5366, 0.25
        %v5375 = vmul.f32 %v5367, 0.25
        %v5376 = vmul.f32 %v5368, 0.25
        %v5377 = vmul.f32 %v5369, 0.25
        %5378 = vst.msk [vmem:[#allocation5] sm:$0xff] %vm2887, 0.0
        %5379 = vst.msk [vmem:[#allocation5 + $0x8] sm:$0x3] %vm2890, 0.0
        %5380 = vst.msk [vmem:[#allocation5 + $0x10] sm:$0xff] %vm2887, 0.0
        %5381 = vst.msk [vmem:[#allocation5 + $0x18] sm:$0x3] %vm2890, 0.0
        %5382 = vst.msk [vmem:[#allocation5 + $0x20] sm:$0xff] %vm2887, 0.0
        %5383 = vst.msk [vmem:[#allocation5 + $0x28] sm:$0x3] %vm2890, 0.0
        %5384 = vst.msk [vmem:[#allocation5 + $0x30] sm:$0xff] %vm2887, 0.0
        %5385 = vst.msk [vmem:[#allocation5 + $0x38] sm:$0x3] %vm2890, 0.0
        %5386 = vst.msk [vmem:[#allocation5 + $0x40] sm:$0xff] %vm2887, 0.0
        %5387 = vst.msk [vmem:[#allocation5 + $0x48] sm:$0x3] %vm2890, 0.0
        %5388 = vst.msk [vmem:[#allocation5 + $0x50] sm:$0xff] %vm2887, 0.0
        %5389 = vst.msk [vmem:[#allocation5 + $0x58] sm:$0x3] %vm2890, 0.0
        %5390 = vst.msk [vmem:[#allocation5 + $0x60] sm:$0xff] %vm2887, 0.0
        %5391 = vst.msk [vmem:[#allocation5 + $0x68] sm:$0x3] %vm2890, 0.0
        %5392 = vst.msk [vmem:[#allocation5 + $0x70] sm:$0xff] %vm2887, 0.0
        %5393 = vst.msk [vmem:[#allocation5 + $0x78] sm:$0x3] %vm2890, 0.0
        %5394 = vst.msk [vmem:[#allocation5 + $0x80] sm:$0xff] %vm2887, 0.0
        %5395 = vst.msk [vmem:[#allocation5 + $0x88] sm:$0x3] %vm2890, 0.0
        %5396 = vst.msk [vmem:[#allocation5 + $0x90] sm:$0xff] %vm2887, 0.0
        %5397 = vst.msk [vmem:[#allocation5 + $0x98] sm:$0x3] %vm2890, 0.0
        %s5398 = scalar_lea.vmem [#allocation5], 16
        %5399 = vst.msk [vmem:[%s5398 + $0x1] sm:$0xff] %vm2887, %v5370
        %5400 = vst.msk [vmem:[%s5398 + $0x11] sm:$0xff] %vm2887, %v5371
        %5401 = vst.msk [vmem:[%s5398 + $0x21] sm:$0xff] %vm2887, %v5372
        %5402 = vst.msk [vmem:[%s5398 + $0x31] sm:$0xff] %vm2887, %v5373
        %5403 = vst.msk [vmem:[%s5398 + $0x41] sm:$0xff] %vm2887, %v5374
        %5404 = vst.msk [vmem:[%s5398 + $0x51] sm:$0xff] %vm2887, %v5375
        %5405 = vst.msk [vmem:[%s5398 + $0x61] sm:$0xff] %vm2887, %v5376
        %5406 = vst.msk [vmem:[%s5398 + $0x71] sm:$0xff] %vm2887, %v5377
        %v5407 = vld [vmem:[#allocation5] sm:$0xff]
        %v5408 = vld [vmem:[#allocation5 + $0x10] sm:$0xff]
        %v5409 = vld [vmem:[#allocation5 + $0x20] sm:$0xff]
        %v5410 = vld [vmem:[#allocation5 + $0x30] sm:$0xff]
        %v5411 = vld [vmem:[#allocation5 + $0x40] sm:$0xff]
        %v5412 = vld [vmem:[#allocation5 + $0x50] sm:$0xff]
        %v5413 = vld [vmem:[#allocation5 + $0x60] sm:$0xff]
        %v5414 = vld [vmem:[#allocation5 + $0x70] sm:$0xff]
        %v5415 = vld [vmem:[#allocation5 + $0x80] sm:$0xff]
        %v5416 = vld [vmem:[#allocation5 + $0x90] sm:$0xff]
        %v5417 = vld [vmem:[%s7] sm:$0xff]
        %v5419 = vsel %vm2887, %v5407, 0
        %v5422 = vsel %vm2887, %v5408, 0
        %v5425 = vsel %vm2887, %v5409, 0
        %v5428 = vsel %vm2887, %v5410, 0
        %v5431 = vsel %vm2887, %v5411, 0
        %v5434 = vsel %vm2887, %v5412, 0
        %v5437 = vsel %vm2887, %v5413, 0
        %v5440 = vsel %vm2887, %v5414, 0
        %v5443 = vsel %vm2887, %v5415, 0
        %v5446 = vsel %vm2887, %v5416, 0
        %5448 = vmatprep.subr.mxu0 0.0
        %5449 = vmatpush1.msra.mxu0 %v5417
        %5450 = vmatprep.subr.mxu0 0.0
        %5451 = vmatpush1.msra.mxu0 0.0
        %5452 = vmatprep.subr.mxu0 0.0
        %5453 = vmatpush1.msra.mxu0 0.0
        %5454 = vmatprep.subr.mxu0 0.0
        %5455 = vmatpush1.msra.mxu0 0.0
        %5456 = vmatprep.subr.mxu0 0.0
        %5457 = vmatpush1.msra.mxu0 0.0
        %5458 = vmatprep.subr.mxu0 0.0
        %5459 = vmatpush1.msra.mxu0 0.0
        %5460 = vmatprep.subr.mxu0 0.0
        %5461 = vmatpush1.msra.mxu0 0.0
        %5462 = vmatprep.subr.mxu0 0.0
        %5463 = vmatpush1.msra.mxu0 0.0
        %5464 = vmatprep.subr.mxu0 0.0
        %5465 = vmatpush1.msra.mxu0 0.0
        %5466 = vmatprep.subr.mxu0 0.0
        %5467 = vmatpush1.msra.mxu0 0.0
        %5468 = vmatprep.subr.mxu0 0.0
        %5469 = vmatpush1.msra.mxu0 0.0
        %5470 = vmatprep.subr.mxu0 0.0
        %5471 = vmatpush1.msra.mxu0 0.0
        %5472 = vmatprep.subr.mxu0 0.0
        %5473 = vmatpush1.msra.mxu0 0.0
        %5474 = vmatprep.subr.mxu0 0.0
        %5475 = vmatpush1.msra.mxu0 0.0
        %5476 = vmatprep.subr.mxu0 0.0
        %5477 = vmatpush1.msra.mxu0 0.0
        %5478 = vmatprep.subr.mxu0 0.0
        %5479 = vmatpush1.msra.mxu0 0.0
        %5480 = vmatprep.subr.mxu0 0.0
        %5481 = vmatpush1.msra.mxu0 0.0
        %5482 = vmatprep.subr.mxu0 0.0
        %5483 = vmatpush1.msra.mxu0 0.0
        %5484 = vmatprep.subr.mxu0 0.0
        %5485 = vmatpush1.msra.mxu0 0.0
        %5486 = vmatprep.subr.mxu0 0.0
        %5487 = vmatpush1.msra.mxu0 0.0
        %5488 = vmatprep.subr.mxu0 0.0
        %5489 = vmatpush1.msra.mxu0 0.0
        %5490 = vmatprep.subr.mxu0 0.0
        %5491 = vmatpush1.msra.mxu0 0.0
        %5492 = vmatprep.subr.mxu0 0.0
        %5493 = vmatpush1.msra.mxu0 0.0
        %5494 = vmatprep.subr.mxu0 0.0
        %5495 = vmatpush1.msra.mxu0 0.0
        %5496 = vmatprep.subr.mxu0 0.0
        %5497 = vmatpush1.msra.mxu0 0.0
        %5498 = vmatprep.subr.mxu0 0.0
        %5499 = vmatpush1.msra.mxu0 0.0
        %5500 = vmatprep.subr.mxu0 0.0
        %5501 = vmatpush1.msra.mxu0 0.0
        %5502 = vmatprep.subr.mxu0 0.0
        %5503 = vmatpush1.msra.mxu0 0.0
        %5504 = vmatprep.subr.mxu0 0.0
        %5505 = vmatpush1.msra.mxu0 0.0
        %5506 = vmatprep.subr.mxu0 0.0
        %5507 = vmatpush1.msra.mxu0 0.0
        %5508 = vmatprep.subr.mxu0 0.0
        %5509 = vmatpush1.msra.mxu0 0.0
        %5510 = vmatprep.subr.mxu0 0.0
        %5511 = vmatpush1.msra.mxu0 0.0
        %5512 = vmatprep.mubr.f32.mxu0 0.0
        %5513 = vmatmul.mubr.f32.gmra.mrb[0].mxu0 %v5419
        %v5514 = vpop.f32.mrb[0].mxu0
        %v5515 = vadd.f32 0.0, %v5514
        %v5516 = vpop.f32.mrb[0].mxu0
        %5517 = vmatprep.mubr.f32.mxu0 0.0
        %5518 = vmatmul.mubr.f32.gmra.mrb[0].mxu0 %v5422
        %v5519 = vpop.f32.mrb[0].mxu0
        %v5520 = vadd.f32 0.0, %v5519
        %v5521 = vpop.f32.mrb[0].mxu0
        %5522 = vmatprep.mubr.f32.mxu0 0.0
        %5523 = vmatmul.mubr.f32.gmra.mrb[0].mxu0 %v5425
        %v5524 = vpop.f32.mrb[0].mxu0
        %v5525 = vadd.f32 0.0, %v5524
        %v5526 = vpop.f32.mrb[0].mxu0
        %5527 = vmatprep.mubr.f32.mxu0 0.0
        %5528 = vmatmul.mubr.f32.gmra.mrb[0].mxu0 %v5428
        %v5529 = vpop.f32.mrb[0].mxu0
        %v5530 = vadd.f32 0.0, %v5529
        %v5531 = vpop.f32.mrb[0].mxu0
        %5532 = vmatprep.mubr.f32.mxu0 0.0
        %5533 = vmatmul.mubr.f32.gmra.mrb[0].mxu0 %v5431
        %v5534 = vpop.f32.mrb[0].mxu0
        %v5535 = vadd.f32 0.0, %v5534
        %v5536 = vpop.f32.mrb[0].mxu0
        %5537 = vmatprep.mubr.f32.mxu0 0.0
        %5538 = vmatmul.mubr.f32.gmra.mrb[0].mxu0 %v5434
        %v5539 = vpop.f32.mrb[0].mxu0
        %v5540 = vadd.f32 0.0, %v5539
        %v5541 = vpop.f32.mrb[0].mxu0
        %5542 = vmatprep.mubr.f32.mxu0 0.0
        %5543 = vmatmul.mubr.f32.gmra.mrb[0].mxu0 %v5437
        %v5544 = vpop.f32.mrb[0].mxu0
        %v5545 = vadd.f32 0.0, %v5544
        %v5546 = vpop.f32.mrb[0].mxu0
        %5547 = vmatprep.mubr.f32.mxu0 0.0
        %5548 = vmatmul.mubr.f32.gmra.mrb[0].mxu0 %v5440
        %v5549 = vpop.f32.mrb[0].mxu0
        %v5550 = vadd.f32 0.0, %v5549
        %v5551 = vpop.f32.mrb[0].mxu0
        %5552 = vmatprep.mubr.f32.mxu0 0.0
        %5553 = vmatmul.mubr.f32.gmra.mrb[0].mxu0 %v5443
        %v5554 = vpop.f32.mrb[0].mxu0
        %v5555 = vadd.f32 0.0, %v5554
        %v5556 = vpop.f32.mrb[0].mxu0
        %5557 = vmatprep.mubr.f32.mxu0 0.0
        %5558 = vmatmul.mubr.f32.gmra.mrb[0].mxu0 %v5446
        %v5559 = vpop.f32.mrb[0].mxu0
        %v5560 = vadd.f32 0.0, %v5559
        %v5561 = vpop.f32.mrb[0].mxu0
        %5562 = vdwg.mxu0
        %v5563 = vadd.f32 %v5515, 0.0
        %v5564 = vadd.f32 %v5520, 0.0
        %v5565 = vadd.f32 %v5525, 0.0
        %v5566 = vadd.f32 %v5530, 0.0
        %v5567 = vadd.f32 %v5535, 0.0
        %v5568 = vadd.f32 %v5540, 0.0
        %v5569 = vadd.f32 %v5545, 0.0
        %v5570 = vadd.f32 %v5550, 0.0
        %5579 = vrot.lane.b32.xlu0 %v5520, 112
        %v5580 = vpop.permute.xlu0 %5579
        %5581 = vrot.lane.b32.xlu0 %v5525, 112
        %v5582 = vpop.permute.xlu0 %5581
        %5583 = vrot.lane.b32.xlu0 %v5530, 112
        %v5584 = vpop.permute.xlu0 %5583
        %5585 = vrot.lane.b32.xlu0 %v5535, 112
        %v5586 = vpop.permute.xlu0 %5585
        %5587 = vrot.lane.b32.xlu0 %v5540, 112
        %v5588 = vpop.permute.xlu0 %5587
        %5589 = vrot.lane.b32.xlu0 %v5545, 112
        %v5590 = vpop.permute.xlu0 %5589
        %5591 = vrot.lane.b32.xlu0 %v5550, 112
        %v5592 = vpop.permute.xlu0 %5591
        %5593 = vrot.lane.b32.xlu0 %v5555, 112
        %v5594 = vpop.permute.xlu0 %5593
        %v5603 = vadd.f32 %v5563, %v5580
        %v5604 = vadd.f32 %v5564, %v5582
        %v5605 = vadd.f32 %v5565, %v5584
        %v5606 = vadd.f32 %v5566, %v5586
        %v5607 = vadd.f32 %v5567, %v5588
        %v5608 = vadd.f32 %v5568, %v5590
        %v5609 = vadd.f32 %v5569, %v5592
        %v5610 = vadd.f32 %v5570, %v5594
        %5612 = vrot.lane.b32.xlu0 %v5525, 96
        %v5613 = vpop.permute.xlu0 %5612
        %5614 = vrot.lane.b32.xlu0 %v5530, 96
        %v5615 = vpop.permute.xlu0 %5614
        %5616 = vrot.lane.b32.xlu0 %v5535, 96
        %v5617 = vpop.permute.xlu0 %5616
        %5618 = vrot.lane.b32.xlu0 %v5540, 96
        %v5619 = vpop.permute.xlu0 %5618
        %5620 = vrot.lane.b32.xlu0 %v5545, 96
        %v5621 = vpop.permute.xlu0 %5620
        %5622 = vrot.lane.b32.xlu0 %v5550, 96
        %v5623 = vpop.permute.xlu0 %5622
        %5624 = vrot.lane.b32.xlu0 %v5555, 96
        %v5625 = vpop.permute.xlu0 %5624
        %5626 = vrot.lane.b32.xlu0 %v5560, 96
        %v5627 = vpop.permute.xlu0 %5626
        %v5636 = vadd.f32 %v5603, %v5613
        %v5637 = vadd.f32 %v5604, %v5615
        %v5638 = vadd.f32 %v5605, %v5617
        %v5639 = vadd.f32 %v5606, %v5619
        %v5640 = vadd.f32 %v5607, %v5621
        %v5641 = vadd.f32 %v5608, %v5623
        %v5642 = vadd.f32 %v5609, %v5625
        %v5643 = vadd.f32 %v5610, %v5627
        %v5644 = vld [vmem:[#allocation5 + $0x1] sm:$0xff]
        %v5645 = vld [vmem:[#allocation5 + $0x11] sm:$0xff]
        %v5646 = vld [vmem:[#allocation5 + $0x21] sm:$0xff]
        %v5647 = vld [vmem:[#allocation5 + $0x31] sm:$0xff]
        %v5648 = vld [vmem:[#allocation5 + $0x41] sm:$0xff]
        %v5649 = vld [vmem:[#allocation5 + $0x51] sm:$0xff]
        %v5650 = vld [vmem:[#allocation5 + $0x61] sm:$0xff]
        %v5651 = vld [vmem:[#allocation5 + $0x71] sm:$0xff]
        %v5652 = vld [vmem:[#allocation5 + $0x81] sm:$0xff]
        %v5653 = vld [vmem:[#allocation5 + $0x91] sm:$0xff]
        %s5654 = scalar_lea.vmem %s7, 8
        %v5655 = vld [vmem:[%s5654] sm:$0xff]
        %v5657 = vsel %vm2887, %v5644, 0
        %v5660 = vsel %vm2887, %v5645, 0
        %v5663 = vsel %vm2887, %v5646, 0
        %v5666 = vsel %vm2887, %v5647, 0
        %v5669 = vsel %vm2887, %v5648, 0
        %v5672 = vsel %vm2887, %v5649, 0
        %v5675 = vsel %vm2887, %v5650, 0
        %v5678 = vsel %vm2887, %v5651, 0
        %v5681 = vsel %vm2887, %v5652, 0
        %v5684 = vsel %vm2887, %v5653, 0
        %5686 = vmatprep.subr.mxu0 0.0
        %5687 = vmatpush1.msra.mxu0 %v5655
        %5688 = vmatprep.subr.mxu0 0.0
        %5689 = vmatpush1.msra.mxu0 0.0
        %5690 = vmatprep.subr.mxu0 0.0
        %5691 = vmatpush1.msra.mxu0 0.0
        %5692 = vmatprep.subr.mxu0 0.0
        %5693 = vmatpush1.msra.mxu0 0.0
        %5694 = vmatprep.subr.mxu0 0.0
        %5695 = vmatpush1.msra.mxu0 0.0
        %5696 = vmatprep.subr.mxu0 0.0
        %5697 = vmatpush1.msra.mxu0 0.0
        %5698 = vmatprep.subr.mxu0 0.0
        %5699 = vmatpush1.msra.mxu0 0.0
        %5700 = vmatprep.subr.mxu0 0.0
        %5701 = vmatpush1.msra.mxu0 0.0
        %5702 = vmatprep.subr.mxu0 0.0
        %5703 = vmatpush1.msra.mxu0 0.0
        %5704 = vmatprep.subr.mxu0 0.0
        %5705 = vmatpush1.msra.mxu0 0.0
        %5706 = vmatprep.subr.mxu0 0.0
        %5707 = vmatpush1.msra.mxu0 0.0
        %5708 = vmatprep.subr.mxu0 0.0
        %5709 = vmatpush1.msra.mxu0 0.0
        %5710 = vmatprep.subr.mxu0 0.0
        %5711 = vmatpush1.msra.mxu0 0.0
        %5712 = vmatprep.subr.mxu0 0.0
        %5713 = vmatpush1.msra.mxu0 0.0
        %5714 = vmatprep.subr.mxu0 0.0
        %5715 = vmatpush1.msra.mxu0 0.0
        %5716 = vmatprep.subr.mxu0 0.0
        %5717 = vmatpush1.msra.mxu0 0.0
        %5718 = vmatprep.subr.mxu0 0.0
        %5719 = vmatpush1.msra.mxu0 0.0
        %5720 = vmatprep.subr.mxu0 0.0
        %5721 = vmatpush1.msra.mxu0 0.0
        %5722 = vmatprep.subr.mxu0 0.0
        %5723 = vmatpush1.msra.mxu0 0.0
        %5724 = vmatprep.subr.mxu0 0.0
        %5725 = vmatpush1.msra.mxu0 0.0
        %5726 = vmatprep.subr.mxu0 0.0
        %5727 = vmatpush1.msra.mxu0 0.0
        %5728 = vmatprep.subr.mxu0 0.0
        %5729 = vmatpush1.msra.mxu0 0.0
        %5730 = vmatprep.subr.mxu0 0.0
        %5731 = vmatpush1.msra.mxu0 0.0
        %5732 = vmatprep.subr.mxu0 0.0
        %5733 = vmatpush1.msra.mxu0 0.0
        %5734 = vmatprep.subr.mxu0 0.0
        %5735 = vmatpush1.msra.mxu0 0.0
        %5736 = vmatprep.subr.mxu0 0.0
        %5737 = vmatpush1.msra.mxu0 0.0
        %5738 = vmatprep.subr.mxu0 0.0
        %5739 = vmatpush1.msra.mxu0 0.0
        %5740 = vmatprep.subr.mxu0 0.0
        %5741 = vmatpush1.msra.mxu0 0.0
        %5742 = vmatprep.subr.mxu0 0.0
        %5743 = vmatpush1.msra.mxu0 0.0
        %5744 = vmatprep.subr.mxu0 0.0
        %5745 = vmatpush1.msra.mxu0 0.0
        %5746 = vmatprep.subr.mxu0 0.0
        %5747 = vmatpush1.msra.mxu0 0.0
        %5748 = vmatprep.subr.mxu0 0.0
        %5749 = vmatpush1.msra.mxu0 0.0
        %5750 = vmatprep.mubr.f32.mxu0 0.0
        %5751 = vmatmul.mubr.f32.gmra.mrb[0].mxu0 %v5657
        %v5752 = vpop.f32.mrb[0].mxu0
        %v5753 = vadd.f32 0.0, %v5752
        %v5754 = vpop.f32.mrb[0].mxu0
        %5755 = vmatprep.mubr.f32.mxu0 0.0
        %5756 = vmatmul.mubr.f32.gmra.mrb[0].mxu0 %v5660
        %v5757 = vpop.f32.mrb[0].mxu0
        %v5758 = vadd.f32 0.0, %v5757
        %v5759 = vpop.f32.mrb[0].mxu0
        %5760 = vmatprep.mubr.f32.mxu0 0.0
        %5761 = vmatmul.mubr.f32.gmra.mrb[0].mxu0 %v5663
        %v5762 = vpop.f32.mrb[0].mxu0
        %v5763 = vadd.f32 0.0, %v5762
        %v5764 = vpop.f32.mrb[0].mxu0
        %5765 = vmatprep.mubr.f32.mxu0 0.0
        %5766 = vmatmul.mubr.f32.gmra.mrb[0].mxu0 %v5666
        %v5767 = vpop.f32.mrb[0].mxu0
        %v5768 = vadd.f32 0.0, %v5767
        %v5769 = vpop.f32.mrb[0].mxu0
        %5770 = vmatprep.mubr.f32.mxu0 0.0
        %5771 = vmatmul.mubr.f32.gmra.mrb[0].mxu0 %v5669
        %v5772 = vpop.f32.mrb[0].mxu0
        %v5773 = vadd.f32 0.0, %v5772
        %v5774 = vpop.f32.mrb[0].mxu0
        %5775 = vmatprep.mubr.f32.mxu0 0.0
        %5776 = vmatmul.mubr.f32.gmra.mrb[0].mxu0 %v5672
        %v5777 = vpop.f32.mrb[0].mxu0
        %v5778 = vadd.f32 0.0, %v5777
        %v5779 = vpop.f32.mrb[0].mxu0
        %5780 = vmatprep.mubr.f32.mxu0 0.0
        %5781 = vmatmul.mubr.f32.gmra.mrb[0].mxu0 %v5675
        %v5782 = vpop.f32.mrb[0].mxu0
        %v5783 = vadd.f32 0.0, %v5782
        %v5784 = vpop.f32.mrb[0].mxu0
        %5785 = vmatprep.mubr.f32.mxu0 0.0
        %5786 = vmatmul.mubr.f32.gmra.mrb[0].mxu0 %v5678
        %v5787 = vpop.f32.mrb[0].mxu0
        %v5788 = vadd.f32 0.0, %v5787
        %v5789 = vpop.f32.mrb[0].mxu0
        %5790 = vmatprep.mubr.f32.mxu0 0.0
        %5791 = vmatmul.mubr.f32.gmra.mrb[0].mxu0 %v5681
        %v5792 = vpop.f32.mrb[0].mxu0
        %v5793 = vadd.f32 0.0, %v5792
        %v5794 = vpop.f32.mrb[0].mxu0
        %5795 = vmatprep.mubr.f32.mxu0 0.0
        %5796 = vmatmul.mubr.f32.gmra.mrb[0].mxu0 %v5684
        %v5797 = vpop.f32.mrb[0].mxu0
        %v5798 = vadd.f32 0.0, %v5797
        %v5799 = vpop.f32.mrb[0].mxu0
        %5800 = vdwg.mxu0
        %v5801 = vadd.f32 %v5636, %v5753
        %v5802 = vadd.f32 %v5637, %v5758
        %v5803 = vadd.f32 %v5638, %v5763
        %v5804 = vadd.f32 %v5639, %v5768
        %v5805 = vadd.f32 %v5640, %v5773
        %v5806 = vadd.f32 %v5641, %v5778
        %v5807 = vadd.f32 %v5642, %v5783
        %v5808 = vadd.f32 %v5643, %v5788
        %5817 = vrot.lane.b32.xlu0 %v5758, 112
        %v5818 = vpop.permute.xlu0 %5817
        %5819 = vrot.lane.b32.xlu0 %v5763, 112
        %v5820 = vpop.permute.xlu0 %5819
        %5821 = vrot.lane.b32.xlu0 %v5768, 112
        %v5822 = vpop.permute.xlu0 %5821
        %5823 = vrot.lane.b32.xlu0 %v5773, 112
        %v5824 = vpop.permute.xlu0 %5823
        %5825 = vrot.lane.b32.xlu0 %v5778, 112
        %v5826 = vpop.permute.xlu0 %5825
        %5827 = vrot.lane.b32.xlu0 %v5783, 112
        %v5828 = vpop.permute.xlu0 %5827
        %5829 = vrot.lane.b32.xlu0 %v5788, 112
        %v5830 = vpop.permute.xlu0 %5829
        %5831 = vrot.lane.b32.xlu0 %v5793, 112
        %v5832 = vpop.permute.xlu0 %5831
        %v5841 = vadd.f32 %v5801, %v5818
        %v5842 = vadd.f32 %v5802, %v5820
        %v5843 = vadd.f32 %v5803, %v5822
        %v5844 = vadd.f32 %v5804, %v5824
        %v5845 = vadd.f32 %v5805, %v5826
        %v5846 = vadd.f32 %v5806, %v5828
        %v5847 = vadd.f32 %v5807, %v5830
        %v5848 = vadd.f32 %v5808, %v5832
        %5850 = vrot.lane.b32.xlu0 %v5763, 96
        %v5851 = vpop.permute.xlu0 %5850
        %5852 = vrot.lane.b32.xlu0 %v5768, 96
        %v5853 = vpop.permute.xlu0 %5852
        %5854 = vrot.lane.b32.xlu0 %v5773, 96
        %v5855 = vpop.permute.xlu0 %5854
        %5856 = vrot.lane.b32.xlu0 %v5778, 96
        %v5857 = vpop.permute.xlu0 %5856
        %5858 = vrot.lane.b32.xlu0 %v5783, 96
        %v5859 = vpop.permute.xlu0 %5858
        %5860 = vrot.lane.b32.xlu0 %v5788, 96
        %v5861 = vpop.permute.xlu0 %5860
        %5862 = vrot.lane.b32.xlu0 %v5793, 96
        %v5863 = vpop.permute.xlu0 %5862
        %5864 = vrot.lane.b32.xlu0 %v5798, 96
        %v5865 = vpop.permute.xlu0 %5864
        %v5874 = vadd.f32 %v5841, %v5851
        %v5875 = vadd.f32 %v5842, %v5853
        %v5876 = vadd.f32 %v5843, %v5855
        %v5877 = vadd.f32 %v5844, %v5857
        %v5878 = vadd.f32 %v5845, %v5859
        %v5879 = vadd.f32 %v5846, %v5861
        %v5880 = vadd.f32 %v5847, %v5863
        %v5881 = vadd.f32 %v5848, %v5865
        %v5882 = vld [vmem:[#allocation5 + $0x2] sm:$0xff]
        %v5883 = vld [vmem:[#allocation5 + $0x12] sm:$0xff]
        %v5884 = vld [vmem:[#allocation5 + $0x22] sm:$0xff]
        %v5885 = vld [vmem:[#allocation5 + $0x32] sm:$0xff]
        %v5886 = vld [vmem:[#allocation5 + $0x42] sm:$0xff]
        %v5887 = vld [vmem:[#allocation5 + $0x52] sm:$0xff]
        %v5888 = vld [vmem:[#allocation5 + $0x62] sm:$0xff]
        %v5889 = vld [vmem:[#allocation5 + $0x72] sm:$0xff]
        %v5890 = vld [vmem:[#allocation5 + $0x82] sm:$0xff]
        %v5891 = vld [vmem:[#allocation5 + $0x92] sm:$0xff]
        %s5892 = scalar_lea.vmem %s7, 16
        %v5893 = vld [vmem:[%s5892] sm:$0xff]
        %v5895 = vsel %vm2887, %v5882, 0
        %v5898 = vsel %vm2887, %v5883, 0
        %v5901 = vsel %vm2887, %v5884, 0
        %v5904 = vsel %vm2887, %v5885, 0
        %v5907 = vsel %vm2887, %v5886, 0
        %v5910 = vsel %vm2887, %v5887, 0
        %v5913 = vsel %vm2887, %v5888, 0
        %v5916 = vsel %vm2887, %v5889, 0
        %v5919 = vsel %vm2887, %v5890, 0
        %v5922 = vsel %vm2887, %v5891, 0
        %5924 = vmatprep.subr.mxu0 0.0
        %5925 = vmatpush1.msra.mxu0 %v5893
        %5926 = vmatprep.subr.mxu0 0.0
        %5927 = vmatpush1.msra.mxu0 0.0
        %5928 = vmatprep.subr.mxu0 0.0
        %5929 = vmatpush1.msra.mxu0 0.0
        %5930 = vmatprep.subr.mxu0 0.0
        %5931 = vmatpush1.msra.mxu0 0.0
        %5932 = vmatprep.subr.mxu0 0.0
        %5933 = vmatpush1.msra.mxu0 0.0
        %5934 = vmatprep.subr.mxu0 0.0
        %5935 = vmatpush1.msra.mxu0 0.0
        %5936 = vmatprep.subr.mxu0 0.0
        %5937 = vmatpush1.msra.mxu0 0.0
        %5938 = vmatprep.subr.mxu0 0.0
        %5939 = vmatpush1.msra.mxu0 0.0
        %5940 = vmatprep.subr.mxu0 0.0
        %5941 = vmatpush1.msra.mxu0 0.0
        %5942 = vmatprep.subr.mxu0 0.0
        %5943 = vmatpush1.msra.mxu0 0.0
        %5944 = vmatprep.subr.mxu0 0.0
        %5945 = vmatpush1.msra.mxu0 0.0
        %5946 = vmatprep.subr.mxu0 0.0
        %5947 = vmatpush1.msra.mxu0 0.0
        %5948 = vmatprep.subr.mxu0 0.0
        %5949 = vmatpush1.msra.mxu0 0.0
        %5950 = vmatprep.subr.mxu0 0.0
        %5951 = vmatpush1.msra.mxu0 0.0
        %5952 = vmatprep.subr.mxu0 0.0
        %5953 = vmatpush1.msra.mxu0 0.0
        %5954 = vmatprep.subr.mxu0 0.0
        %5955 = vmatpush1.msra.mxu0 0.0
        %5956 = vmatprep.subr.mxu0 0.0
        %5957 = vmatpush1.msra.mxu0 0.0
        %5958 = vmatprep.subr.mxu0 0.0
        %5959 = vmatpush1.msra.mxu0 0.0
        %5960 = vmatprep.subr.mxu0 0.0
        %5961 = vmatpush1.msra.mxu0 0.0
        %5962 = vmatprep.subr.mxu0 0.0
        %5963 = vmatpush1.msra.mxu0 0.0
        %5964 = vmatprep.subr.mxu0 0.0
        %5965 = vmatpush1.msra.mxu0 0.0
        %5966 = vmatprep.subr.mxu0 0.0
        %5967 = vmatpush1.msra.mxu0 0.0
        %5968 = vmatprep.subr.mxu0 0.0
        %5969 = vmatpush1.msra.mxu0 0.0
        %5970 = vmatprep.subr.mxu0 0.0
        %5971 = vmatpush1.msra.mxu0 0.0
        %5972 = vmatprep.subr.mxu0 0.0
        %5973 = vmatpush1.msra.mxu0 0.0
        %5974 = vmatprep.subr.mxu0 0.0
        %5975 = vmatpush1.msra.mxu0 0.0
        %5976 = vmatprep.subr.mxu0 0.0
        %5977 = vmatpush1.msra.mxu0 0.0
        %5978 = vmatprep.subr.mxu0 0.0
        %5979 = vmatpush1.msra.mxu0 0.0
        %5980 = vmatprep.subr.mxu0 0.0
        %5981 = vmatpush1.msra.mxu0 0.0
        %5982 = vmatprep.subr.mxu0 0.0
        %5983 = vmatpush1.msra.mxu0 0.0
        %5984 = vmatprep.subr.mxu0 0.0
        %5985 = vmatpush1.msra.mxu0 0.0
        %5986 = vmatprep.subr.mxu0 0.0
        %5987 = vmatpush1.msra.mxu0 0.0
        %5988 = vmatprep.mubr.f32.mxu0 0.0
        %5989 = vmatmul.mubr.f32.gmra.mrb[0].mxu0 %v5895
        %v5990 = vpop.f32.mrb[0].mxu0
        %v5991 = vadd.f32 0.0, %v5990
        %v5992 = vpop.f32.mrb[0].mxu0
        %5993 = vmatprep.mubr.f32.mxu0 0.0
        %5994 = vmatmul.mubr.f32.gmra.mrb[0].mxu0 %v5898
        %v5995 = vpop.f32.mrb[0].mxu0
        %v5996 = vadd.f32 0.0, %v5995
        %v5997 = vpop.f32.mrb[0].mxu0
        %5998 = vmatprep.mubr.f32.mxu0 0.0
        %5999 = vmatmul.mubr.f32.gmra.mrb[0].mxu0 %v5901
        %v6000 = vpop.f32.mrb[0].mxu0
        %v6001 = vadd.f32 0.0, %v6000
        %v6002 = vpop.f32.mrb[0].mxu0
        %6003 = vmatprep.mubr.f32.mxu0 0.0
        %6004 = vmatmul.mubr.f32.gmra.mrb[0].mxu0 %v5904
        %v6005 = vpop.f32.mrb[0].mxu0
        %v6006 = vadd.f32 0.0, %v6005
        %v6007 = vpop.f32.mrb[0].mxu0
        %6008 = vmatprep.mubr.f32.mxu0 0.0
        %6009 = vmatmul.mubr.f32.gmra.mrb[0].mxu0 %v5907
        %v6010 = vpop.f32.mrb[0].mxu0
        %v6011 = vadd.f32 0.0, %v6010
        %v6012 = vpop.f32.mrb[0].mxu0
        %6013 = vmatprep.mubr.f32.mxu0 0.0
        %6014 = vmatmul.mubr.f32.gmra.mrb[0].mxu0 %v5910
        %v6015 = vpop.f32.mrb[0].mxu0
        %v6016 = vadd.f32 0.0, %v6015
        %v6017 = vpop.f32.mrb[0].mxu0
        %6018 = vmatprep.mubr.f32.mxu0 0.0
        %6019 = vmatmul.mubr.f32.gmra.mrb[0].mxu0 %v5913
        %v6020 = vpop.f32.mrb[0].mxu0
        %v6021 = vadd.f32 0.0, %v6020
        %v6022 = vpop.f32.mrb[0].mxu0
        %6023 = vmatprep.mubr.f32.mxu0 0.0
        %6024 = vmatmul.mubr.f32.gmra.mrb[0].mxu0 %v5916
        %v6025 = vpop.f32.mrb[0].mxu0
        %v6026 = vadd.f32 0.0, %v6025
        %v6027 = vpop.f32.mrb[0].mxu0
        %6028 = vmatprep.mubr.f32.mxu0 0.0
        %6029 = vmatmul.mubr.f32.gmra.mrb[0].mxu0 %v5919
        %v6030 = vpop.f32.mrb[0].mxu0
        %v6031 = vadd.f32 0.0, %v6030
        %v6032 = vpop.f32.mrb[0].mxu0
        %6033 = vmatprep.mubr.f32.mxu0 0.0
        %6034 = vmatmul.mubr.f32.gmra.mrb[0].mxu0 %v5922
        %v6035 = vpop.f32.mrb[0].mxu0
        %v6036 = vadd.f32 0.0, %v6035
        %v6037 = vpop.f32.mrb[0].mxu0
        %6038 = vdwg.mxu0
        %v6039 = vadd.f32 %v5874, %v5991
        %v6040 = vadd.f32 %v5875, %v5996
        %v6041 = vadd.f32 %v5876, %v6001
        %v6042 = vadd.f32 %v5877, %v6006
        %v6043 = vadd.f32 %v5878, %v6011
        %v6044 = vadd.f32 %v5879, %v6016
        %v6045 = vadd.f32 %v5880, %v6021
        %v6046 = vadd.f32 %v5881, %v6026
        %6055 = vrot.lane.b32.xlu0 %v5996, 112
        %v6056 = vpop.permute.xlu0 %6055
        %6057 = vrot.lane.b32.xlu0 %v6001, 112
        %v6058 = vpop.permute.xlu0 %6057
        %6059 = vrot.lane.b32.xlu0 %v6006, 112
        %v6060 = vpop.permute.xlu0 %6059
        %6061 = vrot.lane.b32.xlu0 %v6011, 112
        %v6062 = vpop.permute.xlu0 %6061
        %6063 = vrot.lane.b32.xlu0 %v6016, 112
        %v6064 = vpop.permute.xlu0 %6063
        %6065 = vrot.lane.b32.xlu0 %v6021, 112
        %v6066 = vpop.permute.xlu0 %6065
        %6067 = vrot.lane.b32.xlu0 %v6026, 112
        %v6068 = vpop.permute.xlu0 %6067
        %6069 = vrot.lane.b32.xlu0 %v6031, 112
        %v6070 = vpop.permute.xlu0 %6069
        %v6079 = vadd.f32 %v6039, %v6056
        %v6080 = vadd.f32 %v6040, %v6058
        %v6081 = vadd.f32 %v6041, %v6060
        %v6082 = vadd.f32 %v6042, %v6062
        %v6083 = vadd.f32 %v6043, %v6064
        %v6084 = vadd.f32 %v6044, %v6066
        %v6085 = vadd.f32 %v6045, %v6068
        %v6086 = vadd.f32 %v6046, %v6070
        %6088 = vrot.lane.b32.xlu0 %v6001, 96
        %v6089 = vpop.permute.xlu0 %6088
        %6090 = vrot.lane.b32.xlu0 %v6006, 96
        %v6091 = vpop.permute.xlu0 %6090
        %6092 = vrot.lane.b32.xlu0 %v6011, 96
        %v6093 = vpop.permute.xlu0 %6092
        %6094 = vrot.lane.b32.xlu0 %v6016, 96
        %v6095 = vpop.permute.xlu0 %6094
        %6096 = vrot.lane.b32.xlu0 %v6021, 96
        %v6097 = vpop.permute.xlu0 %6096
        %6098 = vrot.lane.b32.xlu0 %v6026, 96
        %v6099 = vpop.permute.xlu0 %6098
        %6100 = vrot.lane.b32.xlu0 %v6031, 96
        %v6101 = vpop.permute.xlu0 %6100
        %6102 = vrot.lane.b32.xlu0 %v6036, 96
        %v6103 = vpop.permute.xlu0 %6102
        %v6112 = vadd.f32 %v6079, %v6089
        %v6113 = vadd.f32 %v6080, %v6091
        %v6114 = vadd.f32 %v6081, %v6093
        %v6115 = vadd.f32 %v6082, %v6095
        %v6116 = vadd.f32 %v6083, %v6097
        %v6117 = vadd.f32 %v6084, %v6099
        %v6118 = vadd.f32 %v6085, %v6101
        %v6119 = vadd.f32 %v6086, %v6103
        %v6120 = vld [vmem:[%s8] sm:$0x1]
        %v6122 = vlaneseq
        %v6123 = vshrl.u32 %v6122, 7
        %v6124 = vsub.s32 0, %v6123
        %v6125 = vrot.slane %v6120, %v6124
        %v6127 = vadd.f32 %v6112, %v6125
        %v6128 = vadd.f32 %v6113, %v6125
        %v6129 = vadd.f32 %v6114, %v6125
        %v6130 = vadd.f32 %v6115, %v6125
        %v6131 = vadd.f32 %v6116, %v6125
        %v6132 = vadd.f32 %v6117, %v6125
        %v6133 = vadd.f32 %v6118, %v6125
        %v6134 = vadd.f32 %v6119, %v6125
        %v6135 = vmax.f32 %v6127, 0.0
        %v6136 = vmax.f32 %v6128, 0.0
        %v6137 = vmax.f32 %v6129, 0.0
        %v6138 = vmax.f32 %v6130, 0.0
        %v6139 = vmax.f32 %v6131, 0.0
        %v6140 = vmax.f32 %v6132, 0.0
        %v6141 = vmax.f32 %v6133, 0.0
        %v6142 = vmax.f32 %v6134, 0.0
        %6143 = vxpose.xlu0.b32.start [1/16] %v6135, 128
        %6144 = vxpose.xlu0.b32.cont [2/16] %v6136, 128
        %6145 = vxpose.xlu0.b32.cont [3/16] %v6137, 128
        %6146 = vxpose.xlu0.b32.cont [4/16] %v6138, 128
        %6147 = vxpose.xlu0.b32.cont [5/16] %v6139, 128
        %6148 = vxpose.xlu0.b32.cont [6/16] %v6140, 128
        %6149 = vxpose.xlu0.b32.cont [7/16] %v6141, 128
        %6150 = vxpose.xlu0.b32.cont [8/16] %v6142, 128
        %6151 = vxpose.xlu0.b32.cont [9/16] 0.0, 128
        %6152 = vxpose.xlu0.b32.cont [10/16] 0.0, 128
        %6153 = vxpose.xlu0.b32.cont [11/16] 0.0, 128
        %6154 = vxpose.xlu0.b32.cont [12/16] 0.0, 128
        %6155 = vxpose.xlu0.b32.cont [13/16] 0.0, 128
        %6156 = vxpose.xlu0.b32.cont [14/16] 0.0, 128
        %6157 = vxpose.xlu0.b32.cont [15/16] 0.0, 128
        %6158 = vxpose.xlu0.b32.end [16/16] 0.0, 128
        %v6159 = vpop.trf.xlu0
        %v6160 = vpop.trf.xlu0
        %v6161 = vpop.trf.xlu0
        %v6162 = vpop.trf.xlu0
        %v6163 = vpop.trf.xlu0
        %v6164 = vpop.trf.xlu0
        %v6165 = vpop.trf.xlu0
        %v6166 = vpop.trf.xlu0
        %v6167 = vpop.trf.xlu0
        %v6168 = vpop.trf.xlu0
        %v6169 = vpop.trf.xlu0
        %v6170 = vpop.trf.xlu0
        %v6171 = vpop.trf.xlu0
        %v6172 = vpop.trf.xlu0
        %v6173 = vpop.trf.xlu0
        %v6174 = vpop.trf.xlu0
        %vm6175 = vcmask 523264
        %6176 = vst.msk [vmem:[%s397] sm:$0xff] %vm6175, %v6159
        %6177 = vst.msk [vmem:[%s397 + $0x8] sm:$0xff] %vm6175, %v6160
        %s6178 = sand.u32 %s231, 1
        %s6179 = scalar_lea.sflag [#allocation7], %s6178
        %s6180 = sand.u32 %s231, 1
        %s6181 = smul.addr %s6180, 16
        %s6182 = scalar_lea.vmem [#allocation6], %s6181
        %s6183 = sand.u32 %s29, 1
        %s6184 = scalar_lea.sflag [#allocation9], %s6183
        %s6185 = sand.u32 %s257, 1
        %s6186 = smul.addr %s6185, 16
        %s6187 = scalar_lea.vmem [#allocation8], %s6186
        %s6188 = sand.u32 %s29, 1
        %s6189 = scalar_lea.sflag [#allocation9], %s6188
        %s6190 = sand.u32 %s283, 1
        %s6191 = smul.addr %s6190, 16
        %s6192 = scalar_lea.vmem [#allocation10], %s6191
        // Predicated region
        $region57: #{_fused_forward.1} parent=55 // pred_check
          %p6193 = pneg %p241
        $region58: #{_fused_forward.1} parent=55 // pred_check_branch
          %6195 = sbr.rel (%p6193) target = $region60
        $region59: #{_fused_forward.1} parent=55 // pred_region
          %s6197 = ssub.s32 256, 256
          %6198 = vsyncadd %s6179, %s6197
          %s6199 = smul.addr %s29, 2
          %s6200 = smul.addr %s6199, 128
          %s6201 = scalar_lea.hbm %s9, %s6200
          %s6203 = sshll.u32 %s6182, 4
          %s6204 = int_to_ptr.vmem [resolvable:$true] %s6203
          %6206 = dma.vmem_to_hbm [thread:$0]  %s6204, 256, %s6201, %s6179
        $region60: #{_fused_forward.1} parent=55 // pred_fallthru
          _
        // Predicated region
        $region61: #{_fused_forward.1} parent=55 // pred_check
          %p6207 = pneg %p267
        $region62: #{_fused_forward.1} parent=55 // pred_check_branch
          %6209 = sbr.rel (%p6207) target = $region64
        $region63: #{_fused_forward.1} parent=55 // pred_region
          %s6211 = ssub.s32 256, 256
          %6212 = vsyncadd %s6184, %s6211
          %s6213 = smul.addr %s29, 2
          %s6214 = smul.addr %s6213, 128
          %s6215 = scalar_lea.hbm %s10, %s6214
          %s6217 = sshll.u32 %s6187, 4
          %s6218 = int_to_ptr.vmem [resolvable:$true] %s6217
          %6220 = dma.vmem_to_hbm [thread:$0]  %s6218, 256, %s6215, %s6184
        $region64: #{_fused_forward.1} parent=55 // pred_fallthru
          _
        // Predicated region
        $region65: #{_fused_forward.1} parent=55 // pred_check
          %p6221 = pneg %p293
        $region66: #{_fused_forward.1} parent=55 // pred_check_branch
          %6223 = sbr.rel (%p6221) target = $region68
        $region67: #{_fused_forward.1} parent=55 // pred_region
          %s6225 = ssub.s32 256, 256
          %6226 = vsyncadd %s6189, %s6225
          %s6227 = smul.addr %s29, 2
          %s6228 = smul.addr %s6227, 128
          %s6229 = scalar_lea.hbm %s11, %s6228
          %s6230 = sshll.u32 %s6192, 4
          %s6231 = int_to_ptr.vmem [resolvable:$true] %s6230
          %6236 = dma.vmem_to_hbm [thread:$0]  %s6231, 256, %s6229, %s6189, 128, 128, 8
        $region68: #{_fused_forward.1} parent=55 // pred_fallthru
          _
      $region56: #{_fused_forward.1} parent=5 // pred_fallthru
        _
      %p6237 = scmp.le.s32.totalorder 2, %s24
      // Predicated region
      $region69: #{_fused_forward.1} parent=5 // pred_check
        %p6238 = pneg %p6237
      $region70: #{_fused_forward.1} parent=5 // pred_check_branch
        %6240 = sbr.rel (%p6238) target = $region72
      $region71: #{_fused_forward.1} parent=5 // pred_region
        %s6241 = ssub.s32 %s24, 2
        // Predicated region
        $region73: #{_fused_forward.1} parent=71 // pred_check
          %p6242 = pneg %p247
        $region74: #{_fused_forward.1} parent=71 // pred_check_branch
          %6244 = sbr.rel (%p6242) target = $region76
        $region75: #{_fused_forward.1} parent=71 // pred_region
          %s6245 = sand.u32 %s232, 1
          %s6246 = scalar_lea.sflag [#allocation7], %s6245
          %s6247 = sand.u32 %s232, 1
          %s6248 = smul.addr %s6247, 16
          %s6249 = scalar_lea.vmem [#allocation6], %s6248
          %6250 = dma.done %s6246, 256
        $region76: #{_fused_forward.1} parent=71 // pred_fallthru
          _
        // Predicated region
        $region77: #{_fused_forward.1} parent=71 // pred_check
          %p6251 = pneg %p273
        $region78: #{_fused_forward.1} parent=71 // pred_check_branch
          %6253 = sbr.rel (%p6251) target = $region80
        $region79: #{_fused_forward.1} parent=71 // pred_region
          %s6254 = sand.u32 %s30, 1
          %s6255 = scalar_lea.sflag [#allocation9], %s6254
          %s6256 = sand.u32 %s258, 1
          %s6257 = smul.addr %s6256, 16
          %s6258 = scalar_lea.vmem [#allocation8], %s6257
          %6259 = dma.done %s6255, 256
        $region80: #{_fused_forward.1} parent=71 // pred_fallthru
          _
        // Predicated region
        $region81: #{_fused_forward.1} parent=71 // pred_check
          %p6260 = pneg %p299
        $region82: #{_fused_forward.1} parent=71 // pred_check_branch
          %6262 = sbr.rel (%p6260) target = $region84
        $region83: #{_fused_forward.1} parent=71 // pred_region
          %s6263 = sand.u32 %s30, 1
          %s6264 = scalar_lea.sflag [#allocation9], %s6263
          %s6265 = sand.u32 %s284, 1
          %s6266 = smul.addr %s6265, 16
          %s6267 = scalar_lea.vmem [#allocation10], %s6266
          %6268 = dma.done %s6264, 256
        $region84: #{_fused_forward.1} parent=71 // pred_fallthru
          _
      $region72: #{_fused_forward.1} parent=5 // pred_fallthru
        _
    $region6: #{_fused_forward.1} parent=1 // loop_footer
      %s28 = sadd.s32 1, %s24
    $region7: #{_fused_forward.1} parent=1 // loop_footer_branch
      %23 = sbr.rel target = $region3
    $region8: #{_fused_forward.1} parent=1 // loop_exit
      _
    %6269 = vsyncpa [#allocation7], 1
    %s6270 = scalar_lea.sflag [#allocation7], 1
    %6271 = vsyncpa %s6270, 1
    %6272 = vsyncpa [#allocation9], 1
    %s6273 = scalar_lea.sflag [#allocation9], 1
    %6274 = vsyncpa %s6273, 1

</llo_original>
